<compile_context>
chip_gen: v5e
topology: v5e:2x2
jax: 0.10.0
libtpu: 0.0.40
codegen_flags: <defaults>
</compile_context>

<pallas_src>
import jax
import jax.numpy as jnp
from jax.experimental import pallas as pl
from jax.experimental.pallas import tpu as pltpu

NUM_FEATURES = 32      # encoder.num_features
KSIZE = 3              # temporal conv width ('same' padding)
LANE = 128             # TPU lane width; both outputs padded to this for lane-dense stores


def contrastive_kernel(x_ref, wconv_ref, bconv_ref, wfc_ref, bfc_ref,
                       feat_ref, logit_ref, xpad_ref):
    TB, C, W = x_ref.shape            # TB = samples (= 2 * pairs) in this grid step
    F, KC = wconv_ref.shape           # wconv laid out (F, K*C), column kc = k*C + c
    K = KC // C
    Fpad = feat_ref.shape[1]          # 128 (lane-padded feature slab)

    # ---- 'same' temporal padding in a VMEM scratch (no HBM pad pass) ----------------
    xpad_ref[:, :, 1:W + 1] = x_ref[...]
    zcol = jnp.zeros((TB, C, 1), jnp.float32)
    xpad_ref[:, :, 0:1] = zcol
    xpad_ref[:, :, W + 1:W + 2] = zcol

    # ---- encoder conv: K*C=12-term VPU multiply-accumulate, f32 throughout ----------
    # acc[n, f, t] = sum_{k,c} xpad[n, c, t+k] * w[k, c, f]
    # x slice broadcasts across the F sublanes, the (F,1) weight column broadcasts
    # across the W lanes -- both are cheap standard broadcasts; no MXU, no casts.
    w_all = wconv_ref[...]                                   # (F, K*C)
    acc = None
    for k in range(K):                                       # static unroll, 12 terms
        xk = xpad_ref[:, :, k:k + W]                         # (TB, C, W)
        for c in range(C):
            kc = k * C + c
            term = xk[:, c:c + 1, :] * w_all[:, kc:kc + 1][None]   # (TB, F, W)
            acc = term if acc is None else acc + term

    y = jnp.maximum(acc + bconv_ref[...], 0.0)               # bias + ReLU, (TB, F, W)

    # ---- global average pool over time: XLU lane reduce (pool matrix removed) -------
    feat = jnp.sum(y, axis=2) * (1.0 / W)                    # (TB, F)

    # lane-dense (TB, 128) feature slab; wrapper slices [:, :F]
    feat_ref[:, 0:F] = feat
    feat_ref[:, F:] = jnp.zeros((TB, Fpad - F), jnp.float32)

    # ---- contrastive head: |f_view0 - f_view1| -> fc (lane-padded to 128) -----------
    fp = feat.reshape(TB // 2, 2, F)
    d = jnp.abs(fp[:, 0, :] - fp[:, 1, :])                   # (pairs, F)
    logit_ref[...] = jnp.dot(d, wfc_ref[...],
                             preferred_element_type=jnp.float32) + bfc_ref[...]


def init_params(key, nb_channels):
    ks = jax.random.split(key, 4)
    fan_conv = nb_channels * KSIZE

    def u(k, shape, fan_in):
        bound = 1.0 / jnp.sqrt(jnp.float32(fan_in))
        return jax.random.uniform(k, shape, jnp.float32, -bound, bound)

    return dict(
        wconv=u(ks[0], (KSIZE, nb_channels, NUM_FEATURES), fan_conv),   # (K, C, F)
        bconv=u(ks[1], (NUM_FEATURES,), fan_conv),
        wfc=u(ks[2], (NUM_FEATURES, 2), NUM_FEATURES),                  # (in, out)
        bfc=u(ks[3], (2,), NUM_FEATURES),
    )


def _auto_pairs_per_tile(B, cap=32):
    """Largest divisor of B <= cap, preferring G = B // TBP >= 2 (v7x has 2 TCs)."""
    divs = [t for t in range(1, min(B, cap) + 1) if B % t == 0]
    pref = [t for t in divs if B // t >= 2]
    return max(pref) if pref else max(divs)


def contrastive_forward(x, params, *, pairs_per_tile=None):
    """x: (B, 2, nb_channels, window) f32 -> (logits (B, 2), features (2B, F))."""
    B, two, C, W = x.shape
    assert two == 2
    F = NUM_FEATURES
    TBP = _auto_pairs_per_tile(B) if pairs_per_tile is None else pairs_per_tile
    assert B % TBP == 0
    G = B // TBP
    TB = 2 * TBP                   # encoder samples per grid step
    N = 2 * B
    Wp = W + (KSIZE - 1)

    # Native layout: (B,2,C,W) -> (2B,C,W) is a free reshape; no transpose, no pad,
    # no dtype-cast pass over HBM.  Time (W) sits in lanes -> lane-dense loads.
    xr = x.reshape(N, C, W).astype(jnp.float32)

    wconv_t = params['wconv'].reshape(KSIZE * C, F).T        # (F, K*C), col kc = k*C+c
    bconv = params['bconv'].reshape(F, 1)                    # (F, 1): broadcasts over lanes
    wfc_pad = jnp.zeros((F, LANE), jnp.float32).at[:, :2].set(params['wfc'])
    bfc_pad = jnp.zeros((1, LANE), jnp.float32).at[0, :2].set(params['bfc'])

    feat3, logit3 = pl.pallas_call(
        contrastive_kernel,
        grid=(G,),                 # tile over pairs -> pipelined DMA, megacore-parallel
        in_specs=[
            pl.BlockSpec((TB, C, W), lambda i: (i, 0, 0)),       # per-tile input block
            pl.BlockSpec((F, KSIZE * C), lambda i: (0, 0)),      # weights pinned
            pl.BlockSpec((F, 1), lambda i: (0, 0)),
            pl.BlockSpec((F, LANE), lambda i: (0, 0)),
            pl.BlockSpec((1, LANE), lambda i: (0, 0)),
        ],
        out_specs=(
            pl.BlockSpec((None, TB, LANE), lambda i: (i, 0, 0)),     # padded features
            pl.BlockSpec((None, TBP, LANE), lambda i: (i, 0, 0)),    # padded logits
        ),
        out_shape=(
            jax.ShapeDtypeStruct((G, TB, LANE), jnp.float32),
            jax.ShapeDtypeStruct((G, TBP, LANE), jnp.float32),
        ),
        scratch_shapes=[pltpu.VMEM((TB, C, Wp), jnp.float32)],       # 'same'-pad scratch
        compiler_params=pltpu.CompilerParams(
            dimension_semantics=("parallel",)),
    )(xr, wconv_t, bconv, wfc_pad, bfc_pad)

    features = feat3.reshape(N, LANE)[:, :F]
    logits = logit3.reshape(B, LANE)[:, :2]
    return logits, features


def reference_forward(x, params):
    """Pure-JAX f32 reference."""
    B, two, C, W = x.shape
    F = NUM_FEATURES
    xr = x.astype(jnp.float32).reshape(2 * B, C, W)
    xp = jnp.pad(xr, ((0, 0), (0, 0), (1, 1)))
    y = jnp.zeros((2 * B, W, F), jnp.float32)
    for k in range(KSIZE):
        y = y + jnp.einsum('ncw,cf->nwf', xp[:, :, k:k + W], params['wconv'][k],
                           precision=jax.lax.Precision.HIGHEST)
    y = jnp.maximum(y + params['bconv'][None, None, :], 0.0)
    feat = jnp.mean(y, axis=1)                              # (2B, F)
    fp = feat.reshape(B, 2, F)
    d = jnp.abs(fp[:, 0] - fp[:, 1])
    logits = jnp.dot(d, params['wfc'],
                     precision=jax.lax.Precision.HIGHEST) + params['bfc']
    return logits, feat


if __name__ == "__main__":
    key = jax.random.PRNGKey(0)
    kx, kp = jax.random.split(key)

    B, C, W = 8, 4, 256      # (batch pairs, nb_channels, window) -- small stand-in shapes
    x = jax.random.normal(kx, (B, 2, C, W), dtype=jnp.float32)
    params = init_params(kp, C)

    logits, features = contrastive_forward(x, params)       # auto TBP=4 -> G=2 grid steps
    (logits, features) = jax.block_until_ready((logits, features))

    ref_logits, ref_features = reference_forward(x, params)

    assert logits.shape == (B, 2)
    assert features.shape == (2 * B, NUM_FEATURES)
    assert bool(jnp.allclose(logits, ref_logits, atol=2e-3, rtol=2e-3))
    assert bool(jnp.allclose(features, ref_features, atol=2e-3, rtol=2e-3))

    print("KERNEL_OK")
</pallas_src>

<mosaic_0001>
module attributes {stable_mosaic.version = 11 : i64} {
  func.func @contrastive_kernel(%arg0: i32, %arg1: memref<8x4x256xf32, #tpu.memory_space<vmem>>, %arg2: memref<32x12xf32, #tpu.memory_space<vmem>>, %arg3: memref<32x1xf32, #tpu.memory_space<vmem>>, %arg4: memref<32x128xf32, #tpu.memory_space<vmem>>, %arg5: memref<1x128xf32, #tpu.memory_space<vmem>>, %arg6: memref<1x8x128xf32, #tpu.memory_space<vmem>>, %arg7: memref<1x4x128xf32, #tpu.memory_space<vmem>>, %arg8: memref<8x4x258xf32, #tpu.memory_space<vmem>>) attributes {dimension_semantics = [#tpu.dimension_semantics<parallel>], iteration_bounds = array<i64: 2>, scalar_prefetch = 0 : i64, scratch_operands = 1 : i64, tpu.core_type = #tpu.core_type<tc>, window_params = [{transform_indices = @transform_0, window_bounds = array<i64: 8, 4, 256>}, {pipeline_mode = #tpu.pipeline_mode<synchronous>, transform_indices = @transform_1, window_bounds = array<i64: 32, 12>}, {pipeline_mode = #tpu.pipeline_mode<synchronous>, transform_indices = @transform_2, window_bounds = array<i64: 32, 1>}, {pipeline_mode = #tpu.pipeline_mode<synchronous>, transform_indices = @transform_3, window_bounds = array<i64: 32, 128>}, {pipeline_mode = #tpu.pipeline_mode<synchronous>, transform_indices = @transform_4, window_bounds = array<i64: 1, 128>}, {transform_indices = @transform_5, window_bounds = array<i64: 1, 8, 128>}, {transform_indices = @transform_6, window_bounds = array<i64: 1, 4, 128>}]} {
    %c0 = arith.constant 0 : index
    %c0_0 = arith.constant 0 : index
    %c0_1 = arith.constant 0 : index
    %0 = vector.load %arg1[%c0, %c0_0, %c0_1] : memref<8x4x256xf32, #tpu.memory_space<vmem>>, vector<8x4x256xf32>
    %c0_2 = arith.constant 0 : index
    %c0_3 = arith.constant 0 : index
    %c1 = arith.constant 1 : index
    %1 = vector.load %arg8[%c0_2, %c0_3, %c1] : memref<8x4x258xf32, #tpu.memory_space<vmem>>, vector<8x4x256xf32>
    tpu.vector_store %arg8[%c0_2, %c0_3, %c1], %0 {strides = array<i32>} : memref<8x4x258xf32, #tpu.memory_space<vmem>>, vector<8x4x256xf32>,
    %cst = arith.constant 0.000000e+00 : f32
    %2 = vector.broadcast %cst : f32 to vector<8x4x1xf32>
    %c0_4 = arith.constant 0 : index
    %c0_5 = arith.constant 0 : index
    %c0_6 = arith.constant 0 : index
    %3 = vector.load %arg8[%c0_4, %c0_5, %c0_6] : memref<8x4x258xf32, #tpu.memory_space<vmem>>, vector<8x4x1xf32>
    tpu.vector_store %arg8[%c0_4, %c0_5, %c0_6], %2 {strides = array<i32>} : memref<8x4x258xf32, #tpu.memory_space<vmem>>, vector<8x4x1xf32>,
    %c0_7 = arith.constant 0 : index
    %c0_8 = arith.constant 0 : index
    %c257 = arith.constant 257 : index
    %4 = vector.load %arg8[%c0_7, %c0_8, %c257] : memref<8x4x258xf32, #tpu.memory_space<vmem>>, vector<8x4x1xf32>
    tpu.vector_store %arg8[%c0_7, %c0_8, %c257], %2 {strides = array<i32>} : memref<8x4x258xf32, #tpu.memory_space<vmem>>, vector<8x4x1xf32>,
    %c0_9 = arith.constant 0 : index
    %c0_10 = arith.constant 0 : index
    %5 = vector.load %arg2[%c0_9, %c0_10] : memref<32x12xf32, #tpu.memory_space<vmem>>, vector<32x12xf32>
    %c0_11 = arith.constant 0 : index
    %c0_12 = arith.constant 0 : index
    %c0_13 = arith.constant 0 : index
    %6 = vector.load %arg8[%c0_11, %c0_12, %c0_13] : memref<8x4x258xf32, #tpu.memory_space<vmem>>, vector<8x4x256xf32>
    %7 = vector.extract_strided_slice %6 {offsets = [0, 0, 0], sizes = [8, 1, 256], strides = [1, 1, 1]} : vector<8x4x256xf32> to vector<8x1x256xf32>
    %8 = vector.extract_strided_slice %5 {offsets = [0, 0], sizes = [32, 1], strides = [1, 1]} : vector<32x12xf32> to vector<32x1xf32>
    %9 = vector.shape_cast %8 : vector<32x1xf32> to vector<1x32x1xf32>
    %10 = vector.broadcast %7 : vector<8x1x256xf32> to vector<8x32x256xf32>
    %11 = vector.broadcast %9 : vector<1x32x1xf32> to vector<8x32x256xf32>
    %12 = arith.mulf %10, %11 : vector<8x32x256xf32>
    %13 = vector.extract_strided_slice %6 {offsets = [0, 1, 0], sizes = [8, 1, 256], strides = [1, 1, 1]} : vector<8x4x256xf32> to vector<8x1x256xf32>
    %14 = vector.extract_strided_slice %5 {offsets = [0, 1], sizes = [32, 1], strides = [1, 1]} : vector<32x12xf32> to vector<32x1xf32>
    %15 = vector.shape_cast %14 : vector<32x1xf32> to vector<1x32x1xf32>
    %16 = vector.broadcast %13 : vector<8x1x256xf32> to vector<8x32x256xf32>
    %17 = vector.broadcast %15 : vector<1x32x1xf32> to vector<8x32x256xf32>
    %18 = arith.mulf %16, %17 : vector<8x32x256xf32>
    %19 = arith.addf %12, %18 : vector<8x32x256xf32>
    %20 = vector.extract_strided_slice %6 {offsets = [0, 2, 0], sizes = [8, 1, 256], strides = [1, 1, 1]} : vector<8x4x256xf32> to vector<8x1x256xf32>
    %21 = vector.extract_strided_slice %5 {offsets = [0, 2], sizes = [32, 1], strides = [1, 1]} : vector<32x12xf32> to vector<32x1xf32>
    %22 = vector.shape_cast %21 : vector<32x1xf32> to vector<1x32x1xf32>
    %23 = vector.broadcast %20 : vector<8x1x256xf32> to vector<8x32x256xf32>
    %24 = vector.broadcast %22 : vector<1x32x1xf32> to vector<8x32x256xf32>
    %25 = arith.mulf %23, %24 : vector<8x32x256xf32>
    %26 = arith.addf %19, %25 : vector<8x32x256xf32>
    %27 = vector.extract_strided_slice %6 {offsets = [0, 3, 0], sizes = [8, 1, 256], strides = [1, 1, 1]} : vector<8x4x256xf32> to vector<8x1x256xf32>
    %28 = vector.extract_strided_slice %5 {offsets = [0, 3], sizes = [32, 1], strides = [1, 1]} : vector<32x12xf32> to vector<32x1xf32>
    %29 = vector.shape_cast %28 : vector<32x1xf32> to vector<1x32x1xf32>
    %30 = vector.broadcast %27 : vector<8x1x256xf32> to vector<8x32x256xf32>
    %31 = vector.broadcast %29 : vector<1x32x1xf32> to vector<8x32x256xf32>
    %32 = arith.mulf %30, %31 : vector<8x32x256xf32>
    %33 = arith.addf %26, %32 : vector<8x32x256xf32>
    %c0_14 = arith.constant 0 : index
    %c0_15 = arith.constant 0 : index
    %c1_16 = arith.constant 1 : index
    %34 = vector.load %arg8[%c0_14, %c0_15, %c1_16] : memref<8x4x258xf32, #tpu.memory_space<vmem>>, vector<8x4x256xf32>
    %35 = vector.extract_strided_slice %34 {offsets = [0, 0, 0], sizes = [8, 1, 256], strides = [1, 1, 1]} : vector<8x4x256xf32> to vector<8x1x256xf32>
    %36 = vector.extract_strided_slice %5 {offsets = [0, 4], sizes = [32, 1], strides = [1, 1]} : vector<32x12xf32> to vector<32x1xf32>
    %37 = vector.shape_cast %36 : vector<32x1xf32> to vector<1x32x1xf32>
    %38 = vector.broadcast %35 : vector<8x1x256xf32> to vector<8x32x256xf32>
    %39 = vector.broadcast %37 : vector<1x32x1xf32> to vector<8x32x256xf32>
    %40 = arith.mulf %38, %39 : vector<8x32x256xf32>
    %41 = arith.addf %33, %40 : vector<8x32x256xf32>
    %42 = vector.extract_strided_slice %34 {offsets = [0, 1, 0], sizes = [8, 1, 256], strides = [1, 1, 1]} : vector<8x4x256xf32> to vector<8x1x256xf32>
    %43 = vector.extract_strided_slice %5 {offsets = [0, 5], sizes = [32, 1], strides = [1, 1]} : vector<32x12xf32> to vector<32x1xf32>
    %44 = vector.shape_cast %43 : vector<32x1xf32> to vector<1x32x1xf32>
    %45 = vector.broadcast %42 : vector<8x1x256xf32> to vector<8x32x256xf32>
    %46 = vector.broadcast %44 : vector<1x32x1xf32> to vector<8x32x256xf32>
    %47 = arith.mulf %45, %46 : vector<8x32x256xf32>
    %48 = arith.addf %41, %47 : vector<8x32x256xf32>
    %49 = vector.extract_strided_slice %34 {offsets = [0, 2, 0], sizes = [8, 1, 256], strides = [1, 1, 1]} : vector<8x4x256xf32> to vector<8x1x256xf32>
    %50 = vector.extract_strided_slice %5 {offsets = [0, 6], sizes = [32, 1], strides = [1, 1]} : vector<32x12xf32> to vector<32x1xf32>
    %51 = vector.shape_cast %50 : vector<32x1xf32> to vector<1x32x1xf32>
    %52 = vector.broadcast %49 : vector<8x1x256xf32> to vector<8x32x256xf32>
    %53 = vector.broadcast %51 : vector<1x32x1xf32> to vector<8x32x256xf32>
    %54 = arith.mulf %52, %53 : vector<8x32x256xf32>
    %55 = arith.addf %48, %54 : vector<8x32x256xf32>
    %56 = vector.extract_strided_slice %34 {offsets = [0, 3, 0], sizes = [8, 1, 256], strides = [1, 1, 1]} : vector<8x4x256xf32> to vector<8x1x256xf32>
    %57 = vector.extract_strided_slice %5 {offsets = [0, 7], sizes = [32, 1], strides = [1, 1]} : vector<32x12xf32> to vector<32x1xf32>
    %58 = vector.shape_cast %57 : vector<32x1xf32> to vector<1x32x1xf32>
    %59 = vector.broadcast %56 : vector<8x1x256xf32> to vector<8x32x256xf32>
    %60 = vector.broadcast %58 : vector<1x32x1xf32> to vector<8x32x256xf32>
    %61 = arith.mulf %59, %60 : vector<8x32x256xf32>
    %62 = arith.addf %55, %61 : vector<8x32x256xf32>
    %c0_17 = arith.constant 0 : index
    %c0_18 = arith.constant 0 : index
    %c2 = arith.constant 2 : index
    %63 = vector.load %arg8[%c0_17, %c0_18, %c2] : memref<8x4x258xf32, #tpu.memory_space<vmem>>, vector<8x4x256xf32>
    %64 = vector.extract_strided_slice %63 {offsets = [0, 0, 0], sizes = [8, 1, 256], strides = [1, 1, 1]} : vector<8x4x256xf32> to vector<8x1x256xf32>
    %65 = vector.extract_strided_slice %5 {offsets = [0, 8], sizes = [32, 1], strides = [1, 1]} : vector<32x12xf32> to vector<32x1xf32>
    %66 = vector.shape_cast %65 : vector<32x1xf32> to vector<1x32x1xf32>
    %67 = vector.broadcast %64 : vector<8x1x256xf32> to vector<8x32x256xf32>
    %68 = vector.broadcast %66 : vector<1x32x1xf32> to vector<8x32x256xf32>
    %69 = arith.mulf %67, %68 : vector<8x32x256xf32>
    %70 = arith.addf %62, %69 : vector<8x32x256xf32>
    %71 = vector.extract_strided_slice %63 {offsets = [0, 1, 0], sizes = [8, 1, 256], strides = [1, 1, 1]} : vector<8x4x256xf32> to vector<8x1x256xf32>
    %72 = vector.extract_strided_slice %5 {offsets = [0, 9], sizes = [32, 1], strides = [1, 1]} : vector<32x12xf32> to vector<32x1xf32>
    %73 = vector.shape_cast %72 : vector<32x1xf32> to vector<1x32x1xf32>
    %74 = vector.broadcast %71 : vector<8x1x256xf32> to vector<8x32x256xf32>
    %75 = vector.broadcast %73 : vector<1x32x1xf32> to vector<8x32x256xf32>
    %76 = arith.mulf %74, %75 : vector<8x32x256xf32>
    %77 = arith.addf %70, %76 : vector<8x32x256xf32>
    %78 = vector.extract_strided_slice %63 {offsets = [0, 2, 0], sizes = [8, 1, 256], strides = [1, 1, 1]} : vector<8x4x256xf32> to vector<8x1x256xf32>
    %79 = vector.extract_strided_slice %5 {offsets = [0, 10], sizes = [32, 1], strides = [1, 1]} : vector<32x12xf32> to vector<32x1xf32>
    %80 = vector.shape_cast %79 : vector<32x1xf32> to vector<1x32x1xf32>
    %81 = vector.broadcast %78 : vector<8x1x256xf32> to vector<8x32x256xf32>
    %82 = vector.broadcast %80 : vector<1x32x1xf32> to vector<8x32x256xf32>
    %83 = arith.mulf %81, %82 : vector<8x32x256xf32>
    %84 = arith.addf %77, %83 : vector<8x32x256xf32>
    %85 = vector.extract_strided_slice %63 {offsets = [0, 3, 0], sizes = [8, 1, 256], strides = [1, 1, 1]} : vector<8x4x256xf32> to vector<8x1x256xf32>
    %86 = vector.extract_strided_slice %5 {offsets = [0, 11], sizes = [32, 1], strides = [1, 1]} : vector<32x12xf32> to vector<32x1xf32>
    %87 = vector.shape_cast %86 : vector<32x1xf32> to vector<1x32x1xf32>
    %88 = vector.broadcast %85 : vector<8x1x256xf32> to vector<8x32x256xf32>
    %89 = vector.broadcast %87 : vector<1x32x1xf32> to vector<8x32x256xf32>
    %90 = arith.mulf %88, %89 : vector<8x32x256xf32>
    %91 = arith.addf %84, %90 : vector<8x32x256xf32>
    %c0_19 = arith.constant 0 : index
    %c0_20 = arith.constant 0 : index
    %92 = vector.load %arg3[%c0_19, %c0_20] : memref<32x1xf32, #tpu.memory_space<vmem>>, vector<32x1xf32>
    %93 = vector.shape_cast %92 : vector<32x1xf32> to vector<1x32x1xf32>
    %94 = vector.broadcast %93 : vector<1x32x1xf32> to vector<8x32x256xf32>
    %95 = arith.addf %91, %94 : vector<8x32x256xf32>
    %cst_21 = arith.constant 0.000000e+00 : f32
    %96 = vector.broadcast %cst_21 : f32 to vector<8x32x256xf32>
    %97 = arith.maximumf %95, %96 : vector<8x32x256xf32>
    %cst_22 = arith.constant dense<0.000000e+00> : vector<8x32xf32>
    %98 = vector.multi_reduction <add>, %97, %cst_22 [2] : vector<8x32x256xf32> to vector<8x32xf32>
    %cst_23 = arith.constant 3.906250e-03 : f32
    %99 = vector.broadcast %cst_23 : f32 to vector<8x32xf32>
    %100 = arith.mulf %98, %99 : vector<8x32xf32>
    %c0_24 = arith.constant 0 : index
    %c0_25 = arith.constant 0 : index
    %c0_26 = arith.constant 0 : index
    %101 = vector.load %arg6[%c0_24, %c0_25, %c0_26] : memref<1x8x128xf32, #tpu.memory_space<vmem>>, vector<1x8x32xf32>
    %102 = vector.shape_cast %101 : vector<1x8x32xf32> to vector<8x32xf32>
    %103 = vector.shape_cast %100 : vector<8x32xf32> to vector<1x8x32xf32>
    tpu.vector_store %arg6[%c0_24, %c0_25, %c0_26], %103 {strides = array<i32>} : memref<1x8x128xf32, #tpu.memory_space<vmem>>, vector<1x8x32xf32>,
    %cst_27 = arith.constant 0.000000e+00 : f32
    %104 = vector.broadcast %cst_27 : f32 to vector<8x96xf32>
    %c0_28 = arith.constant 0 : index
    %c0_29 = arith.constant 0 : index
    %c32 = arith.constant 32 : index
    %105 = vector.load %arg6[%c0_28, %c0_29, %c32] : memref<1x8x128xf32, #tpu.memory_space<vmem>>, vector<1x8x96xf32>
    %106 = vector.shape_cast %105 : vector<1x8x96xf32> to vector<8x96xf32>
    %107 = vector.shape_cast %104 : vector<8x96xf32> to vector<1x8x96xf32>
    tpu.vector_store %arg6[%c0_28, %c0_29, %c32], %107 {strides = array<i32>} : memref<1x8x128xf32, #tpu.memory_space<vmem>>, vector<1x8x96xf32>,
    %108 = vector.shape_cast %100 : vector<8x32xf32> to vector<4x2x32xf32>
    %109 = vector.extract_strided_slice %108 {offsets = [0, 0, 0], sizes = [4, 1, 32], strides = [1, 1, 1]} : vector<4x2x32xf32> to vector<4x1x32xf32>
    %110 = vector.shape_cast %109 : vector<4x1x32xf32> to vector<4x32xf32>
    %111 = vector.extract_strided_slice %108 {offsets = [0, 1, 0], sizes = [4, 1, 32], strides = [1, 1, 1]} : vector<4x2x32xf32> to vector<4x1x32xf32>
    %112 = vector.shape_cast %111 : vector<4x1x32xf32> to vector<4x32xf32>
    %113 = arith.subf %110, %112 : vector<4x32xf32>
    %114 = math.absf %113 : vector<4x32xf32>
    %c0_30 = arith.constant 0 : index
    %c0_31 = arith.constant 0 : index
    %115 = vector.load %arg4[%c0_30, %c0_31] : memref<32x128xf32, #tpu.memory_space<vmem>>, vector<32x128xf32>
    %cst_32 = arith.constant dense<0.000000e+00> : vector<4x128xf32>
    %116 = tpu.matmul %114, %115, %cst_32 {dimension_numbers = #tpu.dot_dimension_numbers<[1], [0], [0], [1], [0, 0, 1, 1], [], []>} : vector<4x32xf32>, vector<32x128xf32>, vector<4x128xf32> -> vector<4x128xf32>
    %c0_33 = arith.constant 0 : index
    %c0_34 = arith.constant 0 : index
    %117 = vector.load %arg5[%c0_33, %c0_34] : memref<1x128xf32, #tpu.memory_space<vmem>>, vector<1x128xf32>
    %118 = vector.broadcast %117 : vector<1x128xf32> to vector<4x128xf32>
    %119 = arith.addf %116, %118 : vector<4x128xf32>
    %c0_35 = arith.constant 0 : index
    %c0_36 = arith.constant 0 : index
    %c0_37 = arith.constant 0 : index
    %120 = vector.load %arg7[%c0_35, %c0_36, %c0_37] : memref<1x4x128xf32, #tpu.memory_space<vmem>>, vector<1x4x128xf32>
    %121 = vector.shape_cast %120 : vector<1x4x128xf32> to vector<4x128xf32>
    %122 = vector.shape_cast %119 : vector<4x128xf32> to vector<1x4x128xf32>
    tpu.vector_store %arg7[%c0_35, %c0_36, %c0_37], %122 {strides = array<i32>} : memref<1x4x128xf32, #tpu.memory_space<vmem>>, vector<1x4x128xf32>,
    return
  }
  func.func @transform_0(%arg0: i32) -> (i32, i32, i32) {
    %c0_i32 = arith.constant 0 : i32
    %c0_i32_0 = arith.constant 0 : i32
    %c0_i32_1 = arith.constant 0 : i32
    return %arg0, %c0_i32, %c0_i32_0 : i32, i32, i32
  }
  func.func @transform_1(%arg0: i32) -> (i32, i32) {
    %c0_i32 = arith.constant 0 : i32
    %c0_i32_0 = arith.constant 0 : i32
    %c0_i32_1 = arith.constant 0 : i32
    return %c0_i32, %c0_i32_0 : i32, i32
  }
  func.func @transform_2(%arg0: i32) -> (i32, i32) {
    %c0_i32 = arith.constant 0 : i32
    %c0_i32_0 = arith.constant 0 : i32
    %c0_i32_1 = arith.constant 0 : i32
    return %c0_i32, %c0_i32_0 : i32, i32
  }
  func.func @transform_3(%arg0: i32) -> (i32, i32) {
    %c0_i32 = arith.constant 0 : i32
    %c0_i32_0 = arith.constant 0 : i32
    %c0_i32_1 = arith.constant 0 : i32
    return %c0_i32, %c0_i32_0 : i32, i32
  }
  func.func @transform_4(%arg0: i32) -> (i32, i32) {
    %c0_i32 = arith.constant 0 : i32
    %c0_i32_0 = arith.constant 0 : i32
    %c0_i32_1 = arith.constant 0 : i32
    return %c0_i32, %c0_i32_0 : i32, i32
  }
  func.func @transform_5(%arg0: i32) -> (i32, i32, i32) {
    %c0_i32 = arith.constant 0 : i32
    %c0_i32_0 = arith.constant 0 : i32
    %c0_i32_1 = arith.constant 0 : i32
    return %arg0, %c0_i32, %c0_i32_0 : i32, i32, i32
  }
  func.func @transform_6(%arg0: i32) -> (i32, i32, i32) {
    %c0_i32 = arith.constant 0 : i32
    %c0_i32_0 = arith.constant 0 : i32
    %c0_i32_1 = arith.constant 0 : i32
    return %arg0, %c0_i32, %c0_i32_0 : i32, i32, i32
  }
}

</mosaic_0001>

<llo_original>
// kernel: tpu_custom_call.1
$region0: #{tpu_custom_call.1}
  #allocation0 [shape = 'u32[]', space=smem, size = 0x4, offset = 0x4, fixed_abs, tag = 'smem constant byte address 0x4 - core index']
  #allocation1 [shape = 'u32[72,128]{1,0:T(1,128)}', space=vmem, size = 0x9000, scoped, tag = 'internal scratch']
  #allocation2 [shape = 'f32[8,4,258]{2,1,0:T(4,128)}', space=vmem, size = 0xc000, scoped, tag = 'scratch operand']
  %s0 = inlined_call_operand.hbm [shape: f32[16,4,256], index: 0, kind: input, shape index: {}]
  %s1 = inlined_call_operand.vmem [shape: f32[32,12], index: 1, kind: input, shape index: {}]
  %s2 = inlined_call_operand.vmem [shape: f32[32,1], index: 2, kind: input, shape index: {}]
  %s3 = inlined_call_operand.vmem [shape: f32[32,128], index: 3, kind: input, shape index: {}]
  %s4 = inlined_call_operand.vmem [shape: f32[1,128], index: 4, kind: input, shape index: {}]
  %s5 = inlined_call_operand.hbm [shape: f32[2,8,128], index: 5, kind: output, shape index: {0}]
  %s6 = inlined_call_operand.hbm [shape: f32[2,4,128], index: 6, kind: output, shape index: {1}]
  %7 = xla_tuple %s5, %s6
  %s8 = sld [smem:[#allocation0]]
  $region65: #{tpu_custom_call.1} parent=0
    _
  %s10 = ssub.s32 1, %s8
  %s11 = scalar_select 0, %s10, %s8
  $region1: #{tpu_custom_call.1} parent=0
    #allocation3 [shape = 'u8[65536]{0}', space=vmem, size = 0x10000, scoped, tag = 'input window, operand 0']
    #allocation4 [shape = 's32[2]{0}', space=sflag, size = 0x8, scoped, tag = 'scoped memory for tpu_custom_call.1']
    #allocation5 [shape = 's32[2]{0}', space=sflag, size = 0x8, scoped, tag = 'scoped memory for tpu_custom_call.1']
    #allocation6 [shape = 'u8[8192]{0}', space=vmem, size = 0x2000, scoped, tag = 'output window, operand 0']
    #allocation7 [shape = 'u8[4096]{0}', space=vmem, size = 0x1000, scoped, tag = 'output window, operand 1']
    #allocation8 [shape = 's32[2]{0}', space=sflag, size = 0x8, scoped, tag = 'scoped memory for tpu_custom_call.1']
    %12 = vsyncpa [#allocation4], 0
    %s13 = scalar_lea.sflag [#allocation4], 1
    %14 = vsyncpa %s13, 0
    %15 = vsyncpa [#allocation5], 0
    %s16 = scalar_lea.sflag [#allocation5], 1
    %17 = vsyncpa %s16, 0
    %18 = vsyncpa [#allocation8], 0
    %s19 = scalar_lea.sflag [#allocation8], 1
    %20 = vsyncpa %s19, 0
    loop: start=0, step=1, limit=4
    $region2: #{tpu_custom_call.1} parent=1 // loop_pre_header
      _
    $region3: #{tpu_custom_call.1} parent=1 // loop_header
      %s22 = sphi 0, %s26
      %p23 = scmp.ge.s32.totalorder %s22, 4
      %s32 = sphi 0, %s34
      %s35 = sphi 0, %s32
      %s36 = sphi 0, %s35
      %s52 = sphi 0, %s36
      %s56 = sphi 0, %s56
      %s58 = sphi 0, %s56
      %s59 = sphi 0, %s58
      %s73 = sphi 0, %s59
      %s77 = sphi 0, %s77
      %s79 = sphi 0, %s77
      %s80 = sphi 0, %s79
      %s94 = sphi 0, %s80
      %s98 = sphi 0, %s98
      %s100 = sphi 0, %s98
      %s101 = sphi 0, %s100
      %s115 = sphi 0, %s101
      %s119 = sphi 0, %s119
      %s121 = sphi 0, %s119
      %s122 = sphi 0, %s121
      %s136 = sphi 0, %s122
      %s142 = sphi 0, %s144
      %s145 = sphi 0, %s142
      %s146 = sphi 0, %s145
      %s162 = sphi 0, %s146
      %s168 = sphi 0, %s170
      %s171 = sphi 0, %s168
      %s172 = sphi 0, %s171
      %s188 = sphi 0, %s172
    $region4: #{tpu_custom_call.1} parent=1 // loop_header_branch
      %25 = sbr.rel (%p23) target = $region8
    $region5: #{tpu_custom_call.1} parent=1 // loop_body
      %s27 = ssub.s32 %s22, 1
      %s28 = ssub.s32 %s22, 2
      %s29 = sadd.s32 %s22, 1
      %s30 = ssub.s32 %s22, %s29
      %p31 = scmp.eq.s32.totalorder %s30, 0
      %s33 = sadd.s32 %s32, 1
      %s34 = scalar_select %p31, %s32, %s33
      %p37 = pneg %p31
      %p38 = scmp.eq.s32.totalorder %s22, 1
      %p39 = por %p37, %p38
      %p40 = scmp.ne.s32.totalorder %s32, %s35
      %p41 = scmp.eq.s32.totalorder %s22, 0
      %p42 = por %p40, %p41
      %p43 = scmp.ne.s32.totalorder %s32, %s35
      %p44 = scmp.eq.s32.totalorder %s27, 1
      %p45 = por %p43, %p44
      %p46 = scmp.ne.s32.totalorder %s35, %s36
      %p47 = scmp.eq.s32.totalorder %s27, 0
      %p48 = por %p46, %p47
      %p49 = scmp.ne.s32.totalorder %s35, %s36
      %p50 = scmp.eq.s32.totalorder %s28, 1
      %p51 = por %p49, %p50
      %p53 = scmp.ne.s32.totalorder %s36, %s52
      %p54 = scmp.eq.s32.totalorder %s28, 0
      %p55 = por %p53, %p54
      %s57 = sadd.s32 %s56, 1
      %p60 = scmp.eq.s32.totalorder %s22, 1
      %p61 = scmp.ne.s32.totalorder %s56, %s58
      %p62 = scmp.eq.s32.totalorder %s22, 0
      %p63 = por %p61, %p62
      %p64 = scmp.ne.s32.totalorder %s56, %s58
      %p65 = scmp.eq.s32.totalorder %s27, 1
      %p66 = por %p64, %p65
      %p67 = scmp.ne.s32.totalorder %s58, %s59
      %p68 = scmp.eq.s32.totalorder %s27, 0
      %p69 = por %p67, %p68
      %p70 = scmp.ne.s32.totalorder %s58, %s59
      %p71 = scmp.eq.s32.totalorder %s28, 1
      %p72 = por %p70, %p71
      %p74 = scmp.ne.s32.totalorder %s59, %s73
      %p75 = scmp.eq.s32.totalorder %s28, 0
      %p76 = por %p74, %p75
      %s78 = sadd.s32 %s77, 1
      %p81 = scmp.eq.s32.totalorder %s22, 1
      %p82 = scmp.ne.s32.totalorder %s77, %s79
      %p83 = scmp.eq.s32.totalorder %s22, 0
      %p84 = por %p82, %p83
      %p85 = scmp.ne.s32.totalorder %s77, %s79
      %p86 = scmp.eq.s32.totalorder %s27, 1
      %p87 = por %p85, %p86
      %p88 = scmp.ne.s32.totalorder %s79, %s80
      %p89 = scmp.eq.s32.totalorder %s27, 0
      %p90 = por %p88, %p89
      %p91 = scmp.ne.s32.totalorder %s79, %s80
      %p92 = scmp.eq.s32.totalorder %s28, 1
      %p93 = por %p91, %p92
      %p95 = scmp.ne.s32.totalorder %s80, %s94
      %p96 = scmp.eq.s32.totalorder %s28, 0
      %p97 = por %p95, %p96
      %s99 = sadd.s32 %s98, 1
      %p102 = scmp.eq.s32.totalorder %s22, 1
      %p103 = scmp.ne.s32.totalorder %s98, %s100
      %p104 = scmp.eq.s32.totalorder %s22, 0
      %p105 = por %p103, %p104
      %p106 = scmp.ne.s32.totalorder %s98, %s100
      %p107 = scmp.eq.s32.totalorder %s27, 1
      %p108 = por %p106, %p107
      %p109 = scmp.ne.s32.totalorder %s100, %s101
      %p110 = scmp.eq.s32.totalorder %s27, 0
      %p111 = por %p109, %p110
      %p112 = scmp.ne.s32.totalorder %s100, %s101
      %p113 = scmp.eq.s32.totalorder %s28, 1
      %p114 = por %p112, %p113
      %p116 = scmp.ne.s32.totalorder %s101, %s115
      %p117 = scmp.eq.s32.totalorder %s28, 0
      %p118 = por %p116, %p117
      %s120 = sadd.s32 %s119, 1
      %p123 = scmp.eq.s32.totalorder %s22, 1
      %p124 = scmp.ne.s32.totalorder %s119, %s121
      %p125 = scmp.eq.s32.totalorder %s22, 0
      %p126 = por %p124, %p125
      %p127 = scmp.ne.s32.totalorder %s119, %s121
      %p128 = scmp.eq.s32.totalorder %s27, 1
      %p129 = por %p127, %p128
      %p130 = scmp.ne.s32.totalorder %s121, %s122
      %p131 = scmp.eq.s32.totalorder %s27, 0
      %p132 = por %p130, %p131
      %p133 = scmp.ne.s32.totalorder %s121, %s122
      %p134 = scmp.eq.s32.totalorder %s28, 1
      %p135 = por %p133, %p134
      %p137 = scmp.ne.s32.totalorder %s122, %s136
      %p138 = scmp.eq.s32.totalorder %s28, 0
      %p139 = por %p137, %p138
      %s140 = ssub.s32 %s22, %s29
      %p141 = scmp.eq.s32.totalorder %s140, 0
      %s143 = sadd.s32 %s142, 1
      %s144 = scalar_select %p141, %s142, %s143
      %p147 = pneg %p141
      %p148 = scmp.eq.s32.totalorder %s22, 1
      %p149 = por %p147, %p148
      %p150 = scmp.ne.s32.totalorder %s142, %s145
      %p151 = scmp.eq.s32.totalorder %s22, 0
      %p152 = por %p150, %p151
      %p153 = scmp.ne.s32.totalorder %s142, %s145
      %p154 = scmp.eq.s32.totalorder %s27, 1
      %p155 = por %p153, %p154
      %p156 = scmp.ne.s32.totalorder %s145, %s146
      %p157 = scmp.eq.s32.totalorder %s27, 0
      %p158 = por %p156, %p157
      %p159 = scmp.ne.s32.totalorder %s145, %s146
      %p160 = scmp.eq.s32.totalorder %s28, 1
      %p161 = por %p159, %p160
      %p163 = scmp.ne.s32.totalorder %s146, %s162
      %p164 = scmp.eq.s32.totalorder %s28, 0
      %p165 = por %p163, %p164
      %s166 = ssub.s32 %s22, %s29
      %p167 = scmp.eq.s32.totalorder %s166, 0
      %s169 = sadd.s32 %s168, 1
      %s170 = scalar_select %p167, %s168, %s169
      %p173 = pneg %p167
      %p174 = scmp.eq.s32.totalorder %s22, 1
      %p175 = por %p173, %p174
      %p176 = scmp.ne.s32.totalorder %s168, %s171
      %p177 = scmp.eq.s32.totalorder %s22, 0
      %p178 = por %p176, %p177
      %p179 = scmp.ne.s32.totalorder %s168, %s171
      %p180 = scmp.eq.s32.totalorder %s27, 1
      %p181 = por %p179, %p180
      %p182 = scmp.ne.s32.totalorder %s171, %s172
      %p183 = scmp.eq.s32.totalorder %s27, 0
      %p184 = por %p182, %p183
      %p185 = scmp.ne.s32.totalorder %s171, %s172
      %p186 = scmp.eq.s32.totalorder %s28, 1
      %p187 = por %p185, %p186
      %p189 = scmp.ne.s32.totalorder %s172, %s188
      %p190 = scmp.eq.s32.totalorder %s28, 0
      %p191 = por %p189, %p190
      %p192 = scmp.le.s32.totalorder 1, %s22
      %p193 = scmp.lt.s32.totalorder %s22, 3
      %p194 = pnand %p192, %p193
      %p195 = pneg %p194
      // Predicated region
      $region9: #{tpu_custom_call.1} parent=5 // pred_check
        _
      $region10: #{tpu_custom_call.1} parent=5 // pred_check_branch
        %197 = sbr.rel (%p194) target = $region12
      $region11: #{tpu_custom_call.1} parent=5 // pred_region
        %s198 = ssub.s32 %s22, 1
        // Predicated region
        $region13: #{tpu_custom_call.1} parent=11 // pred_check
          %p199 = pneg %p69
        $region14: #{tpu_custom_call.1} parent=11 // pred_check_branch
          %201 = sbr.rel (%p199) target = $region16
        $region15: #{tpu_custom_call.1} parent=11 // pred_region
          _
        $region16: #{tpu_custom_call.1} parent=11 // pred_fallthru
          _
        // Predicated region
        $region17: #{tpu_custom_call.1} parent=11 // pred_check
          %p202 = pneg %p90
        $region18: #{tpu_custom_call.1} parent=11 // pred_check_branch
          %204 = sbr.rel (%p202) target = $region20
        $region19: #{tpu_custom_call.1} parent=11 // pred_region
          _
        $region20: #{tpu_custom_call.1} parent=11 // pred_fallthru
          _
        // Predicated region
        $region21: #{tpu_custom_call.1} parent=11 // pred_check
          %p205 = pneg %p111
        $region22: #{tpu_custom_call.1} parent=11 // pred_check_branch
          %207 = sbr.rel (%p205) target = $region24
        $region23: #{tpu_custom_call.1} parent=11 // pred_region
          _
        $region24: #{tpu_custom_call.1} parent=11 // pred_fallthru
          _
        // Predicated region
        $region25: #{tpu_custom_call.1} parent=11 // pred_check
          %p208 = pneg %p132
        $region26: #{tpu_custom_call.1} parent=11 // pred_check_branch
          %210 = sbr.rel (%p208) target = $region28
        $region27: #{tpu_custom_call.1} parent=11 // pred_region
          _
        $region28: #{tpu_custom_call.1} parent=11 // pred_fallthru
          _
      $region12: #{tpu_custom_call.1} parent=5 // pred_fallthru
        _
      %p211 = scmp.lt.s32.totalorder %s22, 2
      // Predicated region
      $region29: #{tpu_custom_call.1} parent=5 // pred_check
        %p212 = pneg %p211
      $region30: #{tpu_custom_call.1} parent=5 // pred_check_branch
        %214 = sbr.rel (%p212) target = $region32
      $region31: #{tpu_custom_call.1} parent=5 // pred_region
        // Predicated region
        $region33: #{tpu_custom_call.1} parent=31 // pred_check
          %p215 = pneg %p42
        $region34: #{tpu_custom_call.1} parent=31 // pred_check_branch
          %217 = sbr.rel (%p215) target = $region36
        $region35: #{tpu_custom_call.1} parent=31 // pred_region
          %s218 = sand.u32 %s32, 1
          %s219 = scalar_lea.sflag [#allocation4], %s218
          %s220 = sand.u32 %s32, 1
          %s221 = smul.addr %s220, 64
          %s222 = scalar_lea.vmem [#allocation3], %s221
          %s223 = smul.u32 8, %s22
          %225 = vsyncadd %s219, 0
          %s226 = smul.addr %s223, 2
          %s227 = smul.addr %s226, 4
          %s228 = scalar_lea.hbm %s0, %s227
          %s229 = sshll.u32 %s228, 4
          %s230 = int_to_ptr.hbm [resolvable:$true] %s229
          %s231 = sshll.u32 %s222, 4
          %s232 = int_to_ptr.vmem [resolvable:$true] %s231
          %237 = dma.hbm_to_vmem [thread:$0]  %s230, 1024, %s232, %s219, 128, 128, 8
        $region36: #{tpu_custom_call.1} parent=31 // pred_fallthru
          _
      $region32: #{tpu_custom_call.1} parent=5 // pred_fallthru
        _
      %p238 = scmp.le.s32.totalorder 1, %s22
      %p239 = scmp.lt.s32.totalorder %s22, 3
      %p240 = pnand %p238, %p239
      %p241 = pneg %p240
      // Predicated region
      $region37: #{tpu_custom_call.1} parent=5 // pred_check
        _
      $region38: #{tpu_custom_call.1} parent=5 // pred_check_branch
        %243 = sbr.rel (%p240) target = $region40
      $region39: #{tpu_custom_call.1} parent=5 // pred_region
        %s244 = ssub.s32 %s22, 1
        %s245 = sand.u32 %s35, 1
        %s246 = scalar_lea.sflag [#allocation4], %s245
        %s247 = sand.u32 %s35, 1
        %s248 = smul.addr %s247, 64
        %s249 = scalar_lea.vmem [#allocation3], %s248
        // Predicated region
        $region41: #{tpu_custom_call.1} parent=39 // pred_check
          %p250 = pneg %p48
        $region42: #{tpu_custom_call.1} parent=39 // pred_check_branch
          %252 = sbr.rel (%p250) target = $region44
        $region43: #{tpu_custom_call.1} parent=39 // pred_region
          %254 = dma.done %s246, 1024
        $region44: #{tpu_custom_call.1} parent=39 // pred_fallthru
          _
        %s255 = sand.u32 %s35, 1
        %s256 = scalar_lea.sflag [#allocation4], %s255
        %s257 = sand.u32 %s35, 1
        %s258 = smul.addr %s257, 64
        %s259 = scalar_lea.vmem [#allocation3], %s258
        %p260 = pneg %p48
        %p261 = pneg %p45
        %p262 = pneg %p69
        %p263 = pneg %p66
        %p264 = pneg %p90
        %p265 = pneg %p87
        %p266 = pneg %p111
        %p267 = pneg %p108
        %p268 = pneg %p132
        %p269 = pneg %p129
        %p270 = pneg %p158
        %p271 = pneg %p155
        %s272 = sand.u32 %s145, 1
        %s273 = scalar_lea.sflag [#allocation5], %s272
        %s274 = sand.u32 %s145, 1
        %s275 = smul.addr %s274, 8
        %s276 = scalar_lea.vmem [#allocation6], %s275
        %p277 = pneg %p184
        %p278 = pneg %p181
        %s279 = sand.u32 %s171, 1
        %s280 = scalar_lea.sflag [#allocation8], %s279
        %s281 = sand.u32 %s171, 1
        %s282 = smul.addr %s281, 4
        %s283 = scalar_lea.vmem [#allocation7], %s282
        %s284 = smul.u32 8, %s27
        %v285 = vld [vmem:[%s249] sm:$0xff]
        %v286 = vld [vmem:[%s249 + $0x8] sm:$0xff]
        %v287 = vld [vmem:[%s249 + $0x10] sm:$0xff]
        %v288 = vld [vmem:[%s249 + $0x18] sm:$0xff]
        %v289 = vld [vmem:[%s249 + $0x20] sm:$0xff]
        %v290 = vld [vmem:[%s249 + $0x28] sm:$0xff]
        %v291 = vld [vmem:[%s249 + $0x30] sm:$0xff]
        %v292 = vld [vmem:[%s249 + $0x38] sm:$0xff]
        %301 = vrot.lane.b32.xlu0 %v285, 1
        %v302 = vpop.permute.xlu0 %301
        %303 = vrot.lane.b32.xlu0 %v286, 1
        %v304 = vpop.permute.xlu0 %303
        %305 = vrot.lane.b32.xlu0 %v287, 1
        %v306 = vpop.permute.xlu0 %305
        %307 = vrot.lane.b32.xlu0 %v288, 1
        %v308 = vpop.permute.xlu0 %307
        %309 = vrot.lane.b32.xlu0 %v289, 1
        %v310 = vpop.permute.xlu0 %309
        %311 = vrot.lane.b32.xlu0 %v290, 1
        %v312 = vpop.permute.xlu0 %311
        %313 = vrot.lane.b32.xlu0 %v291, 1
        %v314 = vpop.permute.xlu0 %313
        %315 = vrot.lane.b32.xlu0 %v292, 1
        %v316 = vpop.permute.xlu0 %315
        %v317 = vrot.slane %v302, 4
        %v318 = vrot.slane %v304, 4
        %v319 = vrot.slane %v306, 4
        %v320 = vrot.slane %v308, 4
        %v321 = vrot.slane %v310, 4
        %v322 = vrot.slane %v312, 4
        %v323 = vrot.slane %v314, 4
        %v324 = vrot.slane %v316, 4
        %vm325 = vcmask 7168
        %v326 = vsel %vm325, %v317, %v302
        %v327 = vsel %vm325, %v318, %v304
        %v328 = vsel %vm325, %v319, %v306
        %v329 = vsel %vm325, %v320, %v308
        %v330 = vsel %vm325, %v321, %v310
        %v331 = vsel %vm325, %v322, %v312
        %v332 = vsel %vm325, %v323, %v314
        %v333 = vsel %vm325, %v324, %v316
        %vm350 = vcmask 1043464
        %vm351 = vcmask 1047556
        %vm352 = vmor %vm351, %vm350
        %353 = vst.msk [vmem:[#allocation2] sm:$0xff] %vm352, %v326
        %vm354 = vcmask 3072
        %355 = vst.msk [vmem:[#allocation2 + $0x8] sm:$0xf] %vm354, %v317
        %356 = vst.msk [vmem:[#allocation2 + $0xc] sm:$0xff] %vm352, %v327
        %357 = vst.msk [vmem:[#allocation2 + $0x14] sm:$0xf] %vm354, %v318
        %358 = vst.msk [vmem:[#allocation2 + $0x18] sm:$0xff] %vm352, %v328
        %359 = vst.msk [vmem:[#allocation2 + $0x20] sm:$0xf] %vm354, %v319
        %360 = vst.msk [vmem:[#allocation2 + $0x24] sm:$0xff] %vm352, %v329
        %361 = vst.msk [vmem:[#allocation2 + $0x2c] sm:$0xf] %vm354, %v320
        %362 = vst.msk [vmem:[#allocation2 + $0x30] sm:$0xff] %vm352, %v330
        %363 = vst.msk [vmem:[#allocation2 + $0x38] sm:$0xf] %vm354, %v321
        %364 = vst.msk [vmem:[#allocation2 + $0x3c] sm:$0xff] %vm352, %v331
        %365 = vst.msk [vmem:[#allocation2 + $0x44] sm:$0xf] %vm354, %v322
        %366 = vst.msk [vmem:[#allocation2 + $0x48] sm:$0xff] %vm352, %v332
        %367 = vst.msk [vmem:[#allocation2 + $0x50] sm:$0xf] %vm354, %v323
        %368 = vst.msk [vmem:[#allocation2 + $0x54] sm:$0xff] %vm352, %v333
        %369 = vst.msk [vmem:[#allocation2 + $0x5c] sm:$0xf] %vm354, %v324
        %370 = vst.msk [vmem:[#allocation2] sm:$0xf] %vm354, 0.0
        %371 = vst.msk [vmem:[#allocation2 + $0xc] sm:$0xf] %vm354, 0.0
        %372 = vst.msk [vmem:[#allocation2 + $0x18] sm:$0xf] %vm354, 0.0
        %373 = vst.msk [vmem:[#allocation2 + $0x24] sm:$0xf] %vm354, 0.0
        %374 = vst.msk [vmem:[#allocation2 + $0x30] sm:$0xf] %vm354, 0.0
        %375 = vst.msk [vmem:[#allocation2 + $0x3c] sm:$0xf] %vm354, 0.0
        %376 = vst.msk [vmem:[#allocation2 + $0x48] sm:$0xf] %vm354, 0.0
        %377 = vst.msk [vmem:[#allocation2 + $0x54] sm:$0xf] %vm354, 0.0
        %vm378 = vcmask 11272
        %379 = vst.msk [vmem:[#allocation2 + $0x8] sm:$0xf] %vm378, 0.0
        %380 = vst.msk [vmem:[#allocation2 + $0x14] sm:$0xf] %vm378, 0.0
        %381 = vst.msk [vmem:[#allocation2 + $0x20] sm:$0xf] %vm378, 0.0
        %382 = vst.msk [vmem:[#allocation2 + $0x2c] sm:$0xf] %vm378, 0.0
        %383 = vst.msk [vmem:[#allocation2 + $0x38] sm:$0xf] %vm378, 0.0
        %384 = vst.msk [vmem:[#allocation2 + $0x44] sm:$0xf] %vm378, 0.0
        %385 = vst.msk [vmem:[#allocation2 + $0x50] sm:$0xf] %vm378, 0.0
        %386 = vst.msk [vmem:[#allocation2 + $0x5c] sm:$0xf] %vm378, 0.0
        %v387 = vld [vmem:[%s1] sm:$0xff]
        %v388 = vld [vmem:[%s1 + $0x8] sm:$0xff]
        %v389 = vld [vmem:[%s1 + $0x10] sm:$0xff]
        %v390 = vld [vmem:[%s1 + $0x18] sm:$0xff]
        %v391 = vld [vmem:[#allocation2] sm:$0xff]
        %v392 = vld [vmem:[#allocation2 + $0xc] sm:$0xff]
        %v393 = vld [vmem:[#allocation2 + $0x18] sm:$0xff]
        %v394 = vld [vmem:[#allocation2 + $0x24] sm:$0xff]
        %v395 = vld [vmem:[#allocation2 + $0x30] sm:$0xff]
        %v396 = vld [vmem:[#allocation2 + $0x3c] sm:$0xff]
        %v397 = vld [vmem:[#allocation2 + $0x48] sm:$0xff]
        %v398 = vld [vmem:[#allocation2 + $0x54] sm:$0xff]
        %v407 = vperm.slane %v391, 0
        %v408 = vperm.slane %v391, 4
        %v409 = vperm.slane %v392, 0
        %v410 = vperm.slane %v392, 4
        %v411 = vperm.slane %v393, 0
        %v412 = vperm.slane %v393, 4
        %v413 = vperm.slane %v394, 0
        %v414 = vperm.slane %v394, 4
        %v415 = vperm.slane %v395, 0
        %v416 = vperm.slane %v395, 4
        %v417 = vperm.slane %v396, 0
        %v418 = vperm.slane %v396, 4
        %v419 = vperm.slane %v397, 0
        %v420 = vperm.slane %v397, 4
        %v421 = vperm.slane %v398, 0
        %v422 = vperm.slane %v398, 4
        %v439 = vperm.slane %v407, 0
        %v440 = vperm.slane %v408, 0
        %v441 = vperm.slane %v409, 0
        %v442 = vperm.slane %v410, 0
        %v443 = vperm.slane %v411, 0
        %v444 = vperm.slane %v412, 0
        %v445 = vperm.slane %v413, 0
        %v446 = vperm.slane %v414, 0
        %v447 = vperm.slane %v415, 0
        %v448 = vperm.slane %v416, 0
        %v449 = vperm.slane %v417, 0
        %v450 = vperm.slane %v418, 0
        %v451 = vperm.slane %v419, 0
        %v452 = vperm.slane %v420, 0
        %v453 = vperm.slane %v421, 0
        %v454 = vperm.slane %v422, 0
        %456 = vset.pattern.permute.xlu0 0
        %457 = vperm.xlu0 %456, %v387
        %v458 = vpop.permute.xlu0 %457
        %461 = vset.pattern.permute.xlu0 0
        %462 = vperm.xlu0 %461, %v388
        %v463 = vpop.permute.xlu0 %462
        %466 = vset.pattern.permute.xlu0 0
        %467 = vperm.xlu0 %466, %v389
        %v468 = vpop.permute.xlu0 %467
        %471 = vset.pattern.permute.xlu0 0
        %472 = vperm.xlu0 %471, %v390
        %v473 = vpop.permute.xlu0 %472
        %v475 = vmul.f32 %v439, %v458
        %v476 = vmul.f32 %v440, %v458
        %v477 = vmul.f32 %v439, %v463
        %v478 = vmul.f32 %v440, %v463
        %v479 = vmul.f32 %v439, %v468
        %v480 = vmul.f32 %v440, %v468
        %v481 = vmul.f32 %v439, %v473
        %v482 = vmul.f32 %v440, %v473
        %v483 = vmul.f32 %v441, %v458
        %v484 = vmul.f32 %v442, %v458
        %v485 = vmul.f32 %v441, %v463
        %v486 = vmul.f32 %v442, %v463
        %v487 = vmul.f32 %v441, %v468
        %v488 = vmul.f32 %v442, %v468
        %v489 = vmul.f32 %v441, %v473
        %v490 = vmul.f32 %v442, %v473
        %v491 = vmul.f32 %v443, %v458
        %v492 = vmul.f32 %v444, %v458
        %v493 = vmul.f32 %v443, %v463
        %v494 = vmul.f32 %v444, %v463
        %v495 = vmul.f32 %v443, %v468
        %v496 = vmul.f32 %v444, %v468
        %v497 = vmul.f32 %v443, %v473
        %v498 = vmul.f32 %v444, %v473
        %v499 = vmul.f32 %v445, %v458
        %v500 = vmul.f32 %v446, %v458
        %v501 = vmul.f32 %v445, %v463
        %v502 = vmul.f32 %v446, %v463
        %v503 = vmul.f32 %v445, %v468
        %v504 = vmul.f32 %v446, %v468
        %v505 = vmul.f32 %v445, %v473
        %v506 = vmul.f32 %v446, %v473
        %v507 = vmul.f32 %v447, %v458
        %v508 = vmul.f32 %v448, %v458
        %v509 = vmul.f32 %v447, %v463
        %v510 = vmul.f32 %v448, %v463
        %v511 = vmul.f32 %v447, %v468
        %v512 = vmul.f32 %v448, %v468
        %v513 = vmul.f32 %v447, %v473
        %v514 = vmul.f32 %v448, %v473
        %v515 = vmul.f32 %v449, %v458
        %v516 = vmul.f32 %v450, %v458
        %v517 = vmul.f32 %v449, %v463
        %v518 = vmul.f32 %v450, %v463
        %v519 = vmul.f32 %v449, %v468
        %v520 = vmul.f32 %v450, %v468
        %v521 = vmul.f32 %v449, %v473
        %v522 = vmul.f32 %v450, %v473
        %v523 = vmul.f32 %v451, %v458
        %v524 = vmul.f32 %v452, %v458
        %v525 = vmul.f32 %v451, %v463
        %v526 = vmul.f32 %v452, %v463
        %v527 = vmul.f32 %v451, %v468
        %v528 = vmul.f32 %v452, %v468
        %v529 = vmul.f32 %v451, %v473
        %v530 = vmul.f32 %v452, %v473
        %v531 = vmul.f32 %v453, %v458
        %v532 = vmul.f32 %v454, %v458
        %v533 = vmul.f32 %v453, %v463
        %v534 = vmul.f32 %v454, %v463
        %v535 = vmul.f32 %v453, %v468
        %v536 = vmul.f32 %v454, %v468
        %v537 = vmul.f32 %v453, %v473
        %v538 = vmul.f32 %v454, %v473
        %v539 = vperm.slane %v391, 1
        %v540 = vperm.slane %v391, 5
        %v541 = vperm.slane %v392, 1
        %v542 = vperm.slane %v392, 5
        %v543 = vperm.slane %v393, 1
        %v544 = vperm.slane %v393, 5
        %v545 = vperm.slane %v394, 1
        %v546 = vperm.slane %v394, 5
        %v547 = vperm.slane %v395, 1
        %v548 = vperm.slane %v395, 5
        %v549 = vperm.slane %v396, 1
        %v550 = vperm.slane %v396, 5
        %v551 = vperm.slane %v397, 1
        %v552 = vperm.slane %v397, 5
        %v553 = vperm.slane %v398, 1
        %v554 = vperm.slane %v398, 5
        %v571 = vperm.slane %v539, 1
        %v572 = vperm.slane %v540, 1
        %v573 = vperm.slane %v541, 1
        %v574 = vperm.slane %v542, 1
        %v575 = vperm.slane %v543, 1
        %v576 = vperm.slane %v544, 1
        %v577 = vperm.slane %v545, 1
        %v578 = vperm.slane %v546, 1
        %v579 = vperm.slane %v547, 1
        %v580 = vperm.slane %v548, 1
        %v581 = vperm.slane %v549, 1
        %v582 = vperm.slane %v550, 1
        %v583 = vperm.slane %v551, 1
        %v584 = vperm.slane %v552, 1
        %v585 = vperm.slane %v553, 1
        %v586 = vperm.slane %v554, 1
        %587 = vset.pattern.permute.xlu0 1
        %588 = vperm.xlu0 %587, %v387
        %v589 = vpop.permute.xlu0 %588
        %591 = vset.pattern.permute.xlu0 1
        %592 = vperm.xlu0 %591, %v388
        %v593 = vpop.permute.xlu0 %592
        %595 = vset.pattern.permute.xlu0 1
        %596 = vperm.xlu0 %595, %v389
        %v597 = vpop.permute.xlu0 %596
        %599 = vset.pattern.permute.xlu0 1
        %600 = vperm.xlu0 %599, %v390
        %v601 = vpop.permute.xlu0 %600
        %v603 = vmul.f32 %v571, %v589
        %v604 = vmul.f32 %v572, %v589
        %v605 = vmul.f32 %v571, %v593
        %v606 = vmul.f32 %v572, %v593
        %v607 = vmul.f32 %v571, %v597
        %v608 = vmul.f32 %v572, %v597
        %v609 = vmul.f32 %v571, %v601
        %v610 = vmul.f32 %v572, %v601
        %v611 = vmul.f32 %v573, %v589
        %v612 = vmul.f32 %v574, %v589
        %v613 = vmul.f32 %v573, %v593
        %v614 = vmul.f32 %v574, %v593
        %v615 = vmul.f32 %v573, %v597
        %v616 = vmul.f32 %v574, %v597
        %v617 = vmul.f32 %v573, %v601
        %v618 = vmul.f32 %v574, %v601
        %v619 = vmul.f32 %v575, %v589
        %v620 = vmul.f32 %v576, %v589
        %v621 = vmul.f32 %v575, %v593
        %v622 = vmul.f32 %v576, %v593
        %v623 = vmul.f32 %v575, %v597
        %v624 = vmul.f32 %v576, %v597
        %v625 = vmul.f32 %v575, %v601
        %v626 = vmul.f32 %v576, %v601
        %v627 = vmul.f32 %v577, %v589
        %v628 = vmul.f32 %v578, %v589
        %v629 = vmul.f32 %v577, %v593
        %v630 = vmul.f32 %v578, %v593
        %v631 = vmul.f32 %v577, %v597
        %v632 = vmul.f32 %v578, %v597
        %v633 = vmul.f32 %v577, %v601
        %v634 = vmul.f32 %v578, %v601
        %v635 = vmul.f32 %v579, %v589
        %v636 = vmul.f32 %v580, %v589
        %v637 = vmul.f32 %v579, %v593
        %v638 = vmul.f32 %v580, %v593
        %v639 = vmul.f32 %v579, %v597
        %v640 = vmul.f32 %v580, %v597
        %v641 = vmul.f32 %v579, %v601
        %v642 = vmul.f32 %v580, %v601
        %v643 = vmul.f32 %v581, %v589
        %v644 = vmul.f32 %v582, %v589
        %v645 = vmul.f32 %v581, %v593
        %v646 = vmul.f32 %v582, %v593
        %v647 = vmul.f32 %v581, %v597
        %v648 = vmul.f32 %v582, %v597
        %v649 = vmul.f32 %v581, %v601
        %v650 = vmul.f32 %v582, %v601
        %v651 = vmul.f32 %v583, %v589
        %v652 = vmul.f32 %v584, %v589
        %v653 = vmul.f32 %v583, %v593
        %v654 = vmul.f32 %v584, %v593
        %v655 = vmul.f32 %v583, %v597
        %v656 = vmul.f32 %v584, %v597
        %v657 = vmul.f32 %v583, %v601
        %v658 = vmul.f32 %v584, %v601
        %v659 = vmul.f32 %v585, %v589
        %v660 = vmul.f32 %v586, %v589
        %v661 = vmul.f32 %v585, %v593
        %v662 = vmul.f32 %v586, %v593
        %v663 = vmul.f32 %v585, %v597
        %v664 = vmul.f32 %v586, %v597
        %v665 = vmul.f32 %v585, %v601
        %v666 = vmul.f32 %v586, %v601
        %v667 = vadd.f32 %v475, %v603
        %v668 = vadd.f32 %v476, %v604
        %v669 = vadd.f32 %v477, %v605
        %v670 = vadd.f32 %v478, %v606
        %v671 = vadd.f32 %v479, %v607
        %v672 = vadd.f32 %v480, %v608
        %v673 = vadd.f32 %v481, %v609
        %v674 = vadd.f32 %v482, %v610
        %v675 = vadd.f32 %v483, %v611
        %v676 = vadd.f32 %v484, %v612
        %v677 = vadd.f32 %v485, %v613
        %v678 = vadd.f32 %v486, %v614
        %v679 = vadd.f32 %v487, %v615
        %v680 = vadd.f32 %v488, %v616
        %v681 = vadd.f32 %v489, %v617
        %v682 = vadd.f32 %v490, %v618
        %v683 = vadd.f32 %v491, %v619
        %v684 = vadd.f32 %v492, %v620
        %v685 = vadd.f32 %v493, %v621
        %v686 = vadd.f32 %v494, %v622
        %v687 = vadd.f32 %v495, %v623
        %v688 = vadd.f32 %v496, %v624
        %v689 = vadd.f32 %v497, %v625
        %v690 = vadd.f32 %v498, %v626
        %v691 = vadd.f32 %v499, %v627
        %v692 = vadd.f32 %v500, %v628
        %v693 = vadd.f32 %v501, %v629
        %v694 = vadd.f32 %v502, %v630
        %v695 = vadd.f32 %v503, %v631
        %v696 = vadd.f32 %v504, %v632
        %v697 = vadd.f32 %v505, %v633
        %v698 = vadd.f32 %v506, %v634
        %v699 = vadd.f32 %v507, %v635
        %v700 = vadd.f32 %v508, %v636
        %v701 = vadd.f32 %v509, %v637
        %v702 = vadd.f32 %v510, %v638
        %v703 = vadd.f32 %v511, %v639
        %v704 = vadd.f32 %v512, %v640
        %v705 = vadd.f32 %v513, %v641
        %v706 = vadd.f32 %v514, %v642
        %v707 = vadd.f32 %v515, %v643
        %v708 = vadd.f32 %v516, %v644
        %v709 = vadd.f32 %v517, %v645
        %v710 = vadd.f32 %v518, %v646
        %v711 = vadd.f32 %v519, %v647
        %v712 = vadd.f32 %v520, %v648
        %v713 = vadd.f32 %v521, %v649
        %v714 = vadd.f32 %v522, %v650
        %v715 = vadd.f32 %v523, %v651
        %v716 = vadd.f32 %v524, %v652
        %v717 = vadd.f32 %v525, %v653
        %v718 = vadd.f32 %v526, %v654
        %v719 = vadd.f32 %v527, %v655
        %v720 = vadd.f32 %v528, %v656
        %v721 = vadd.f32 %v529, %v657
        %v722 = vadd.f32 %v530, %v658
        %v723 = vadd.f32 %v531, %v659
        %v724 = vadd.f32 %v532, %v660
        %v725 = vadd.f32 %v533, %v661
        %v726 = vadd.f32 %v534, %v662
        %v727 = vadd.f32 %v535, %v663
        %v728 = vadd.f32 %v536, %v664
        %v729 = vadd.f32 %v537, %v665
        %v730 = vadd.f32 %v538, %v666
        %v731 = vperm.slane %v391, 2
        %v732 = vperm.slane %v391, 6
        %v733 = vperm.slane %v392, 2
        %v734 = vperm.slane %v392, 6
        %v735 = vperm.slane %v393, 2
        %v736 = vperm.slane %v393, 6
        %v737 = vperm.slane %v394, 2
        %v738 = vperm.slane %v394, 6
        %v739 = vperm.slane %v395, 2
        %v740 = vperm.slane %v395, 6
        %v741 = vperm.slane %v396, 2
        %v742 = vperm.slane %v396, 6
        %v743 = vperm.slane %v397, 2
        %v744 = vperm.slane %v397, 6
        %v745 = vperm.slane %v398, 2
        %v746 = vperm.slane %v398, 6
        %v763 = vperm.slane %v731, 2
        %v764 = vperm.slane %v732, 2
        %v765 = vperm.slane %v733, 2
        %v766 = vperm.slane %v734, 2
        %v767 = vperm.slane %v735, 2
        %v768 = vperm.slane %v736, 2
        %v769 = vperm.slane %v737, 2
        %v770 = vperm.slane %v738, 2
        %v771 = vperm.slane %v739, 2
        %v772 = vperm.slane %v740, 2
        %v773 = vperm.slane %v741, 2
        %v774 = vperm.slane %v742, 2
        %v775 = vperm.slane %v743, 2
        %v776 = vperm.slane %v744, 2
        %v777 = vperm.slane %v745, 2
        %v778 = vperm.slane %v746, 2
        %779 = vset.pattern.permute.xlu0 2
        %780 = vperm.xlu0 %779, %v387
        %v781 = vpop.permute.xlu0 %780
        %783 = vset.pattern.permute.xlu0 2
        %784 = vperm.xlu0 %783, %v388
        %v785 = vpop.permute.xlu0 %784
        %787 = vset.pattern.permute.xlu0 2
        %788 = vperm.xlu0 %787, %v389
        %v789 = vpop.permute.xlu0 %788
        %791 = vset.pattern.permute.xlu0 2
        %792 = vperm.xlu0 %791, %v390
        %v793 = vpop.permute.xlu0 %792
        %v795 = vmul.f32 %v763, %v781
        %v796 = vmul.f32 %v764, %v781
        %v797 = vmul.f32 %v763, %v785
        %v798 = vmul.f32 %v764, %v785
        %v799 = vmul.f32 %v763, %v789
        %v800 = vmul.f32 %v764, %v789
        %v801 = vmul.f32 %v763, %v793
        %v802 = vmul.f32 %v764, %v793
        %v803 = vmul.f32 %v765, %v781
        %v804 = vmul.f32 %v766, %v781
        %v805 = vmul.f32 %v765, %v785
        %v806 = vmul.f32 %v766, %v785
        %v807 = vmul.f32 %v765, %v789
        %v808 = vmul.f32 %v766, %v789
        %v809 = vmul.f32 %v765, %v793
        %v810 = vmul.f32 %v766, %v793
        %v811 = vmul.f32 %v767, %v781
        %v812 = vmul.f32 %v768, %v781
        %v813 = vmul.f32 %v767, %v785
        %v814 = vmul.f32 %v768, %v785
        %v815 = vmul.f32 %v767, %v789
        %v816 = vmul.f32 %v768, %v789
        %v817 = vmul.f32 %v767, %v793
        %v818 = vmul.f32 %v768, %v793
        %v819 = vmul.f32 %v769, %v781
        %v820 = vmul.f32 %v770, %v781
        %v821 = vmul.f32 %v769, %v785
        %v822 = vmul.f32 %v770, %v785
        %v823 = vmul.f32 %v769, %v789
        %v824 = vmul.f32 %v770, %v789
        %v825 = vmul.f32 %v769, %v793
        %v826 = vmul.f32 %v770, %v793
        %v827 = vmul.f32 %v771, %v781
        %v828 = vmul.f32 %v772, %v781
        %v829 = vmul.f32 %v771, %v785
        %v830 = vmul.f32 %v772, %v785
        %v831 = vmul.f32 %v771, %v789
        %v832 = vmul.f32 %v772, %v789
        %v833 = vmul.f32 %v771, %v793
        %v834 = vmul.f32 %v772, %v793
        %v835 = vmul.f32 %v773, %v781
        %v836 = vmul.f32 %v774, %v781
        %v837 = vmul.f32 %v773, %v785
        %v838 = vmul.f32 %v774, %v785
        %v839 = vmul.f32 %v773, %v789
        %v840 = vmul.f32 %v774, %v789
        %v841 = vmul.f32 %v773, %v793
        %v842 = vmul.f32 %v774, %v793
        %v843 = vmul.f32 %v775, %v781
        %v844 = vmul.f32 %v776, %v781
        %v845 = vmul.f32 %v775, %v785
        %v846 = vmul.f32 %v776, %v785
        %v847 = vmul.f32 %v775, %v789
        %v848 = vmul.f32 %v776, %v789
        %v849 = vmul.f32 %v775, %v793
        %v850 = vmul.f32 %v776, %v793
        %v851 = vmul.f32 %v777, %v781
        %v852 = vmul.f32 %v778, %v781
        %v853 = vmul.f32 %v777, %v785
        %v854 = vmul.f32 %v778, %v785
        %v855 = vmul.f32 %v777, %v789
        %v856 = vmul.f32 %v778, %v789
        %v857 = vmul.f32 %v777, %v793
        %v858 = vmul.f32 %v778, %v793
        %v859 = vadd.f32 %v667, %v795
        %v860 = vadd.f32 %v668, %v796
        %v861 = vadd.f32 %v669, %v797
        %v862 = vadd.f32 %v670, %v798
        %v863 = vadd.f32 %v671, %v799
        %v864 = vadd.f32 %v672, %v800
        %v865 = vadd.f32 %v673, %v801
        %v866 = vadd.f32 %v674, %v802
        %v867 = vadd.f32 %v675, %v803
        %v868 = vadd.f32 %v676, %v804
        %v869 = vadd.f32 %v677, %v805
        %v870 = vadd.f32 %v678, %v806
        %v871 = vadd.f32 %v679, %v807
        %v872 = vadd.f32 %v680, %v808
        %v873 = vadd.f32 %v681, %v809
        %v874 = vadd.f32 %v682, %v810
        %v875 = vadd.f32 %v683, %v811
        %v876 = vadd.f32 %v684, %v812
        %v877 = vadd.f32 %v685, %v813
        %v878 = vadd.f32 %v686, %v814
        %v879 = vadd.f32 %v687, %v815
        %v880 = vadd.f32 %v688, %v816
        %v881 = vadd.f32 %v689, %v817
        %v882 = vadd.f32 %v690, %v818
        %v883 = vadd.f32 %v691, %v819
        %v884 = vadd.f32 %v692, %v820
        %v885 = vadd.f32 %v693, %v821
        %v886 = vadd.f32 %v694, %v822
        %v887 = vadd.f32 %v695, %v823
        %v888 = vadd.f32 %v696, %v824
        %v889 = vadd.f32 %v697, %v825
        %v890 = vadd.f32 %v698, %v826
        %v891 = vadd.f32 %v699, %v827
        %v892 = vadd.f32 %v700, %v828
        %v893 = vadd.f32 %v701, %v829
        %v894 = vadd.f32 %v702, %v830
        %v895 = vadd.f32 %v703, %v831
        %v896 = vadd.f32 %v704, %v832
        %v897 = vadd.f32 %v705, %v833
        %v898 = vadd.f32 %v706, %v834
        %v899 = vadd.f32 %v707, %v835
        %v900 = vadd.f32 %v708, %v836
        %v901 = vadd.f32 %v709, %v837
        %v902 = vadd.f32 %v710, %v838
        %v903 = vadd.f32 %v711, %v839
        %v904 = vadd.f32 %v712, %v840
        %v905 = vadd.f32 %v713, %v841
        %v906 = vadd.f32 %v714, %v842
        %v907 = vadd.f32 %v715, %v843
        %v908 = vadd.f32 %v716, %v844
        %v909 = vadd.f32 %v717, %v845
        %v910 = vadd.f32 %v718, %v846
        %v911 = vadd.f32 %v719, %v847
        %v912 = vadd.f32 %v720, %v848
        %v913 = vadd.f32 %v721, %v849
        %v914 = vadd.f32 %v722, %v850
        %v915 = vadd.f32 %v723, %v851
        %v916 = vadd.f32 %v724, %v852
        %v917 = vadd.f32 %v725, %v853
        %v918 = vadd.f32 %v726, %v854
        %v919 = vadd.f32 %v727, %v855
        %v920 = vadd.f32 %v728, %v856
        %v921 = vadd.f32 %v729, %v857
        %v922 = vadd.f32 %v730, %v858
        %v923 = vperm.slane %v391, 3
        %v924 = vperm.slane %v391, 7
        %v925 = vperm.slane %v392, 3
        %v926 = vperm.slane %v392, 7
        %v927 = vperm.slane %v393, 3
        %v928 = vperm.slane %v393, 7
        %v929 = vperm.slane %v394, 3
        %v930 = vperm.slane %v394, 7
        %v931 = vperm.slane %v395, 3
        %v932 = vperm.slane %v395, 7
        %v933 = vperm.slane %v396, 3
        %v934 = vperm.slane %v396, 7
        %v935 = vperm.slane %v397, 3
        %v936 = vperm.slane %v397, 7
        %v937 = vperm.slane %v398, 3
        %v938 = vperm.slane %v398, 7
        %v955 = vperm.slane %v923, 3
        %v956 = vperm.slane %v924, 3
        %v957 = vperm.slane %v925, 3
        %v958 = vperm.slane %v926, 3
        %v959 = vperm.slane %v927, 3
        %v960 = vperm.slane %v928, 3
        %v961 = vperm.slane %v929, 3
        %v962 = vperm.slane %v930, 3
        %v963 = vperm.slane %v931, 3
        %v964 = vperm.slane %v932, 3
        %v965 = vperm.slane %v933, 3
        %v966 = vperm.slane %v934, 3
        %v967 = vperm.slane %v935, 3
        %v968 = vperm.slane %v936, 3
        %v969 = vperm.slane %v937, 3
        %v970 = vperm.slane %v938, 3
        %971 = vset.pattern.permute.xlu0 3
        %972 = vperm.xlu0 %971, %v387
        %v973 = vpop.permute.xlu0 %972
        %975 = vset.pattern.permute.xlu0 3
        %976 = vperm.xlu0 %975, %v388
        %v977 = vpop.permute.xlu0 %976
        %979 = vset.pattern.permute.xlu0 3
        %980 = vperm.xlu0 %979, %v389
        %v981 = vpop.permute.xlu0 %980
        %983 = vset.pattern.permute.xlu0 3
        %984 = vperm.xlu0 %983, %v390
        %v985 = vpop.permute.xlu0 %984
        %v987 = vmul.f32 %v955, %v973
        %v988 = vmul.f32 %v956, %v973
        %v989 = vmul.f32 %v955, %v977
        %v990 = vmul.f32 %v956, %v977
        %v991 = vmul.f32 %v955, %v981
        %v992 = vmul.f32 %v956, %v981
        %v993 = vmul.f32 %v955, %v985
        %v994 = vmul.f32 %v956, %v985
        %v995 = vmul.f32 %v957, %v973
        %v996 = vmul.f32 %v958, %v973
        %v997 = vmul.f32 %v957, %v977
        %v998 = vmul.f32 %v958, %v977
        %v999 = vmul.f32 %v957, %v981
        %v1000 = vmul.f32 %v958, %v981
        %v1001 = vmul.f32 %v957, %v985
        %v1002 = vmul.f32 %v958, %v985
        %v1003 = vmul.f32 %v959, %v973
        %v1004 = vmul.f32 %v960, %v973
        %v1005 = vmul.f32 %v959, %v977
        %v1006 = vmul.f32 %v960, %v977
        %v1007 = vmul.f32 %v959, %v981
        %v1008 = vmul.f32 %v960, %v981
        %v1009 = vmul.f32 %v959, %v985
        %v1010 = vmul.f32 %v960, %v985
        %v1011 = vmul.f32 %v961, %v973
        %v1012 = vmul.f32 %v962, %v973
        %v1013 = vmul.f32 %v961, %v977
        %v1014 = vmul.f32 %v962, %v977
        %v1015 = vmul.f32 %v961, %v981
        %v1016 = vmul.f32 %v962, %v981
        %v1017 = vmul.f32 %v961, %v985
        %v1018 = vmul.f32 %v962, %v985
        %v1019 = vmul.f32 %v963, %v973
        %v1020 = vmul.f32 %v964, %v973
        %v1021 = vmul.f32 %v963, %v977
        %v1022 = vmul.f32 %v964, %v977
        %v1023 = vmul.f32 %v963, %v981
        %v1024 = vmul.f32 %v964, %v981
        %v1025 = vmul.f32 %v963, %v985
        %v1026 = vmul.f32 %v964, %v985
        %v1027 = vmul.f32 %v965, %v973
        %v1028 = vmul.f32 %v966, %v973
        %v1029 = vmul.f32 %v965, %v977
        %v1030 = vmul.f32 %v966, %v977
        %v1031 = vmul.f32 %v965, %v981
        %v1032 = vmul.f32 %v966, %v981
        %v1033 = vmul.f32 %v965, %v985
        %v1034 = vmul.f32 %v966, %v985
        %v1035 = vmul.f32 %v967, %v973
        %v1036 = vmul.f32 %v968, %v973
        %v1037 = vmul.f32 %v967, %v977
        %v1038 = vmul.f32 %v968, %v977
        %v1039 = vmul.f32 %v967, %v981
        %v1040 = vmul.f32 %v968, %v981
        %v1041 = vmul.f32 %v967, %v985
        %v1042 = vmul.f32 %v968, %v985
        %v1043 = vmul.f32 %v969, %v973
        %v1044 = vmul.f32 %v970, %v973
        %v1045 = vmul.f32 %v969, %v977
        %v1046 = vmul.f32 %v970, %v977
        %v1047 = vmul.f32 %v969, %v981
        %v1048 = vmul.f32 %v970, %v981
        %v1049 = vmul.f32 %v969, %v985
        %v1050 = vmul.f32 %v970, %v985
        %v1051 = vadd.f32 %v859, %v987
        %v1052 = vadd.f32 %v860, %v988
        %v1053 = vadd.f32 %v861, %v989
        %v1054 = vadd.f32 %v862, %v990
        %v1055 = vadd.f32 %v863, %v991
        %v1056 = vadd.f32 %v864, %v992
        %v1057 = vadd.f32 %v865, %v993
        %v1058 = vadd.f32 %v866, %v994
        %v1059 = vadd.f32 %v867, %v995
        %v1060 = vadd.f32 %v868, %v996
        %v1061 = vadd.f32 %v869, %v997
        %v1062 = vadd.f32 %v870, %v998
        %v1063 = vadd.f32 %v871, %v999
        %v1064 = vadd.f32 %v872, %v1000
        %v1065 = vadd.f32 %v873, %v1001
        %v1066 = vadd.f32 %v874, %v1002
        %v1067 = vadd.f32 %v875, %v1003
        %v1068 = vadd.f32 %v876, %v1004
        %v1069 = vadd.f32 %v877, %v1005
        %v1070 = vadd.f32 %v878, %v1006
        %v1071 = vadd.f32 %v879, %v1007
        %v1072 = vadd.f32 %v880, %v1008
        %v1073 = vadd.f32 %v881, %v1009
        %v1074 = vadd.f32 %v882, %v1010
        %v1075 = vadd.f32 %v883, %v1011
        %v1076 = vadd.f32 %v884, %v1012
        %v1077 = vadd.f32 %v885, %v1013
        %v1078 = vadd.f32 %v886, %v1014
        %v1079 = vadd.f32 %v887, %v1015
        %v1080 = vadd.f32 %v888, %v1016
        %v1081 = vadd.f32 %v889, %v1017
        %v1082 = vadd.f32 %v890, %v1018
        %v1083 = vadd.f32 %v891, %v1019
        %v1084 = vadd.f32 %v892, %v1020
        %v1085 = vadd.f32 %v893, %v1021
        %v1086 = vadd.f32 %v894, %v1022
        %v1087 = vadd.f32 %v895, %v1023
        %v1088 = vadd.f32 %v896, %v1024
        %v1089 = vadd.f32 %v897, %v1025
        %v1090 = vadd.f32 %v898, %v1026
        %v1091 = vadd.f32 %v899, %v1027
        %v1092 = vadd.f32 %v900, %v1028
        %v1093 = vadd.f32 %v901, %v1029
        %v1094 = vadd.f32 %v902, %v1030
        %v1095 = vadd.f32 %v903, %v1031
        %v1096 = vadd.f32 %v904, %v1032
        %v1097 = vadd.f32 %v905, %v1033
        %v1098 = vadd.f32 %v906, %v1034
        %v1099 = vadd.f32 %v907, %v1035
        %v1100 = vadd.f32 %v908, %v1036
        %v1101 = vadd.f32 %v909, %v1037
        %v1102 = vadd.f32 %v910, %v1038
        %v1103 = vadd.f32 %v911, %v1039
        %v1104 = vadd.f32 %v912, %v1040
        %v1105 = vadd.f32 %v913, %v1041
        %v1106 = vadd.f32 %v914, %v1042
        %v1107 = vadd.f32 %v915, %v1043
        %v1108 = vadd.f32 %v916, %v1044
        %v1109 = vadd.f32 %v917, %v1045
        %v1110 = vadd.f32 %v918, %v1046
        %v1111 = vadd.f32 %v919, %v1047
        %v1112 = vadd.f32 %v920, %v1048
        %v1113 = vadd.f32 %v921, %v1049
        %v1114 = vadd.f32 %v922, %v1050
        %v1115 = vld [vmem:[#allocation2] sm:$0xff]
        %v1116 = vld [vmem:[#allocation2 + $0x8] sm:$0xf]
        %v1117 = vld [vmem:[#allocation2 + $0xc] sm:$0xff]
        %v1118 = vld [vmem:[#allocation2 + $0x14] sm:$0xf]
        %v1119 = vld [vmem:[#allocation2 + $0x18] sm:$0xff]
        %v1120 = vld [vmem:[#allocation2 + $0x20] sm:$0xf]
        %v1121 = vld [vmem:[#allocation2 + $0x24] sm:$0xff]
        %v1122 = vld [vmem:[#allocation2 + $0x2c] sm:$0xf]
        %v1123 = vld [vmem:[#allocation2 + $0x30] sm:$0xff]
        %v1124 = vld [vmem:[#allocation2 + $0x38] sm:$0xf]
        %v1125 = vld [vmem:[#allocation2 + $0x3c] sm:$0xff]
        %v1126 = vld [vmem:[#allocation2 + $0x44] sm:$0xf]
        %v1127 = vld [vmem:[#allocation2 + $0x48] sm:$0xff]
        %v1128 = vld [vmem:[#allocation2 + $0x50] sm:$0xf]
        %v1129 = vld [vmem:[#allocation2 + $0x54] sm:$0xff]
        %v1130 = vld [vmem:[#allocation2 + $0x5c] sm:$0xf]
        %v1147 = vperm.slane %v1115, 0
        %v1148 = vperm.slane %v1115, 4
        %v1149 = vperm.slane %v1116, 0
        %v1150 = vperm.slane %v1117, 0
        %v1151 = vperm.slane %v1117, 4
        %v1152 = vperm.slane %v1118, 0
        %v1153 = vperm.slane %v1119, 0
        %v1154 = vperm.slane %v1119, 4
        %v1155 = vperm.slane %v1120, 0
        %v1156 = vperm.slane %v1121, 0
        %v1157 = vperm.slane %v1121, 4
        %v1158 = vperm.slane %v1122, 0
        %v1159 = vperm.slane %v1123, 0
        %v1160 = vperm.slane %v1123, 4
        %v1161 = vperm.slane %v1124, 0
        %v1162 = vperm.slane %v1125, 0
        %v1163 = vperm.slane %v1125, 4
        %v1164 = vperm.slane %v1126, 0
        %v1165 = vperm.slane %v1127, 0
        %v1166 = vperm.slane %v1127, 4
        %v1167 = vperm.slane %v1128, 0
        %v1168 = vperm.slane %v1129, 0
        %v1169 = vperm.slane %v1129, 4
        %v1170 = vperm.slane %v1130, 0
        %v1195 = vperm.slane %v1147, 0
        %v1196 = vperm.slane %v1148, 0
        %v1197 = vperm.slane %v1149, 0
        %v1198 = vperm.slane %v1150, 0
        %v1199 = vperm.slane %v1151, 0
        %v1200 = vperm.slane %v1152, 0
        %v1201 = vperm.slane %v1153, 0
        %v1202 = vperm.slane %v1154, 0
        %v1203 = vperm.slane %v1155, 0
        %v1204 = vperm.slane %v1156, 0
        %v1205 = vperm.slane %v1157, 0
        %v1206 = vperm.slane %v1158, 0
        %v1207 = vperm.slane %v1159, 0
        %v1208 = vperm.slane %v1160, 0
        %v1209 = vperm.slane %v1161, 0
        %v1210 = vperm.slane %v1162, 0
        %v1211 = vperm.slane %v1163, 0
        %v1212 = vperm.slane %v1164, 0
        %v1213 = vperm.slane %v1165, 0
        %v1214 = vperm.slane %v1166, 0
        %v1215 = vperm.slane %v1167, 0
        %v1216 = vperm.slane %v1168, 0
        %v1217 = vperm.slane %v1169, 0
        %v1218 = vperm.slane %v1170, 0
        %1219 = vset.pattern.permute.xlu0 4
        %1220 = vperm.xlu0 %1219, %v387
        %v1221 = vpop.permute.xlu0 %1220
        %1223 = vset.pattern.permute.xlu0 4
        %1224 = vperm.xlu0 %1223, %v388
        %v1225 = vpop.permute.xlu0 %1224
        %1227 = vset.pattern.permute.xlu0 4
        %1228 = vperm.xlu0 %1227, %v389
        %v1229 = vpop.permute.xlu0 %1228
        %1231 = vset.pattern.permute.xlu0 4
        %1232 = vperm.xlu0 %1231, %v390
        %v1233 = vpop.permute.xlu0 %1232
        %v1235 = vmul.f32 %v1195, %v1221
        %v1236 = vmul.f32 %v1196, %v1221
        %v1237 = vmul.f32 %v1197, %v1221
        %v1238 = vmul.f32 %v1195, %v1225
        %v1239 = vmul.f32 %v1196, %v1225
        %v1240 = vmul.f32 %v1197, %v1225
        %v1241 = vmul.f32 %v1195, %v1229
        %v1242 = vmul.f32 %v1196, %v1229
        %v1243 = vmul.f32 %v1197, %v1229
        %v1244 = vmul.f32 %v1195, %v1233
        %v1245 = vmul.f32 %v1196, %v1233
        %v1246 = vmul.f32 %v1197, %v1233
        %v1247 = vmul.f32 %v1198, %v1221
        %v1248 = vmul.f32 %v1199, %v1221
        %v1249 = vmul.f32 %v1200, %v1221
        %v1250 = vmul.f32 %v1198, %v1225
        %v1251 = vmul.f32 %v1199, %v1225
        %v1252 = vmul.f32 %v1200, %v1225
        %v1253 = vmul.f32 %v1198, %v1229
        %v1254 = vmul.f32 %v1199, %v1229
        %v1255 = vmul.f32 %v1200, %v1229
        %v1256 = vmul.f32 %v1198, %v1233
        %v1257 = vmul.f32 %v1199, %v1233
        %v1258 = vmul.f32 %v1200, %v1233
        %v1259 = vmul.f32 %v1201, %v1221
        %v1260 = vmul.f32 %v1202, %v1221
        %v1261 = vmul.f32 %v1203, %v1221
        %v1262 = vmul.f32 %v1201, %v1225
        %v1263 = vmul.f32 %v1202, %v1225
        %v1264 = vmul.f32 %v1203, %v1225
        %v1265 = vmul.f32 %v1201, %v1229
        %v1266 = vmul.f32 %v1202, %v1229
        %v1267 = vmul.f32 %v1203, %v1229
        %v1268 = vmul.f32 %v1201, %v1233
        %v1269 = vmul.f32 %v1202, %v1233
        %v1270 = vmul.f32 %v1203, %v1233
        %v1271 = vmul.f32 %v1204, %v1221
        %v1272 = vmul.f32 %v1205, %v1221
        %v1273 = vmul.f32 %v1206, %v1221
        %v1274 = vmul.f32 %v1204, %v1225
        %v1275 = vmul.f32 %v1205, %v1225
        %v1276 = vmul.f32 %v1206, %v1225
        %v1277 = vmul.f32 %v1204, %v1229
        %v1278 = vmul.f32 %v1205, %v1229
        %v1279 = vmul.f32 %v1206, %v1229
        %v1280 = vmul.f32 %v1204, %v1233
        %v1281 = vmul.f32 %v1205, %v1233
        %v1282 = vmul.f32 %v1206, %v1233
        %v1283 = vmul.f32 %v1207, %v1221
        %v1284 = vmul.f32 %v1208, %v1221
        %v1285 = vmul.f32 %v1209, %v1221
        %v1286 = vmul.f32 %v1207, %v1225
        %v1287 = vmul.f32 %v1208, %v1225
        %v1288 = vmul.f32 %v1209, %v1225
        %v1289 = vmul.f32 %v1207, %v1229
        %v1290 = vmul.f32 %v1208, %v1229
        %v1291 = vmul.f32 %v1209, %v1229
        %v1292 = vmul.f32 %v1207, %v1233
        %v1293 = vmul.f32 %v1208, %v1233
        %v1294 = vmul.f32 %v1209, %v1233
        %v1295 = vmul.f32 %v1210, %v1221
        %v1296 = vmul.f32 %v1211, %v1221
        %v1297 = vmul.f32 %v1212, %v1221
        %v1298 = vmul.f32 %v1210, %v1225
        %v1299 = vmul.f32 %v1211, %v1225
        %v1300 = vmul.f32 %v1212, %v1225
        %v1301 = vmul.f32 %v1210, %v1229
        %v1302 = vmul.f32 %v1211, %v1229
        %v1303 = vmul.f32 %v1212, %v1229
        %v1304 = vmul.f32 %v1210, %v1233
        %v1305 = vmul.f32 %v1211, %v1233
        %v1306 = vmul.f32 %v1212, %v1233
        %v1307 = vmul.f32 %v1213, %v1221
        %v1308 = vmul.f32 %v1214, %v1221
        %v1309 = vmul.f32 %v1215, %v1221
        %v1310 = vmul.f32 %v1213, %v1225
        %v1311 = vmul.f32 %v1214, %v1225
        %v1312 = vmul.f32 %v1215, %v1225
        %v1313 = vmul.f32 %v1213, %v1229
        %v1314 = vmul.f32 %v1214, %v1229
        %v1315 = vmul.f32 %v1215, %v1229
        %v1316 = vmul.f32 %v1213, %v1233
        %v1317 = vmul.f32 %v1214, %v1233
        %v1318 = vmul.f32 %v1215, %v1233
        %v1319 = vmul.f32 %v1216, %v1221
        %v1320 = vmul.f32 %v1217, %v1221
        %v1321 = vmul.f32 %v1218, %v1221
        %v1322 = vmul.f32 %v1216, %v1225
        %v1323 = vmul.f32 %v1217, %v1225
        %v1324 = vmul.f32 %v1218, %v1225
        %v1325 = vmul.f32 %v1216, %v1229
        %v1326 = vmul.f32 %v1217, %v1229
        %v1327 = vmul.f32 %v1218, %v1229
        %v1328 = vmul.f32 %v1216, %v1233
        %v1329 = vmul.f32 %v1217, %v1233
        %v1330 = vmul.f32 %v1218, %v1233
        %1427 = vrot.lane.b32.xlu0 %v1235, 127
        %v1428 = vpop.permute.xlu0 %1427
        %1429 = vrot.lane.b32.xlu0 %v1236, 127
        %v1430 = vpop.permute.xlu0 %1429
        %1431 = vrot.lane.b32.xlu0 %v1237, 127
        %v1432 = vpop.permute.xlu0 %1431
        %1433 = vrot.lane.b32.xlu0 %v1238, 127
        %v1434 = vpop.permute.xlu0 %1433
        %1435 = vrot.lane.b32.xlu0 %v1239, 127
        %v1436 = vpop.permute.xlu0 %1435
        %1437 = vrot.lane.b32.xlu0 %v1240, 127
        %v1438 = vpop.permute.xlu0 %1437
        %1439 = vrot.lane.b32.xlu0 %v1241, 127
        %v1440 = vpop.permute.xlu0 %1439
        %1441 = vrot.lane.b32.xlu0 %v1242, 127
        %v1442 = vpop.permute.xlu0 %1441
        %1443 = vrot.lane.b32.xlu0 %v1243, 127
        %v1444 = vpop.permute.xlu0 %1443
        %1445 = vrot.lane.b32.xlu0 %v1244, 127
        %v1446 = vpop.permute.xlu0 %1445
        %1447 = vrot.lane.b32.xlu0 %v1245, 127
        %v1448 = vpop.permute.xlu0 %1447
        %1449 = vrot.lane.b32.xlu0 %v1246, 127
        %v1450 = vpop.permute.xlu0 %1449
        %1451 = vrot.lane.b32.xlu0 %v1247, 127
        %v1452 = vpop.permute.xlu0 %1451
        %1453 = vrot.lane.b32.xlu0 %v1248, 127
        %v1454 = vpop.permute.xlu0 %1453
        %1455 = vrot.lane.b32.xlu0 %v1249, 127
        %v1456 = vpop.permute.xlu0 %1455
        %1457 = vrot.lane.b32.xlu0 %v1250, 127
        %v1458 = vpop.permute.xlu0 %1457
        %1459 = vrot.lane.b32.xlu0 %v1251, 127
        %v1460 = vpop.permute.xlu0 %1459
        %1461 = vrot.lane.b32.xlu0 %v1252, 127
        %v1462 = vpop.permute.xlu0 %1461
        %1463 = vrot.lane.b32.xlu0 %v1253, 127
        %v1464 = vpop.permute.xlu0 %1463
        %1465 = vrot.lane.b32.xlu0 %v1254, 127
        %v1466 = vpop.permute.xlu0 %1465
        %1467 = vrot.lane.b32.xlu0 %v1255, 127
        %v1468 = vpop.permute.xlu0 %1467
        %1469 = vrot.lane.b32.xlu0 %v1256, 127
        %v1470 = vpop.permute.xlu0 %1469
        %1471 = vrot.lane.b32.xlu0 %v1257, 127
        %v1472 = vpop.permute.xlu0 %1471
        %1473 = vrot.lane.b32.xlu0 %v1258, 127
        %v1474 = vpop.permute.xlu0 %1473
        %1475 = vrot.lane.b32.xlu0 %v1259, 127
        %v1476 = vpop.permute.xlu0 %1475
        %1477 = vrot.lane.b32.xlu0 %v1260, 127
        %v1478 = vpop.permute.xlu0 %1477
        %1479 = vrot.lane.b32.xlu0 %v1261, 127
        %v1480 = vpop.permute.xlu0 %1479
        %1481 = vrot.lane.b32.xlu0 %v1262, 127
        %v1482 = vpop.permute.xlu0 %1481
        %1483 = vrot.lane.b32.xlu0 %v1263, 127
        %v1484 = vpop.permute.xlu0 %1483
        %1485 = vrot.lane.b32.xlu0 %v1264, 127
        %v1486 = vpop.permute.xlu0 %1485
        %1487 = vrot.lane.b32.xlu0 %v1265, 127
        %v1488 = vpop.permute.xlu0 %1487
        %1489 = vrot.lane.b32.xlu0 %v1266, 127
        %v1490 = vpop.permute.xlu0 %1489
        %1491 = vrot.lane.b32.xlu0 %v1267, 127
        %v1492 = vpop.permute.xlu0 %1491
        %1493 = vrot.lane.b32.xlu0 %v1268, 127
        %v1494 = vpop.permute.xlu0 %1493
        %1495 = vrot.lane.b32.xlu0 %v1269, 127
        %v1496 = vpop.permute.xlu0 %1495
        %1497 = vrot.lane.b32.xlu0 %v1270, 127
        %v1498 = vpop.permute.xlu0 %1497
        %1499 = vrot.lane.b32.xlu0 %v1271, 127
        %v1500 = vpop.permute.xlu0 %1499
        %1501 = vrot.lane.b32.xlu0 %v1272, 127
        %v1502 = vpop.permute.xlu0 %1501
        %1503 = vrot.lane.b32.xlu0 %v1273, 127
        %v1504 = vpop.permute.xlu0 %1503
        %1505 = vrot.lane.b32.xlu0 %v1274, 127
        %v1506 = vpop.permute.xlu0 %1505
        %1507 = vrot.lane.b32.xlu0 %v1275, 127
        %v1508 = vpop.permute.xlu0 %1507
        %1509 = vrot.lane.b32.xlu0 %v1276, 127
        %v1510 = vpop.permute.xlu0 %1509
        %1511 = vrot.lane.b32.xlu0 %v1277, 127
        %v1512 = vpop.permute.xlu0 %1511
        %1513 = vrot.lane.b32.xlu0 %v1278, 127
        %v1514 = vpop.permute.xlu0 %1513
        %1515 = vrot.lane.b32.xlu0 %v1279, 127
        %v1516 = vpop.permute.xlu0 %1515
        %1517 = vrot.lane.b32.xlu0 %v1280, 127
        %v1518 = vpop.permute.xlu0 %1517
        %1519 = vrot.lane.b32.xlu0 %v1281, 127
        %v1520 = vpop.permute.xlu0 %1519
        %1521 = vrot.lane.b32.xlu0 %v1282, 127
        %v1522 = vpop.permute.xlu0 %1521
        %1523 = vrot.lane.b32.xlu0 %v1283, 127
        %v1524 = vpop.permute.xlu0 %1523
        %1525 = vrot.lane.b32.xlu0 %v1284, 127
        %v1526 = vpop.permute.xlu0 %1525
        %1527 = vrot.lane.b32.xlu0 %v1285, 127
        %v1528 = vpop.permute.xlu0 %1527
        %1529 = vrot.lane.b32.xlu0 %v1286, 127
        %v1530 = vpop.permute.xlu0 %1529
        %1531 = vrot.lane.b32.xlu0 %v1287, 127
        %v1532 = vpop.permute.xlu0 %1531
        %1533 = vrot.lane.b32.xlu0 %v1288, 127
        %v1534 = vpop.permute.xlu0 %1533
        %1535 = vrot.lane.b32.xlu0 %v1289, 127
        %v1536 = vpop.permute.xlu0 %1535
        %1537 = vrot.lane.b32.xlu0 %v1290, 127
        %v1538 = vpop.permute.xlu0 %1537
        %1539 = vrot.lane.b32.xlu0 %v1291, 127
        %v1540 = vpop.permute.xlu0 %1539
        %1541 = vrot.lane.b32.xlu0 %v1292, 127
        %v1542 = vpop.permute.xlu0 %1541
        %1543 = vrot.lane.b32.xlu0 %v1293, 127
        %v1544 = vpop.permute.xlu0 %1543
        %1545 = vrot.lane.b32.xlu0 %v1294, 127
        %v1546 = vpop.permute.xlu0 %1545
        %1547 = vrot.lane.b32.xlu0 %v1295, 127
        %v1548 = vpop.permute.xlu0 %1547
        %1549 = vrot.lane.b32.xlu0 %v1296, 127
        %v1550 = vpop.permute.xlu0 %1549
        %1551 = vrot.lane.b32.xlu0 %v1297, 127
        %v1552 = vpop.permute.xlu0 %1551
        %1553 = vrot.lane.b32.xlu0 %v1298, 127
        %v1554 = vpop.permute.xlu0 %1553
        %1555 = vrot.lane.b32.xlu0 %v1299, 127
        %v1556 = vpop.permute.xlu0 %1555
        %1557 = vrot.lane.b32.xlu0 %v1300, 127
        %v1558 = vpop.permute.xlu0 %1557
        %1559 = vrot.lane.b32.xlu0 %v1301, 127
        %v1560 = vpop.permute.xlu0 %1559
        %1561 = vrot.lane.b32.xlu0 %v1302, 127
        %v1562 = vpop.permute.xlu0 %1561
        %1563 = vrot.lane.b32.xlu0 %v1303, 127
        %v1564 = vpop.permute.xlu0 %1563
        %1565 = vrot.lane.b32.xlu0 %v1304, 127
        %v1566 = vpop.permute.xlu0 %1565
        %1567 = vrot.lane.b32.xlu0 %v1305, 127
        %v1568 = vpop.permute.xlu0 %1567
        %1569 = vrot.lane.b32.xlu0 %v1306, 127
        %v1570 = vpop.permute.xlu0 %1569
        %1571 = vrot.lane.b32.xlu0 %v1307, 127
        %v1572 = vpop.permute.xlu0 %1571
        %1573 = vrot.lane.b32.xlu0 %v1308, 127
        %v1574 = vpop.permute.xlu0 %1573
        %1575 = vrot.lane.b32.xlu0 %v1309, 127
        %v1576 = vpop.permute.xlu0 %1575
        %1577 = vrot.lane.b32.xlu0 %v1310, 127
        %v1578 = vpop.permute.xlu0 %1577
        %1579 = vrot.lane.b32.xlu0 %v1311, 127
        %v1580 = vpop.permute.xlu0 %1579
        %1581 = vrot.lane.b32.xlu0 %v1312, 127
        %v1582 = vpop.permute.xlu0 %1581
        %1583 = vrot.lane.b32.xlu0 %v1313, 127
        %v1584 = vpop.permute.xlu0 %1583
        %1585 = vrot.lane.b32.xlu0 %v1314, 127
        %v1586 = vpop.permute.xlu0 %1585
        %1587 = vrot.lane.b32.xlu0 %v1315, 127
        %v1588 = vpop.permute.xlu0 %1587
        %1589 = vrot.lane.b32.xlu0 %v1316, 127
        %v1590 = vpop.permute.xlu0 %1589
        %1591 = vrot.lane.b32.xlu0 %v1317, 127
        %v1592 = vpop.permute.xlu0 %1591
        %1593 = vrot.lane.b32.xlu0 %v1318, 127
        %v1594 = vpop.permute.xlu0 %1593
        %1595 = vrot.lane.b32.xlu0 %v1319, 127
        %v1596 = vpop.permute.xlu0 %1595
        %1597 = vrot.lane.b32.xlu0 %v1320, 127
        %v1598 = vpop.permute.xlu0 %1597
        %1599 = vrot.lane.b32.xlu0 %v1321, 127
        %v1600 = vpop.permute.xlu0 %1599
        %1601 = vrot.lane.b32.xlu0 %v1322, 127
        %v1602 = vpop.permute.xlu0 %1601
        %1603 = vrot.lane.b32.xlu0 %v1323, 127
        %v1604 = vpop.permute.xlu0 %1603
        %1605 = vrot.lane.b32.xlu0 %v1324, 127
        %v1606 = vpop.permute.xlu0 %1605
        %1607 = vrot.lane.b32.xlu0 %v1325, 127
        %v1608 = vpop.permute.xlu0 %1607
        %1609 = vrot.lane.b32.xlu0 %v1326, 127
        %v1610 = vpop.permute.xlu0 %1609
        %1611 = vrot.lane.b32.xlu0 %v1327, 127
        %v1612 = vpop.permute.xlu0 %1611
        %1613 = vrot.lane.b32.xlu0 %v1328, 127
        %v1614 = vpop.permute.xlu0 %1613
        %1615 = vrot.lane.b32.xlu0 %v1329, 127
        %v1616 = vpop.permute.xlu0 %1615
        %1617 = vrot.lane.b32.xlu0 %v1330, 127
        %v1618 = vpop.permute.xlu0 %1617
        %vm1619 = vcmask 1039360
        %v1620 = vsel %vm1619, %v1428, %v1430
        %v1621 = vsel %vm1619, %v1430, %v1432
        %v1622 = vsel %vm1619, %v1434, %v1436
        %v1623 = vsel %vm1619, %v1436, %v1438
        %v1624 = vsel %vm1619, %v1440, %v1442
        %v1625 = vsel %vm1619, %v1442, %v1444
        %v1626 = vsel %vm1619, %v1446, %v1448
        %v1627 = vsel %vm1619, %v1448, %v1450
        %v1628 = vsel %vm1619, %v1452, %v1454
        %v1629 = vsel %vm1619, %v1454, %v1456
        %v1630 = vsel %vm1619, %v1458, %v1460
        %v1631 = vsel %vm1619, %v1460, %v1462
        %v1632 = vsel %vm1619, %v1464, %v1466
        %v1633 = vsel %vm1619, %v1466, %v1468
        %v1634 = vsel %vm1619, %v1470, %v1472
        %v1635 = vsel %vm1619, %v1472, %v1474
        %v1636 = vsel %vm1619, %v1476, %v1478
        %v1637 = vsel %vm1619, %v1478, %v1480
        %v1638 = vsel %vm1619, %v1482, %v1484
        %v1639 = vsel %vm1619, %v1484, %v1486
        %v1640 = vsel %vm1619, %v1488, %v1490
        %v1641 = vsel %vm1619, %v1490, %v1492
        %v1642 = vsel %vm1619, %v1494, %v1496
        %v1643 = vsel %vm1619, %v1496, %v1498
        %v1644 = vsel %vm1619, %v1500, %v1502
        %v1645 = vsel %vm1619, %v1502, %v1504
        %v1646 = vsel %vm1619, %v1506, %v1508
        %v1647 = vsel %vm1619, %v1508, %v1510
        %v1648 = vsel %vm1619, %v1512, %v1514
        %v1649 = vsel %vm1619, %v1514, %v1516
        %v1650 = vsel %vm1619, %v1518, %v1520
        %v1651 = vsel %vm1619, %v1520, %v1522
        %v1652 = vsel %vm1619, %v1524, %v1526
        %v1653 = vsel %vm1619, %v1526, %v1528
        %v1654 = vsel %vm1619, %v1530, %v1532
        %v1655 = vsel %vm1619, %v1532, %v1534
        %v1656 = vsel %vm1619, %v1536, %v1538
        %v1657 = vsel %vm1619, %v1538, %v1540
        %v1658 = vsel %vm1619, %v1542, %v1544
        %v1659 = vsel %vm1619, %v1544, %v1546
        %v1660 = vsel %vm1619, %v1548, %v1550
        %v1661 = vsel %vm1619, %v1550, %v1552
        %v1662 = vsel %vm1619, %v1554, %v1556
        %v1663 = vsel %vm1619, %v1556, %v1558
        %v1664 = vsel %vm1619, %v1560, %v1562
        %v1665 = vsel %vm1619, %v1562, %v1564
        %v1666 = vsel %vm1619, %v1566, %v1568
        %v1667 = vsel %vm1619, %v1568, %v1570
        %v1668 = vsel %vm1619, %v1572, %v1574
        %v1669 = vsel %vm1619, %v1574, %v1576
        %v1670 = vsel %vm1619, %v1578, %v1580
        %v1671 = vsel %vm1619, %v1580, %v1582
        %v1672 = vsel %vm1619, %v1584, %v1586
        %v1673 = vsel %vm1619, %v1586, %v1588
        %v1674 = vsel %vm1619, %v1590, %v1592
        %v1675 = vsel %vm1619, %v1592, %v1594
        %v1676 = vsel %vm1619, %v1596, %v1598
        %v1677 = vsel %vm1619, %v1598, %v1600
        %v1678 = vsel %vm1619, %v1602, %v1604
        %v1679 = vsel %vm1619, %v1604, %v1606
        %v1680 = vsel %vm1619, %v1608, %v1610
        %v1681 = vsel %vm1619, %v1610, %v1612
        %v1682 = vsel %vm1619, %v1614, %v1616
        %v1683 = vsel %vm1619, %v1616, %v1618
        %v1748 = vadd.f32 %v1051, %v1620
        %v1749 = vadd.f32 %v1052, %v1621
        %v1750 = vadd.f32 %v1053, %v1622
        %v1751 = vadd.f32 %v1054, %v1623
        %v1752 = vadd.f32 %v1055, %v1624
        %v1753 = vadd.f32 %v1056, %v1625
        %v1754 = vadd.f32 %v1057, %v1626
        %v1755 = vadd.f32 %v1058, %v1627
        %v1756 = vadd.f32 %v1059, %v1628
        %v1757 = vadd.f32 %v1060, %v1629
        %v1758 = vadd.f32 %v1061, %v1630
        %v1759 = vadd.f32 %v1062, %v1631
        %v1760 = vadd.f32 %v1063, %v1632
        %v1761 = vadd.f32 %v1064, %v1633
        %v1762 = vadd.f32 %v1065, %v1634
        %v1763 = vadd.f32 %v1066, %v1635
        %v1764 = vadd.f32 %v1067, %v1636
        %v1765 = vadd.f32 %v1068, %v1637
        %v1766 = vadd.f32 %v1069, %v1638
        %v1767 = vadd.f32 %v1070, %v1639
        %v1768 = vadd.f32 %v1071, %v1640
        %v1769 = vadd.f32 %v1072, %v1641
        %v1770 = vadd.f32 %v1073, %v1642
        %v1771 = vadd.f32 %v1074, %v1643
        %v1772 = vadd.f32 %v1075, %v1644
        %v1773 = vadd.f32 %v1076, %v1645
        %v1774 = vadd.f32 %v1077, %v1646
        %v1775 = vadd.f32 %v1078, %v1647
        %v1776 = vadd.f32 %v1079, %v1648
        %v1777 = vadd.f32 %v1080, %v1649
        %v1778 = vadd.f32 %v1081, %v1650
        %v1779 = vadd.f32 %v1082, %v1651
        %v1780 = vadd.f32 %v1083, %v1652
        %v1781 = vadd.f32 %v1084, %v1653
        %v1782 = vadd.f32 %v1085, %v1654
        %v1783 = vadd.f32 %v1086, %v1655
        %v1784 = vadd.f32 %v1087, %v1656
        %v1785 = vadd.f32 %v1088, %v1657
        %v1786 = vadd.f32 %v1089, %v1658
        %v1787 = vadd.f32 %v1090, %v1659
        %v1788 = vadd.f32 %v1091, %v1660
        %v1789 = vadd.f32 %v1092, %v1661
        %v1790 = vadd.f32 %v1093, %v1662
        %v1791 = vadd.f32 %v1094, %v1663
        %v1792 = vadd.f32 %v1095, %v1664
        %v1793 = vadd.f32 %v1096, %v1665
        %v1794 = vadd.f32 %v1097, %v1666
        %v1795 = vadd.f32 %v1098, %v1667
        %v1796 = vadd.f32 %v1099, %v1668
        %v1797 = vadd.f32 %v1100, %v1669
        %v1798 = vadd.f32 %v1101, %v1670
        %v1799 = vadd.f32 %v1102, %v1671
        %v1800 = vadd.f32 %v1103, %v1672
        %v1801 = vadd.f32 %v1104, %v1673
        %v1802 = vadd.f32 %v1105, %v1674
        %v1803 = vadd.f32 %v1106, %v1675
        %v1804 = vadd.f32 %v1107, %v1676
        %v1805 = vadd.f32 %v1108, %v1677
        %v1806 = vadd.f32 %v1109, %v1678
        %v1807 = vadd.f32 %v1110, %v1679
        %v1808 = vadd.f32 %v1111, %v1680
        %v1809 = vadd.f32 %v1112, %v1681
        %v1810 = vadd.f32 %v1113, %v1682
        %v1811 = vadd.f32 %v1114, %v1683
        %v1812 = vperm.slane %v1115, 1
        %v1813 = vperm.slane %v1115, 5
        %v1814 = vperm.slane %v1116, 1
        %v1815 = vperm.slane %v1117, 1
        %v1816 = vperm.slane %v1117, 5
        %v1817 = vperm.slane %v1118, 1
        %v1818 = vperm.slane %v1119, 1
        %v1819 = vperm.slane %v1119, 5
        %v1820 = vperm.slane %v1120, 1
        %v1821 = vperm.slane %v1121, 1
        %v1822 = vperm.slane %v1121, 5
        %v1823 = vperm.slane %v1122, 1
        %v1824 = vperm.slane %v1123, 1
        %v1825 = vperm.slane %v1123, 5
        %v1826 = vperm.slane %v1124, 1
        %v1827 = vperm.slane %v1125, 1
        %v1828 = vperm.slane %v1125, 5
        %v1829 = vperm.slane %v1126, 1
        %v1830 = vperm.slane %v1127, 1
        %v1831 = vperm.slane %v1127, 5
        %v1832 = vperm.slane %v1128, 1
        %v1833 = vperm.slane %v1129, 1
        %v1834 = vperm.slane %v1129, 5
        %v1835 = vperm.slane %v1130, 1
        %v1860 = vperm.slane %v1812, 1
        %v1861 = vperm.slane %v1813, 1
        %v1862 = vperm.slane %v1814, 1
        %v1863 = vperm.slane %v1815, 1
        %v1864 = vperm.slane %v1816, 1
        %v1865 = vperm.slane %v1817, 1
        %v1866 = vperm.slane %v1818, 1
        %v1867 = vperm.slane %v1819, 1
        %v1868 = vperm.slane %v1820, 1
        %v1869 = vperm.slane %v1821, 1
        %v1870 = vperm.slane %v1822, 1
        %v1871 = vperm.slane %v1823, 1
        %v1872 = vperm.slane %v1824, 1
        %v1873 = vperm.slane %v1825, 1
        %v1874 = vperm.slane %v1826, 1
        %v1875 = vperm.slane %v1827, 1
        %v1876 = vperm.slane %v1828, 1
        %v1877 = vperm.slane %v1829, 1
        %v1878 = vperm.slane %v1830, 1
        %v1879 = vperm.slane %v1831, 1
        %v1880 = vperm.slane %v1832, 1
        %v1881 = vperm.slane %v1833, 1
        %v1882 = vperm.slane %v1834, 1
        %v1883 = vperm.slane %v1835, 1
        %1884 = vset.pattern.permute.xlu0 5
        %1885 = vperm.xlu0 %1884, %v387
        %v1886 = vpop.permute.xlu0 %1885
        %1888 = vset.pattern.permute.xlu0 5
        %1889 = vperm.xlu0 %1888, %v388
        %v1890 = vpop.permute.xlu0 %1889
        %1892 = vset.pattern.permute.xlu0 5
        %1893 = vperm.xlu0 %1892, %v389
        %v1894 = vpop.permute.xlu0 %1893
        %1896 = vset.pattern.permute.xlu0 5
        %1897 = vperm.xlu0 %1896, %v390
        %v1898 = vpop.permute.xlu0 %1897
        %v1900 = vmul.f32 %v1860, %v1886
        %v1901 = vmul.f32 %v1861, %v1886
        %v1902 = vmul.f32 %v1862, %v1886
        %v1903 = vmul.f32 %v1860, %v1890
        %v1904 = vmul.f32 %v1861, %v1890
        %v1905 = vmul.f32 %v1862, %v1890
        %v1906 = vmul.f32 %v1860, %v1894
        %v1907 = vmul.f32 %v1861, %v1894
        %v1908 = vmul.f32 %v1862, %v1894
        %v1909 = vmul.f32 %v1860, %v1898
        %v1910 = vmul.f32 %v1861, %v1898
        %v1911 = vmul.f32 %v1862, %v1898
        %v1912 = vmul.f32 %v1863, %v1886
        %v1913 = vmul.f32 %v1864, %v1886
        %v1914 = vmul.f32 %v1865, %v1886
        %v1915 = vmul.f32 %v1863, %v1890
        %v1916 = vmul.f32 %v1864, %v1890
        %v1917 = vmul.f32 %v1865, %v1890
        %v1918 = vmul.f32 %v1863, %v1894
        %v1919 = vmul.f32 %v1864, %v1894
        %v1920 = vmul.f32 %v1865, %v1894
        %v1921 = vmul.f32 %v1863, %v1898
        %v1922 = vmul.f32 %v1864, %v1898
        %v1923 = vmul.f32 %v1865, %v1898
        %v1924 = vmul.f32 %v1866, %v1886
        %v1925 = vmul.f32 %v1867, %v1886
        %v1926 = vmul.f32 %v1868, %v1886
        %v1927 = vmul.f32 %v1866, %v1890
        %v1928 = vmul.f32 %v1867, %v1890
        %v1929 = vmul.f32 %v1868, %v1890
        %v1930 = vmul.f32 %v1866, %v1894
        %v1931 = vmul.f32 %v1867, %v1894
        %v1932 = vmul.f32 %v1868, %v1894
        %v1933 = vmul.f32 %v1866, %v1898
        %v1934 = vmul.f32 %v1867, %v1898
        %v1935 = vmul.f32 %v1868, %v1898
        %v1936 = vmul.f32 %v1869, %v1886
        %v1937 = vmul.f32 %v1870, %v1886
        %v1938 = vmul.f32 %v1871, %v1886
        %v1939 = vmul.f32 %v1869, %v1890
        %v1940 = vmul.f32 %v1870, %v1890
        %v1941 = vmul.f32 %v1871, %v1890
        %v1942 = vmul.f32 %v1869, %v1894
        %v1943 = vmul.f32 %v1870, %v1894
        %v1944 = vmul.f32 %v1871, %v1894
        %v1945 = vmul.f32 %v1869, %v1898
        %v1946 = vmul.f32 %v1870, %v1898
        %v1947 = vmul.f32 %v1871, %v1898
        %v1948 = vmul.f32 %v1872, %v1886
        %v1949 = vmul.f32 %v1873, %v1886
        %v1950 = vmul.f32 %v1874, %v1886
        %v1951 = vmul.f32 %v1872, %v1890
        %v1952 = vmul.f32 %v1873, %v1890
        %v1953 = vmul.f32 %v1874, %v1890
        %v1954 = vmul.f32 %v1872, %v1894
        %v1955 = vmul.f32 %v1873, %v1894
        %v1956 = vmul.f32 %v1874, %v1894
        %v1957 = vmul.f32 %v1872, %v1898
        %v1958 = vmul.f32 %v1873, %v1898
        %v1959 = vmul.f32 %v1874, %v1898
        %v1960 = vmul.f32 %v1875, %v1886
        %v1961 = vmul.f32 %v1876, %v1886
        %v1962 = vmul.f32 %v1877, %v1886
        %v1963 = vmul.f32 %v1875, %v1890
        %v1964 = vmul.f32 %v1876, %v1890
        %v1965 = vmul.f32 %v1877, %v1890
        %v1966 = vmul.f32 %v1875, %v1894
        %v1967 = vmul.f32 %v1876, %v1894
        %v1968 = vmul.f32 %v1877, %v1894
        %v1969 = vmul.f32 %v1875, %v1898
        %v1970 = vmul.f32 %v1876, %v1898
        %v1971 = vmul.f32 %v1877, %v1898
        %v1972 = vmul.f32 %v1878, %v1886
        %v1973 = vmul.f32 %v1879, %v1886
        %v1974 = vmul.f32 %v1880, %v1886
        %v1975 = vmul.f32 %v1878, %v1890
        %v1976 = vmul.f32 %v1879, %v1890
        %v1977 = vmul.f32 %v1880, %v1890
        %v1978 = vmul.f32 %v1878, %v1894
        %v1979 = vmul.f32 %v1879, %v1894
        %v1980 = vmul.f32 %v1880, %v1894
        %v1981 = vmul.f32 %v1878, %v1898
        %v1982 = vmul.f32 %v1879, %v1898
        %v1983 = vmul.f32 %v1880, %v1898
        %v1984 = vmul.f32 %v1881, %v1886
        %v1985 = vmul.f32 %v1882, %v1886
        %v1986 = vmul.f32 %v1883, %v1886
        %v1987 = vmul.f32 %v1881, %v1890
        %v1988 = vmul.f32 %v1882, %v1890
        %v1989 = vmul.f32 %v1883, %v1890
        %v1990 = vmul.f32 %v1881, %v1894
        %v1991 = vmul.f32 %v1882, %v1894
        %v1992 = vmul.f32 %v1883, %v1894
        %v1993 = vmul.f32 %v1881, %v1898
        %v1994 = vmul.f32 %v1882, %v1898
        %v1995 = vmul.f32 %v1883, %v1898
        %2092 = vrot.lane.b32.xlu0 %v1900, 127
        %v2093 = vpop.permute.xlu0 %2092
        %2094 = vrot.lane.b32.xlu0 %v1901, 127
        %v2095 = vpop.permute.xlu0 %2094
        %2096 = vrot.lane.b32.xlu0 %v1902, 127
        %v2097 = vpop.permute.xlu0 %2096
        %2098 = vrot.lane.b32.xlu0 %v1903, 127
        %v2099 = vpop.permute.xlu0 %2098
        %2100 = vrot.lane.b32.xlu0 %v1904, 127
        %v2101 = vpop.permute.xlu0 %2100
        %2102 = vrot.lane.b32.xlu0 %v1905, 127
        %v2103 = vpop.permute.xlu0 %2102
        %2104 = vrot.lane.b32.xlu0 %v1906, 127
        %v2105 = vpop.permute.xlu0 %2104
        %2106 = vrot.lane.b32.xlu0 %v1907, 127
        %v2107 = vpop.permute.xlu0 %2106
        %2108 = vrot.lane.b32.xlu0 %v1908, 127
        %v2109 = vpop.permute.xlu0 %2108
        %2110 = vrot.lane.b32.xlu0 %v1909, 127
        %v2111 = vpop.permute.xlu0 %2110
        %2112 = vrot.lane.b32.xlu0 %v1910, 127
        %v2113 = vpop.permute.xlu0 %2112
        %2114 = vrot.lane.b32.xlu0 %v1911, 127
        %v2115 = vpop.permute.xlu0 %2114
        %2116 = vrot.lane.b32.xlu0 %v1912, 127
        %v2117 = vpop.permute.xlu0 %2116
        %2118 = vrot.lane.b32.xlu0 %v1913, 127
        %v2119 = vpop.permute.xlu0 %2118
        %2120 = vrot.lane.b32.xlu0 %v1914, 127
        %v2121 = vpop.permute.xlu0 %2120
        %2122 = vrot.lane.b32.xlu0 %v1915, 127
        %v2123 = vpop.permute.xlu0 %2122
        %2124 = vrot.lane.b32.xlu0 %v1916, 127
        %v2125 = vpop.permute.xlu0 %2124
        %2126 = vrot.lane.b32.xlu0 %v1917, 127
        %v2127 = vpop.permute.xlu0 %2126
        %2128 = vrot.lane.b32.xlu0 %v1918, 127
        %v2129 = vpop.permute.xlu0 %2128
        %2130 = vrot.lane.b32.xlu0 %v1919, 127
        %v2131 = vpop.permute.xlu0 %2130
        %2132 = vrot.lane.b32.xlu0 %v1920, 127
        %v2133 = vpop.permute.xlu0 %2132
        %2134 = vrot.lane.b32.xlu0 %v1921, 127
        %v2135 = vpop.permute.xlu0 %2134
        %2136 = vrot.lane.b32.xlu0 %v1922, 127
        %v2137 = vpop.permute.xlu0 %2136
        %2138 = vrot.lane.b32.xlu0 %v1923, 127
        %v2139 = vpop.permute.xlu0 %2138
        %2140 = vrot.lane.b32.xlu0 %v1924, 127
        %v2141 = vpop.permute.xlu0 %2140
        %2142 = vrot.lane.b32.xlu0 %v1925, 127
        %v2143 = vpop.permute.xlu0 %2142
        %2144 = vrot.lane.b32.xlu0 %v1926, 127
        %v2145 = vpop.permute.xlu0 %2144
        %2146 = vrot.lane.b32.xlu0 %v1927, 127
        %v2147 = vpop.permute.xlu0 %2146
        %2148 = vrot.lane.b32.xlu0 %v1928, 127
        %v2149 = vpop.permute.xlu0 %2148
        %2150 = vrot.lane.b32.xlu0 %v1929, 127
        %v2151 = vpop.permute.xlu0 %2150
        %2152 = vrot.lane.b32.xlu0 %v1930, 127
        %v2153 = vpop.permute.xlu0 %2152
        %2154 = vrot.lane.b32.xlu0 %v1931, 127
        %v2155 = vpop.permute.xlu0 %2154
        %2156 = vrot.lane.b32.xlu0 %v1932, 127
        %v2157 = vpop.permute.xlu0 %2156
        %2158 = vrot.lane.b32.xlu0 %v1933, 127
        %v2159 = vpop.permute.xlu0 %2158
        %2160 = vrot.lane.b32.xlu0 %v1934, 127
        %v2161 = vpop.permute.xlu0 %2160
        %2162 = vrot.lane.b32.xlu0 %v1935, 127
        %v2163 = vpop.permute.xlu0 %2162
        %2164 = vrot.lane.b32.xlu0 %v1936, 127
        %v2165 = vpop.permute.xlu0 %2164
        %2166 = vrot.lane.b32.xlu0 %v1937, 127
        %v2167 = vpop.permute.xlu0 %2166
        %2168 = vrot.lane.b32.xlu0 %v1938, 127
        %v2169 = vpop.permute.xlu0 %2168
        %2170 = vrot.lane.b32.xlu0 %v1939, 127
        %v2171 = vpop.permute.xlu0 %2170
        %2172 = vrot.lane.b32.xlu0 %v1940, 127
        %v2173 = vpop.permute.xlu0 %2172
        %2174 = vrot.lane.b32.xlu0 %v1941, 127
        %v2175 = vpop.permute.xlu0 %2174
        %2176 = vrot.lane.b32.xlu0 %v1942, 127
        %v2177 = vpop.permute.xlu0 %2176
        %2178 = vrot.lane.b32.xlu0 %v1943, 127
        %v2179 = vpop.permute.xlu0 %2178
        %2180 = vrot.lane.b32.xlu0 %v1944, 127
        %v2181 = vpop.permute.xlu0 %2180
        %2182 = vrot.lane.b32.xlu0 %v1945, 127
        %v2183 = vpop.permute.xlu0 %2182
        %2184 = vrot.lane.b32.xlu0 %v1946, 127
        %v2185 = vpop.permute.xlu0 %2184
        %2186 = vrot.lane.b32.xlu0 %v1947, 127
        %v2187 = vpop.permute.xlu0 %2186
        %2188 = vrot.lane.b32.xlu0 %v1948, 127
        %v2189 = vpop.permute.xlu0 %2188
        %2190 = vrot.lane.b32.xlu0 %v1949, 127
        %v2191 = vpop.permute.xlu0 %2190
        %2192 = vrot.lane.b32.xlu0 %v1950, 127
        %v2193 = vpop.permute.xlu0 %2192
        %2194 = vrot.lane.b32.xlu0 %v1951, 127
        %v2195 = vpop.permute.xlu0 %2194
        %2196 = vrot.lane.b32.xlu0 %v1952, 127
        %v2197 = vpop.permute.xlu0 %2196
        %2198 = vrot.lane.b32.xlu0 %v1953, 127
        %v2199 = vpop.permute.xlu0 %2198
        %2200 = vrot.lane.b32.xlu0 %v1954, 127
        %v2201 = vpop.permute.xlu0 %2200
        %2202 = vrot.lane.b32.xlu0 %v1955, 127
        %v2203 = vpop.permute.xlu0 %2202
        %2204 = vrot.lane.b32.xlu0 %v1956, 127
        %v2205 = vpop.permute.xlu0 %2204
        %2206 = vrot.lane.b32.xlu0 %v1957, 127
        %v2207 = vpop.permute.xlu0 %2206
        %2208 = vrot.lane.b32.xlu0 %v1958, 127
        %v2209 = vpop.permute.xlu0 %2208
        %2210 = vrot.lane.b32.xlu0 %v1959, 127
        %v2211 = vpop.permute.xlu0 %2210
        %2212 = vrot.lane.b32.xlu0 %v1960, 127
        %v2213 = vpop.permute.xlu0 %2212
        %2214 = vrot.lane.b32.xlu0 %v1961, 127
        %v2215 = vpop.permute.xlu0 %2214
        %2216 = vrot.lane.b32.xlu0 %v1962, 127
        %v2217 = vpop.permute.xlu0 %2216
        %2218 = vrot.lane.b32.xlu0 %v1963, 127
        %v2219 = vpop.permute.xlu0 %2218
        %2220 = vrot.lane.b32.xlu0 %v1964, 127
        %v2221 = vpop.permute.xlu0 %2220
        %2222 = vrot.lane.b32.xlu0 %v1965, 127
        %v2223 = vpop.permute.xlu0 %2222
        %2224 = vrot.lane.b32.xlu0 %v1966, 127
        %v2225 = vpop.permute.xlu0 %2224
        %2226 = vrot.lane.b32.xlu0 %v1967, 127
        %v2227 = vpop.permute.xlu0 %2226
        %2228 = vrot.lane.b32.xlu0 %v1968, 127
        %v2229 = vpop.permute.xlu0 %2228
        %2230 = vrot.lane.b32.xlu0 %v1969, 127
        %v2231 = vpop.permute.xlu0 %2230
        %2232 = vrot.lane.b32.xlu0 %v1970, 127
        %v2233 = vpop.permute.xlu0 %2232
        %2234 = vrot.lane.b32.xlu0 %v1971, 127
        %v2235 = vpop.permute.xlu0 %2234
        %2236 = vrot.lane.b32.xlu0 %v1972, 127
        %v2237 = vpop.permute.xlu0 %2236
        %2238 = vrot.lane.b32.xlu0 %v1973, 127
        %v2239 = vpop.permute.xlu0 %2238
        %2240 = vrot.lane.b32.xlu0 %v1974, 127
        %v2241 = vpop.permute.xlu0 %2240
        %2242 = vrot.lane.b32.xlu0 %v1975, 127
        %v2243 = vpop.permute.xlu0 %2242
        %2244 = vrot.lane.b32.xlu0 %v1976, 127
        %v2245 = vpop.permute.xlu0 %2244
        %2246 = vrot.lane.b32.xlu0 %v1977, 127
        %v2247 = vpop.permute.xlu0 %2246
        %2248 = vrot.lane.b32.xlu0 %v1978, 127
        %v2249 = vpop.permute.xlu0 %2248
        %2250 = vrot.lane.b32.xlu0 %v1979, 127
        %v2251 = vpop.permute.xlu0 %2250
        %2252 = vrot.lane.b32.xlu0 %v1980, 127
        %v2253 = vpop.permute.xlu0 %2252
        %2254 = vrot.lane.b32.xlu0 %v1981, 127
        %v2255 = vpop.permute.xlu0 %2254
        %2256 = vrot.lane.b32.xlu0 %v1982, 127
        %v2257 = vpop.permute.xlu0 %2256
        %2258 = vrot.lane.b32.xlu0 %v1983, 127
        %v2259 = vpop.permute.xlu0 %2258
        %2260 = vrot.lane.b32.xlu0 %v1984, 127
        %v2261 = vpop.permute.xlu0 %2260
        %2262 = vrot.lane.b32.xlu0 %v1985, 127
        %v2263 = vpop.permute.xlu0 %2262
        %2264 = vrot.lane.b32.xlu0 %v1986, 127
        %v2265 = vpop.permute.xlu0 %2264
        %2266 = vrot.lane.b32.xlu0 %v1987, 127
        %v2267 = vpop.permute.xlu0 %2266
        %2268 = vrot.lane.b32.xlu0 %v1988, 127
        %v2269 = vpop.permute.xlu0 %2268
        %2270 = vrot.lane.b32.xlu0 %v1989, 127
        %v2271 = vpop.permute.xlu0 %2270
        %2272 = vrot.lane.b32.xlu0 %v1990, 127
        %v2273 = vpop.permute.xlu0 %2272
        %2274 = vrot.lane.b32.xlu0 %v1991, 127
        %v2275 = vpop.permute.xlu0 %2274
        %2276 = vrot.lane.b32.xlu0 %v1992, 127
        %v2277 = vpop.permute.xlu0 %2276
        %2278 = vrot.lane.b32.xlu0 %v1993, 127
        %v2279 = vpop.permute.xlu0 %2278
        %2280 = vrot.lane.b32.xlu0 %v1994, 127
        %v2281 = vpop.permute.xlu0 %2280
        %2282 = vrot.lane.b32.xlu0 %v1995, 127
        %v2283 = vpop.permute.xlu0 %2282
        %v2284 = vsel %vm1619, %v2093, %v2095
        %v2285 = vsel %vm1619, %v2095, %v2097
        %v2286 = vsel %vm1619, %v2099, %v2101
        %v2287 = vsel %vm1619, %v2101, %v2103
        %v2288 = vsel %vm1619, %v2105, %v2107
        %v2289 = vsel %vm1619, %v2107, %v2109
        %v2290 = vsel %vm1619, %v2111, %v2113
        %v2291 = vsel %vm1619, %v2113, %v2115
        %v2292 = vsel %vm1619, %v2117, %v2119
        %v2293 = vsel %vm1619, %v2119, %v2121
        %v2294 = vsel %vm1619, %v2123, %v2125
        %v2295 = vsel %vm1619, %v2125, %v2127
        %v2296 = vsel %vm1619, %v2129, %v2131
        %v2297 = vsel %vm1619, %v2131, %v2133
        %v2298 = vsel %vm1619, %v2135, %v2137
        %v2299 = vsel %vm1619, %v2137, %v2139
        %v2300 = vsel %vm1619, %v2141, %v2143
        %v2301 = vsel %vm1619, %v2143, %v2145
        %v2302 = vsel %vm1619, %v2147, %v2149
        %v2303 = vsel %vm1619, %v2149, %v2151
        %v2304 = vsel %vm1619, %v2153, %v2155
        %v2305 = vsel %vm1619, %v2155, %v2157
        %v2306 = vsel %vm1619, %v2159, %v2161
        %v2307 = vsel %vm1619, %v2161, %v2163
        %v2308 = vsel %vm1619, %v2165, %v2167
        %v2309 = vsel %vm1619, %v2167, %v2169
        %v2310 = vsel %vm1619, %v2171, %v2173
        %v2311 = vsel %vm1619, %v2173, %v2175
        %v2312 = vsel %vm1619, %v2177, %v2179
        %v2313 = vsel %vm1619, %v2179, %v2181
        %v2314 = vsel %vm1619, %v2183, %v2185
        %v2315 = vsel %vm1619, %v2185, %v2187
        %v2316 = vsel %vm1619, %v2189, %v2191
        %v2317 = vsel %vm1619, %v2191, %v2193
        %v2318 = vsel %vm1619, %v2195, %v2197
        %v2319 = vsel %vm1619, %v2197, %v2199
        %v2320 = vsel %vm1619, %v2201, %v2203
        %v2321 = vsel %vm1619, %v2203, %v2205
        %v2322 = vsel %vm1619, %v2207, %v2209
        %v2323 = vsel %vm1619, %v2209, %v2211
        %v2324 = vsel %vm1619, %v2213, %v2215
        %v2325 = vsel %vm1619, %v2215, %v2217
        %v2326 = vsel %vm1619, %v2219, %v2221
        %v2327 = vsel %vm1619, %v2221, %v2223
        %v2328 = vsel %vm1619, %v2225, %v2227
        %v2329 = vsel %vm1619, %v2227, %v2229
        %v2330 = vsel %vm1619, %v2231, %v2233
        %v2331 = vsel %vm1619, %v2233, %v2235
        %v2332 = vsel %vm1619, %v2237, %v2239
        %v2333 = vsel %vm1619, %v2239, %v2241
        %v2334 = vsel %vm1619, %v2243, %v2245
        %v2335 = vsel %vm1619, %v2245, %v2247
        %v2336 = vsel %vm1619, %v2249, %v2251
        %v2337 = vsel %vm1619, %v2251, %v2253
        %v2338 = vsel %vm1619, %v2255, %v2257
        %v2339 = vsel %vm1619, %v2257, %v2259
        %v2340 = vsel %vm1619, %v2261, %v2263
        %v2341 = vsel %vm1619, %v2263, %v2265
        %v2342 = vsel %vm1619, %v2267, %v2269
        %v2343 = vsel %vm1619, %v2269, %v2271
        %v2344 = vsel %vm1619, %v2273, %v2275
        %v2345 = vsel %vm1619, %v2275, %v2277
        %v2346 = vsel %vm1619, %v2279, %v2281
        %v2347 = vsel %vm1619, %v2281, %v2283
        %v2412 = vadd.f32 %v1748, %v2284
        %v2413 = vadd.f32 %v1749, %v2285
        %v2414 = vadd.f32 %v1750, %v2286
        %v2415 = vadd.f32 %v1751, %v2287
        %v2416 = vadd.f32 %v1752, %v2288
        %v2417 = vadd.f32 %v1753, %v2289
        %v2418 = vadd.f32 %v1754, %v2290
        %v2419 = vadd.f32 %v1755, %v2291
        %v2420 = vadd.f32 %v1756, %v2292
        %v2421 = vadd.f32 %v1757, %v2293
        %v2422 = vadd.f32 %v1758, %v2294
        %v2423 = vadd.f32 %v1759, %v2295
        %v2424 = vadd.f32 %v1760, %v2296
        %v2425 = vadd.f32 %v1761, %v2297
        %v2426 = vadd.f32 %v1762, %v2298
        %v2427 = vadd.f32 %v1763, %v2299
        %v2428 = vadd.f32 %v1764, %v2300
        %v2429 = vadd.f32 %v1765, %v2301
        %v2430 = vadd.f32 %v1766, %v2302
        %v2431 = vadd.f32 %v1767, %v2303
        %v2432 = vadd.f32 %v1768, %v2304
        %v2433 = vadd.f32 %v1769, %v2305
        %v2434 = vadd.f32 %v1770, %v2306
        %v2435 = vadd.f32 %v1771, %v2307
        %v2436 = vadd.f32 %v1772, %v2308
        %v2437 = vadd.f32 %v1773, %v2309
        %v2438 = vadd.f32 %v1774, %v2310
        %v2439 = vadd.f32 %v1775, %v2311
        %v2440 = vadd.f32 %v1776, %v2312
        %v2441 = vadd.f32 %v1777, %v2313
        %v2442 = vadd.f32 %v1778, %v2314
        %v2443 = vadd.f32 %v1779, %v2315
        %v2444 = vadd.f32 %v1780, %v2316
        %v2445 = vadd.f32 %v1781, %v2317
        %v2446 = vadd.f32 %v1782, %v2318
        %v2447 = vadd.f32 %v1783, %v2319
        %v2448 = vadd.f32 %v1784, %v2320
        %v2449 = vadd.f32 %v1785, %v2321
        %v2450 = vadd.f32 %v1786, %v2322
        %v2451 = vadd.f32 %v1787, %v2323
        %v2452 = vadd.f32 %v1788, %v2324
        %v2453 = vadd.f32 %v1789, %v2325
        %v2454 = vadd.f32 %v1790, %v2326
        %v2455 = vadd.f32 %v1791, %v2327
        %v2456 = vadd.f32 %v1792, %v2328
        %v2457 = vadd.f32 %v1793, %v2329
        %v2458 = vadd.f32 %v1794, %v2330
        %v2459 = vadd.f32 %v1795, %v2331
        %v2460 = vadd.f32 %v1796, %v2332
        %v2461 = vadd.f32 %v1797, %v2333
        %v2462 = vadd.f32 %v1798, %v2334
        %v2463 = vadd.f32 %v1799, %v2335
        %v2464 = vadd.f32 %v1800, %v2336
        %v2465 = vadd.f32 %v1801, %v2337
        %v2466 = vadd.f32 %v1802, %v2338
        %v2467 = vadd.f32 %v1803, %v2339
        %v2468 = vadd.f32 %v1804, %v2340
        %v2469 = vadd.f32 %v1805, %v2341
        %v2470 = vadd.f32 %v1806, %v2342
        %v2471 = vadd.f32 %v1807, %v2343
        %v2472 = vadd.f32 %v1808, %v2344
        %v2473 = vadd.f32 %v1809, %v2345
        %v2474 = vadd.f32 %v1810, %v2346
        %v2475 = vadd.f32 %v1811, %v2347
        %v2476 = vperm.slane %v1115, 2
        %v2477 = vperm.slane %v1115, 6
        %v2478 = vperm.slane %v1116, 2
        %v2479 = vperm.slane %v1117, 2
        %v2480 = vperm.slane %v1117, 6
        %v2481 = vperm.slane %v1118, 2
        %v2482 = vperm.slane %v1119, 2
        %v2483 = vperm.slane %v1119, 6
        %v2484 = vperm.slane %v1120, 2
        %v2485 = vperm.slane %v1121, 2
        %v2486 = vperm.slane %v1121, 6
        %v2487 = vperm.slane %v1122, 2
        %v2488 = vperm.slane %v1123, 2
        %v2489 = vperm.slane %v1123, 6
        %v2490 = vperm.slane %v1124, 2
        %v2491 = vperm.slane %v1125, 2
        %v2492 = vperm.slane %v1125, 6
        %v2493 = vperm.slane %v1126, 2
        %v2494 = vperm.slane %v1127, 2
        %v2495 = vperm.slane %v1127, 6
        %v2496 = vperm.slane %v1128, 2
        %v2497 = vperm.slane %v1129, 2
        %v2498 = vperm.slane %v1129, 6
        %v2499 = vperm.slane %v1130, 2
        %v2524 = vperm.slane %v2476, 2
        %v2525 = vperm.slane %v2477, 2
        %v2526 = vperm.slane %v2478, 2
        %v2527 = vperm.slane %v2479, 2
        %v2528 = vperm.slane %v2480, 2
        %v2529 = vperm.slane %v2481, 2
        %v2530 = vperm.slane %v2482, 2
        %v2531 = vperm.slane %v2483, 2
        %v2532 = vperm.slane %v2484, 2
        %v2533 = vperm.slane %v2485, 2
        %v2534 = vperm.slane %v2486, 2
        %v2535 = vperm.slane %v2487, 2
        %v2536 = vperm.slane %v2488, 2
        %v2537 = vperm.slane %v2489, 2
        %v2538 = vperm.slane %v2490, 2
        %v2539 = vperm.slane %v2491, 2
        %v2540 = vperm.slane %v2492, 2
        %v2541 = vperm.slane %v2493, 2
        %v2542 = vperm.slane %v2494, 2
        %v2543 = vperm.slane %v2495, 2
        %v2544 = vperm.slane %v2496, 2
        %v2545 = vperm.slane %v2497, 2
        %v2546 = vperm.slane %v2498, 2
        %v2547 = vperm.slane %v2499, 2
        %2548 = vset.pattern.permute.xlu0 6
        %2549 = vperm.xlu0 %2548, %v387
        %v2550 = vpop.permute.xlu0 %2549
        %2552 = vset.pattern.permute.xlu0 6
        %2553 = vperm.xlu0 %2552, %v388
        %v2554 = vpop.permute.xlu0 %2553
        %2556 = vset.pattern.permute.xlu0 6
        %2557 = vperm.xlu0 %2556, %v389
        %v2558 = vpop.permute.xlu0 %2557
        %2560 = vset.pattern.permute.xlu0 6
        %2561 = vperm.xlu0 %2560, %v390
        %v2562 = vpop.permute.xlu0 %2561
        %v2564 = vmul.f32 %v2524, %v2550
        %v2565 = vmul.f32 %v2525, %v2550
        %v2566 = vmul.f32 %v2526, %v2550
        %v2567 = vmul.f32 %v2524, %v2554
        %v2568 = vmul.f32 %v2525, %v2554
        %v2569 = vmul.f32 %v2526, %v2554
        %v2570 = vmul.f32 %v2524, %v2558
        %v2571 = vmul.f32 %v2525, %v2558
        %v2572 = vmul.f32 %v2526, %v2558
        %v2573 = vmul.f32 %v2524, %v2562
        %v2574 = vmul.f32 %v2525, %v2562
        %v2575 = vmul.f32 %v2526, %v2562
        %v2576 = vmul.f32 %v2527, %v2550
        %v2577 = vmul.f32 %v2528, %v2550
        %v2578 = vmul.f32 %v2529, %v2550
        %v2579 = vmul.f32 %v2527, %v2554
        %v2580 = vmul.f32 %v2528, %v2554
        %v2581 = vmul.f32 %v2529, %v2554
        %v2582 = vmul.f32 %v2527, %v2558
        %v2583 = vmul.f32 %v2528, %v2558
        %v2584 = vmul.f32 %v2529, %v2558
        %v2585 = vmul.f32 %v2527, %v2562
        %v2586 = vmul.f32 %v2528, %v2562
        %v2587 = vmul.f32 %v2529, %v2562
        %v2588 = vmul.f32 %v2530, %v2550
        %v2589 = vmul.f32 %v2531, %v2550
        %v2590 = vmul.f32 %v2532, %v2550
        %v2591 = vmul.f32 %v2530, %v2554
        %v2592 = vmul.f32 %v2531, %v2554
        %v2593 = vmul.f32 %v2532, %v2554
        %v2594 = vmul.f32 %v2530, %v2558
        %v2595 = vmul.f32 %v2531, %v2558
        %v2596 = vmul.f32 %v2532, %v2558
        %v2597 = vmul.f32 %v2530, %v2562
        %v2598 = vmul.f32 %v2531, %v2562
        %v2599 = vmul.f32 %v2532, %v2562
        %v2600 = vmul.f32 %v2533, %v2550
        %v2601 = vmul.f32 %v2534, %v2550
        %v2602 = vmul.f32 %v2535, %v2550
        %v2603 = vmul.f32 %v2533, %v2554
        %v2604 = vmul.f32 %v2534, %v2554
        %v2605 = vmul.f32 %v2535, %v2554
        %v2606 = vmul.f32 %v2533, %v2558
        %v2607 = vmul.f32 %v2534, %v2558
        %v2608 = vmul.f32 %v2535, %v2558
        %v2609 = vmul.f32 %v2533, %v2562
        %v2610 = vmul.f32 %v2534, %v2562
        %v2611 = vmul.f32 %v2535, %v2562
        %v2612 = vmul.f32 %v2536, %v2550
        %v2613 = vmul.f32 %v2537, %v2550
        %v2614 = vmul.f32 %v2538, %v2550
        %v2615 = vmul.f32 %v2536, %v2554
        %v2616 = vmul.f32 %v2537, %v2554
        %v2617 = vmul.f32 %v2538, %v2554
        %v2618 = vmul.f32 %v2536, %v2558
        %v2619 = vmul.f32 %v2537, %v2558
        %v2620 = vmul.f32 %v2538, %v2558
        %v2621 = vmul.f32 %v2536, %v2562
        %v2622 = vmul.f32 %v2537, %v2562
        %v2623 = vmul.f32 %v2538, %v2562
        %v2624 = vmul.f32 %v2539, %v2550
        %v2625 = vmul.f32 %v2540, %v2550
        %v2626 = vmul.f32 %v2541, %v2550
        %v2627 = vmul.f32 %v2539, %v2554
        %v2628 = vmul.f32 %v2540, %v2554
        %v2629 = vmul.f32 %v2541, %v2554
        %v2630 = vmul.f32 %v2539, %v2558
        %v2631 = vmul.f32 %v2540, %v2558
        %v2632 = vmul.f32 %v2541, %v2558
        %v2633 = vmul.f32 %v2539, %v2562
        %v2634 = vmul.f32 %v2540, %v2562
        %v2635 = vmul.f32 %v2541, %v2562
        %v2636 = vmul.f32 %v2542, %v2550
        %v2637 = vmul.f32 %v2543, %v2550
        %v2638 = vmul.f32 %v2544, %v2550
        %v2639 = vmul.f32 %v2542, %v2554
        %v2640 = vmul.f32 %v2543, %v2554
        %v2641 = vmul.f32 %v2544, %v2554
        %v2642 = vmul.f32 %v2542, %v2558
        %v2643 = vmul.f32 %v2543, %v2558
        %v2644 = vmul.f32 %v2544, %v2558
        %v2645 = vmul.f32 %v2542, %v2562
        %v2646 = vmul.f32 %v2543, %v2562
        %v2647 = vmul.f32 %v2544, %v2562
        %v2648 = vmul.f32 %v2545, %v2550
        %v2649 = vmul.f32 %v2546, %v2550
        %v2650 = vmul.f32 %v2547, %v2550
        %v2651 = vmul.f32 %v2545, %v2554
        %v2652 = vmul.f32 %v2546, %v2554
        %v2653 = vmul.f32 %v2547, %v2554
        %v2654 = vmul.f32 %v2545, %v2558
        %v2655 = vmul.f32 %v2546, %v2558
        %v2656 = vmul.f32 %v2547, %v2558
        %v2657 = vmul.f32 %v2545, %v2562
        %v2658 = vmul.f32 %v2546, %v2562
        %v2659 = vmul.f32 %v2547, %v2562
        %2756 = vrot.lane.b32.xlu0 %v2564, 127
        %v2757 = vpop.permute.xlu0 %2756
        %2758 = vrot.lane.b32.xlu0 %v2565, 127
        %v2759 = vpop.permute.xlu0 %2758
        %2760 = vrot.lane.b32.xlu0 %v2566, 127
        %v2761 = vpop.permute.xlu0 %2760
        %2762 = vrot.lane.b32.xlu0 %v2567, 127
        %v2763 = vpop.permute.xlu0 %2762
        %2764 = vrot.lane.b32.xlu0 %v2568, 127
        %v2765 = vpop.permute.xlu0 %2764
        %2766 = vrot.lane.b32.xlu0 %v2569, 127
        %v2767 = vpop.permute.xlu0 %2766
        %2768 = vrot.lane.b32.xlu0 %v2570, 127
        %v2769 = vpop.permute.xlu0 %2768
        %2770 = vrot.lane.b32.xlu0 %v2571, 127
        %v2771 = vpop.permute.xlu0 %2770
        %2772 = vrot.lane.b32.xlu0 %v2572, 127
        %v2773 = vpop.permute.xlu0 %2772
        %2774 = vrot.lane.b32.xlu0 %v2573, 127
        %v2775 = vpop.permute.xlu0 %2774
        %2776 = vrot.lane.b32.xlu0 %v2574, 127
        %v2777 = vpop.permute.xlu0 %2776
        %2778 = vrot.lane.b32.xlu0 %v2575, 127
        %v2779 = vpop.permute.xlu0 %2778
        %2780 = vrot.lane.b32.xlu0 %v2576, 127
        %v2781 = vpop.permute.xlu0 %2780
        %2782 = vrot.lane.b32.xlu0 %v2577, 127
        %v2783 = vpop.permute.xlu0 %2782
        %2784 = vrot.lane.b32.xlu0 %v2578, 127
        %v2785 = vpop.permute.xlu0 %2784
        %2786 = vrot.lane.b32.xlu0 %v2579, 127
        %v2787 = vpop.permute.xlu0 %2786
        %2788 = vrot.lane.b32.xlu0 %v2580, 127
        %v2789 = vpop.permute.xlu0 %2788
        %2790 = vrot.lane.b32.xlu0 %v2581, 127
        %v2791 = vpop.permute.xlu0 %2790
        %2792 = vrot.lane.b32.xlu0 %v2582, 127
        %v2793 = vpop.permute.xlu0 %2792
        %2794 = vrot.lane.b32.xlu0 %v2583, 127
        %v2795 = vpop.permute.xlu0 %2794
        %2796 = vrot.lane.b32.xlu0 %v2584, 127
        %v2797 = vpop.permute.xlu0 %2796
        %2798 = vrot.lane.b32.xlu0 %v2585, 127
        %v2799 = vpop.permute.xlu0 %2798
        %2800 = vrot.lane.b32.xlu0 %v2586, 127
        %v2801 = vpop.permute.xlu0 %2800
        %2802 = vrot.lane.b32.xlu0 %v2587, 127
        %v2803 = vpop.permute.xlu0 %2802
        %2804 = vrot.lane.b32.xlu0 %v2588, 127
        %v2805 = vpop.permute.xlu0 %2804
        %2806 = vrot.lane.b32.xlu0 %v2589, 127
        %v2807 = vpop.permute.xlu0 %2806
        %2808 = vrot.lane.b32.xlu0 %v2590, 127
        %v2809 = vpop.permute.xlu0 %2808
        %2810 = vrot.lane.b32.xlu0 %v2591, 127
        %v2811 = vpop.permute.xlu0 %2810
        %2812 = vrot.lane.b32.xlu0 %v2592, 127
        %v2813 = vpop.permute.xlu0 %2812
        %2814 = vrot.lane.b32.xlu0 %v2593, 127
        %v2815 = vpop.permute.xlu0 %2814
        %2816 = vrot.lane.b32.xlu0 %v2594, 127
        %v2817 = vpop.permute.xlu0 %2816
        %2818 = vrot.lane.b32.xlu0 %v2595, 127
        %v2819 = vpop.permute.xlu0 %2818
        %2820 = vrot.lane.b32.xlu0 %v2596, 127
        %v2821 = vpop.permute.xlu0 %2820
        %2822 = vrot.lane.b32.xlu0 %v2597, 127
        %v2823 = vpop.permute.xlu0 %2822
        %2824 = vrot.lane.b32.xlu0 %v2598, 127
        %v2825 = vpop.permute.xlu0 %2824
        %2826 = vrot.lane.b32.xlu0 %v2599, 127
        %v2827 = vpop.permute.xlu0 %2826
        %2828 = vrot.lane.b32.xlu0 %v2600, 127
        %v2829 = vpop.permute.xlu0 %2828
        %2830 = vrot.lane.b32.xlu0 %v2601, 127
        %v2831 = vpop.permute.xlu0 %2830
        %2832 = vrot.lane.b32.xlu0 %v2602, 127
        %v2833 = vpop.permute.xlu0 %2832
        %2834 = vrot.lane.b32.xlu0 %v2603, 127
        %v2835 = vpop.permute.xlu0 %2834
        %2836 = vrot.lane.b32.xlu0 %v2604, 127
        %v2837 = vpop.permute.xlu0 %2836
        %2838 = vrot.lane.b32.xlu0 %v2605, 127
        %v2839 = vpop.permute.xlu0 %2838
        %2840 = vrot.lane.b32.xlu0 %v2606, 127
        %v2841 = vpop.permute.xlu0 %2840
        %2842 = vrot.lane.b32.xlu0 %v2607, 127
        %v2843 = vpop.permute.xlu0 %2842
        %2844 = vrot.lane.b32.xlu0 %v2608, 127
        %v2845 = vpop.permute.xlu0 %2844
        %2846 = vrot.lane.b32.xlu0 %v2609, 127
        %v2847 = vpop.permute.xlu0 %2846
        %2848 = vrot.lane.b32.xlu0 %v2610, 127
        %v2849 = vpop.permute.xlu0 %2848
        %2850 = vrot.lane.b32.xlu0 %v2611, 127
        %v2851 = vpop.permute.xlu0 %2850
        %2852 = vrot.lane.b32.xlu0 %v2612, 127
        %v2853 = vpop.permute.xlu0 %2852
        %2854 = vrot.lane.b32.xlu0 %v2613, 127
        %v2855 = vpop.permute.xlu0 %2854
        %2856 = vrot.lane.b32.xlu0 %v2614, 127
        %v2857 = vpop.permute.xlu0 %2856
        %2858 = vrot.lane.b32.xlu0 %v2615, 127
        %v2859 = vpop.permute.xlu0 %2858
        %2860 = vrot.lane.b32.xlu0 %v2616, 127
        %v2861 = vpop.permute.xlu0 %2860
        %2862 = vrot.lane.b32.xlu0 %v2617, 127
        %v2863 = vpop.permute.xlu0 %2862
        %2864 = vrot.lane.b32.xlu0 %v2618, 127
        %v2865 = vpop.permute.xlu0 %2864
        %2866 = vrot.lane.b32.xlu0 %v2619, 127
        %v2867 = vpop.permute.xlu0 %2866
        %2868 = vrot.lane.b32.xlu0 %v2620, 127
        %v2869 = vpop.permute.xlu0 %2868
        %2870 = vrot.lane.b32.xlu0 %v2621, 127
        %v2871 = vpop.permute.xlu0 %2870
        %2872 = vrot.lane.b32.xlu0 %v2622, 127
        %v2873 = vpop.permute.xlu0 %2872
        %2874 = vrot.lane.b32.xlu0 %v2623, 127
        %v2875 = vpop.permute.xlu0 %2874
        %2876 = vrot.lane.b32.xlu0 %v2624, 127
        %v2877 = vpop.permute.xlu0 %2876
        %2878 = vrot.lane.b32.xlu0 %v2625, 127
        %v2879 = vpop.permute.xlu0 %2878
        %2880 = vrot.lane.b32.xlu0 %v2626, 127
        %v2881 = vpop.permute.xlu0 %2880
        %2882 = vrot.lane.b32.xlu0 %v2627, 127
        %v2883 = vpop.permute.xlu0 %2882
        %2884 = vrot.lane.b32.xlu0 %v2628, 127
        %v2885 = vpop.permute.xlu0 %2884
        %2886 = vrot.lane.b32.xlu0 %v2629, 127
        %v2887 = vpop.permute.xlu0 %2886
        %2888 = vrot.lane.b32.xlu0 %v2630, 127
        %v2889 = vpop.permute.xlu0 %2888
        %2890 = vrot.lane.b32.xlu0 %v2631, 127
        %v2891 = vpop.permute.xlu0 %2890
        %2892 = vrot.lane.b32.xlu0 %v2632, 127
        %v2893 = vpop.permute.xlu0 %2892
        %2894 = vrot.lane.b32.xlu0 %v2633, 127
        %v2895 = vpop.permute.xlu0 %2894
        %2896 = vrot.lane.b32.xlu0 %v2634, 127
        %v2897 = vpop.permute.xlu0 %2896
        %2898 = vrot.lane.b32.xlu0 %v2635, 127
        %v2899 = vpop.permute.xlu0 %2898
        %2900 = vrot.lane.b32.xlu0 %v2636, 127
        %v2901 = vpop.permute.xlu0 %2900
        %2902 = vrot.lane.b32.xlu0 %v2637, 127
        %v2903 = vpop.permute.xlu0 %2902
        %2904 = vrot.lane.b32.xlu0 %v2638, 127
        %v2905 = vpop.permute.xlu0 %2904
        %2906 = vrot.lane.b32.xlu0 %v2639, 127
        %v2907 = vpop.permute.xlu0 %2906
        %2908 = vrot.lane.b32.xlu0 %v2640, 127
        %v2909 = vpop.permute.xlu0 %2908
        %2910 = vrot.lane.b32.xlu0 %v2641, 127
        %v2911 = vpop.permute.xlu0 %2910
        %2912 = vrot.lane.b32.xlu0 %v2642, 127
        %v2913 = vpop.permute.xlu0 %2912
        %2914 = vrot.lane.b32.xlu0 %v2643, 127
        %v2915 = vpop.permute.xlu0 %2914
        %2916 = vrot.lane.b32.xlu0 %v2644, 127
        %v2917 = vpop.permute.xlu0 %2916
        %2918 = vrot.lane.b32.xlu0 %v2645, 127
        %v2919 = vpop.permute.xlu0 %2918
        %2920 = vrot.lane.b32.xlu0 %v2646, 127
        %v2921 = vpop.permute.xlu0 %2920
        %2922 = vrot.lane.b32.xlu0 %v2647, 127
        %v2923 = vpop.permute.xlu0 %2922
        %2924 = vrot.lane.b32.xlu0 %v2648, 127
        %v2925 = vpop.permute.xlu0 %2924
        %2926 = vrot.lane.b32.xlu0 %v2649, 127
        %v2927 = vpop.permute.xlu0 %2926
        %2928 = vrot.lane.b32.xlu0 %v2650, 127
        %v2929 = vpop.permute.xlu0 %2928
        %2930 = vrot.lane.b32.xlu0 %v2651, 127
        %v2931 = vpop.permute.xlu0 %2930
        %2932 = vrot.lane.b32.xlu0 %v2652, 127
        %v2933 = vpop.permute.xlu0 %2932
        %2934 = vrot.lane.b32.xlu0 %v2653, 127
        %v2935 = vpop.permute.xlu0 %2934
        %2936 = vrot.lane.b32.xlu0 %v2654, 127
        %v2937 = vpop.permute.xlu0 %2936
        %2938 = vrot.lane.b32.xlu0 %v2655, 127
        %v2939 = vpop.permute.xlu0 %2938
        %2940 = vrot.lane.b32.xlu0 %v2656, 127
        %v2941 = vpop.permute.xlu0 %2940
        %2942 = vrot.lane.b32.xlu0 %v2657, 127
        %v2943 = vpop.permute.xlu0 %2942
        %2944 = vrot.lane.b32.xlu0 %v2658, 127
        %v2945 = vpop.permute.xlu0 %2944
        %2946 = vrot.lane.b32.xlu0 %v2659, 127
        %v2947 = vpop.permute.xlu0 %2946
        %v2948 = vsel %vm1619, %v2757, %v2759
        %v2949 = vsel %vm1619, %v2759, %v2761
        %v2950 = vsel %vm1619, %v2763, %v2765
        %v2951 = vsel %vm1619, %v2765, %v2767
        %v2952 = vsel %vm1619, %v2769, %v2771
        %v2953 = vsel %vm1619, %v2771, %v2773
        %v2954 = vsel %vm1619, %v2775, %v2777
        %v2955 = vsel %vm1619, %v2777, %v2779
        %v2956 = vsel %vm1619, %v2781, %v2783
        %v2957 = vsel %vm1619, %v2783, %v2785
        %v2958 = vsel %vm1619, %v2787, %v2789
        %v2959 = vsel %vm1619, %v2789, %v2791
        %v2960 = vsel %vm1619, %v2793, %v2795
        %v2961 = vsel %vm1619, %v2795, %v2797
        %v2962 = vsel %vm1619, %v2799, %v2801
        %v2963 = vsel %vm1619, %v2801, %v2803
        %v2964 = vsel %vm1619, %v2805, %v2807
        %v2965 = vsel %vm1619, %v2807, %v2809
        %v2966 = vsel %vm1619, %v2811, %v2813
        %v2967 = vsel %vm1619, %v2813, %v2815
        %v2968 = vsel %vm1619, %v2817, %v2819
        %v2969 = vsel %vm1619, %v2819, %v2821
        %v2970 = vsel %vm1619, %v2823, %v2825
        %v2971 = vsel %vm1619, %v2825, %v2827
        %v2972 = vsel %vm1619, %v2829, %v2831
        %v2973 = vsel %vm1619, %v2831, %v2833
        %v2974 = vsel %vm1619, %v2835, %v2837
        %v2975 = vsel %vm1619, %v2837, %v2839
        %v2976 = vsel %vm1619, %v2841, %v2843
        %v2977 = vsel %vm1619, %v2843, %v2845
        %v2978 = vsel %vm1619, %v2847, %v2849
        %v2979 = vsel %vm1619, %v2849, %v2851
        %v2980 = vsel %vm1619, %v2853, %v2855
        %v2981 = vsel %vm1619, %v2855, %v2857
        %v2982 = vsel %vm1619, %v2859, %v2861
        %v2983 = vsel %vm1619, %v2861, %v2863
        %v2984 = vsel %vm1619, %v2865, %v2867
        %v2985 = vsel %vm1619, %v2867, %v2869
        %v2986 = vsel %vm1619, %v2871, %v2873
        %v2987 = vsel %vm1619, %v2873, %v2875
        %v2988 = vsel %vm1619, %v2877, %v2879
        %v2989 = vsel %vm1619, %v2879, %v2881
        %v2990 = vsel %vm1619, %v2883, %v2885
        %v2991 = vsel %vm1619, %v2885, %v2887
        %v2992 = vsel %vm1619, %v2889, %v2891
        %v2993 = vsel %vm1619, %v2891, %v2893
        %v2994 = vsel %vm1619, %v2895, %v2897
        %v2995 = vsel %vm1619, %v2897, %v2899
        %v2996 = vsel %vm1619, %v2901, %v2903
        %v2997 = vsel %vm1619, %v2903, %v2905
        %v2998 = vsel %vm1619, %v2907, %v2909
        %v2999 = vsel %vm1619, %v2909, %v2911
        %v3000 = vsel %vm1619, %v2913, %v2915
        %v3001 = vsel %vm1619, %v2915, %v2917
        %v3002 = vsel %vm1619, %v2919, %v2921
        %v3003 = vsel %vm1619, %v2921, %v2923
        %v3004 = vsel %vm1619, %v2925, %v2927
        %v3005 = vsel %vm1619, %v2927, %v2929
        %v3006 = vsel %vm1619, %v2931, %v2933
        %v3007 = vsel %vm1619, %v2933, %v2935
        %v3008 = vsel %vm1619, %v2937, %v2939
        %v3009 = vsel %vm1619, %v2939, %v2941
        %v3010 = vsel %vm1619, %v2943, %v2945
        %v3011 = vsel %vm1619, %v2945, %v2947
        %v3076 = vadd.f32 %v2412, %v2948
        %v3077 = vadd.f32 %v2413, %v2949
        %v3078 = vadd.f32 %v2414, %v2950
        %v3079 = vadd.f32 %v2415, %v2951
        %v3080 = vadd.f32 %v2416, %v2952
        %v3081 = vadd.f32 %v2417, %v2953
        %v3082 = vadd.f32 %v2418, %v2954
        %v3083 = vadd.f32 %v2419, %v2955
        %v3084 = vadd.f32 %v2420, %v2956
        %v3085 = vadd.f32 %v2421, %v2957
        %v3086 = vadd.f32 %v2422, %v2958
        %v3087 = vadd.f32 %v2423, %v2959
        %v3088 = vadd.f32 %v2424, %v2960
        %v3089 = vadd.f32 %v2425, %v2961
        %v3090 = vadd.f32 %v2426, %v2962
        %v3091 = vadd.f32 %v2427, %v2963
        %v3092 = vadd.f32 %v2428, %v2964
        %v3093 = vadd.f32 %v2429, %v2965
        %v3094 = vadd.f32 %v2430, %v2966
        %v3095 = vadd.f32 %v2431, %v2967
        %v3096 = vadd.f32 %v2432, %v2968
        %v3097 = vadd.f32 %v2433, %v2969
        %v3098 = vadd.f32 %v2434, %v2970
        %v3099 = vadd.f32 %v2435, %v2971
        %v3100 = vadd.f32 %v2436, %v2972
        %v3101 = vadd.f32 %v2437, %v2973
        %v3102 = vadd.f32 %v2438, %v2974
        %v3103 = vadd.f32 %v2439, %v2975
        %v3104 = vadd.f32 %v2440, %v2976
        %v3105 = vadd.f32 %v2441, %v2977
        %v3106 = vadd.f32 %v2442, %v2978
        %v3107 = vadd.f32 %v2443, %v2979
        %v3108 = vadd.f32 %v2444, %v2980
        %v3109 = vadd.f32 %v2445, %v2981
        %v3110 = vadd.f32 %v2446, %v2982
        %v3111 = vadd.f32 %v2447, %v2983
        %v3112 = vadd.f32 %v2448, %v2984
        %v3113 = vadd.f32 %v2449, %v2985
        %v3114 = vadd.f32 %v2450, %v2986
        %v3115 = vadd.f32 %v2451, %v2987
        %v3116 = vadd.f32 %v2452, %v2988
        %v3117 = vadd.f32 %v2453, %v2989
        %v3118 = vadd.f32 %v2454, %v2990
        %v3119 = vadd.f32 %v2455, %v2991
        %v3120 = vadd.f32 %v2456, %v2992
        %v3121 = vadd.f32 %v2457, %v2993
        %v3122 = vadd.f32 %v2458, %v2994
        %v3123 = vadd.f32 %v2459, %v2995
        %v3124 = vadd.f32 %v2460, %v2996
        %v3125 = vadd.f32 %v2461, %v2997
        %v3126 = vadd.f32 %v2462, %v2998
        %v3127 = vadd.f32 %v2463, %v2999
        %v3128 = vadd.f32 %v2464, %v3000
        %v3129 = vadd.f32 %v2465, %v3001
        %v3130 = vadd.f32 %v2466, %v3002
        %v3131 = vadd.f32 %v2467, %v3003
        %v3132 = vadd.f32 %v2468, %v3004
        %v3133 = vadd.f32 %v2469, %v3005
        %v3134 = vadd.f32 %v2470, %v3006
        %v3135 = vadd.f32 %v2471, %v3007
        %v3136 = vadd.f32 %v2472, %v3008
        %v3137 = vadd.f32 %v2473, %v3009
        %v3138 = vadd.f32 %v2474, %v3010
        %v3139 = vadd.f32 %v2475, %v3011
        %v3140 = vperm.slane %v1115, 3
        %v3141 = vperm.slane %v1115, 7
        %v3142 = vperm.slane %v1116, 3
        %v3143 = vperm.slane %v1117, 3
        %v3144 = vperm.slane %v1117, 7
        %v3145 = vperm.slane %v1118, 3
        %v3146 = vperm.slane %v1119, 3
        %v3147 = vperm.slane %v1119, 7
        %v3148 = vperm.slane %v1120, 3
        %v3149 = vperm.slane %v1121, 3
        %v3150 = vperm.slane %v1121, 7
        %v3151 = vperm.slane %v1122, 3
        %v3152 = vperm.slane %v1123, 3
        %v3153 = vperm.slane %v1123, 7
        %v3154 = vperm.slane %v1124, 3
        %v3155 = vperm.slane %v1125, 3
        %v3156 = vperm.slane %v1125, 7
        %v3157 = vperm.slane %v1126, 3
        %v3158 = vperm.slane %v1127, 3
        %v3159 = vperm.slane %v1127, 7
        %v3160 = vperm.slane %v1128, 3
        %v3161 = vperm.slane %v1129, 3
        %v3162 = vperm.slane %v1129, 7
        %v3163 = vperm.slane %v1130, 3
        %v3188 = vperm.slane %v3140, 3
        %v3189 = vperm.slane %v3141, 3
        %v3190 = vperm.slane %v3142, 3
        %v3191 = vperm.slane %v3143, 3
        %v3192 = vperm.slane %v3144, 3
        %v3193 = vperm.slane %v3145, 3
        %v3194 = vperm.slane %v3146, 3
        %v3195 = vperm.slane %v3147, 3
        %v3196 = vperm.slane %v3148, 3
        %v3197 = vperm.slane %v3149, 3
        %v3198 = vperm.slane %v3150, 3
        %v3199 = vperm.slane %v3151, 3
        %v3200 = vperm.slane %v3152, 3
        %v3201 = vperm.slane %v3153, 3
        %v3202 = vperm.slane %v3154, 3
        %v3203 = vperm.slane %v3155, 3
        %v3204 = vperm.slane %v3156, 3
        %v3205 = vperm.slane %v3157, 3
        %v3206 = vperm.slane %v3158, 3
        %v3207 = vperm.slane %v3159, 3
        %v3208 = vperm.slane %v3160, 3
        %v3209 = vperm.slane %v3161, 3
        %v3210 = vperm.slane %v3162, 3
        %v3211 = vperm.slane %v3163, 3
        %3212 = vset.pattern.permute.xlu0 7
        %3213 = vperm.xlu0 %3212, %v387
        %v3214 = vpop.permute.xlu0 %3213
        %3216 = vset.pattern.permute.xlu0 7
        %3217 = vperm.xlu0 %3216, %v388
        %v3218 = vpop.permute.xlu0 %3217
        %3220 = vset.pattern.permute.xlu0 7
        %3221 = vperm.xlu0 %3220, %v389
        %v3222 = vpop.permute.xlu0 %3221
        %3224 = vset.pattern.permute.xlu0 7
        %3225 = vperm.xlu0 %3224, %v390
        %v3226 = vpop.permute.xlu0 %3225
        %v3228 = vmul.f32 %v3188, %v3214
        %v3229 = vmul.f32 %v3189, %v3214
        %v3230 = vmul.f32 %v3190, %v3214
        %v3231 = vmul.f32 %v3188, %v3218
        %v3232 = vmul.f32 %v3189, %v3218
        %v3233 = vmul.f32 %v3190, %v3218
        %v3234 = vmul.f32 %v3188, %v3222
        %v3235 = vmul.f32 %v3189, %v3222
        %v3236 = vmul.f32 %v3190, %v3222
        %v3237 = vmul.f32 %v3188, %v3226
        %v3238 = vmul.f32 %v3189, %v3226
        %v3239 = vmul.f32 %v3190, %v3226
        %v3240 = vmul.f32 %v3191, %v3214
        %v3241 = vmul.f32 %v3192, %v3214
        %v3242 = vmul.f32 %v3193, %v3214
        %v3243 = vmul.f32 %v3191, %v3218
        %v3244 = vmul.f32 %v3192, %v3218
        %v3245 = vmul.f32 %v3193, %v3218
        %v3246 = vmul.f32 %v3191, %v3222
        %v3247 = vmul.f32 %v3192, %v3222
        %v3248 = vmul.f32 %v3193, %v3222
        %v3249 = vmul.f32 %v3191, %v3226
        %v3250 = vmul.f32 %v3192, %v3226
        %v3251 = vmul.f32 %v3193, %v3226
        %v3252 = vmul.f32 %v3194, %v3214
        %v3253 = vmul.f32 %v3195, %v3214
        %v3254 = vmul.f32 %v3196, %v3214
        %v3255 = vmul.f32 %v3194, %v3218
        %v3256 = vmul.f32 %v3195, %v3218
        %v3257 = vmul.f32 %v3196, %v3218
        %v3258 = vmul.f32 %v3194, %v3222
        %v3259 = vmul.f32 %v3195, %v3222
        %v3260 = vmul.f32 %v3196, %v3222
        %v3261 = vmul.f32 %v3194, %v3226
        %v3262 = vmul.f32 %v3195, %v3226
        %v3263 = vmul.f32 %v3196, %v3226
        %v3264 = vmul.f32 %v3197, %v3214
        %v3265 = vmul.f32 %v3198, %v3214
        %v3266 = vmul.f32 %v3199, %v3214
        %v3267 = vmul.f32 %v3197, %v3218
        %v3268 = vmul.f32 %v3198, %v3218
        %v3269 = vmul.f32 %v3199, %v3218
        %v3270 = vmul.f32 %v3197, %v3222
        %v3271 = vmul.f32 %v3198, %v3222
        %v3272 = vmul.f32 %v3199, %v3222
        %v3273 = vmul.f32 %v3197, %v3226
        %v3274 = vmul.f32 %v3198, %v3226
        %v3275 = vmul.f32 %v3199, %v3226
        %v3276 = vmul.f32 %v3200, %v3214
        %v3277 = vmul.f32 %v3201, %v3214
        %v3278 = vmul.f32 %v3202, %v3214
        %v3279 = vmul.f32 %v3200, %v3218
        %v3280 = vmul.f32 %v3201, %v3218
        %v3281 = vmul.f32 %v3202, %v3218
        %v3282 = vmul.f32 %v3200, %v3222
        %v3283 = vmul.f32 %v3201, %v3222
        %v3284 = vmul.f32 %v3202, %v3222
        %v3285 = vmul.f32 %v3200, %v3226
        %v3286 = vmul.f32 %v3201, %v3226
        %v3287 = vmul.f32 %v3202, %v3226
        %v3288 = vmul.f32 %v3203, %v3214
        %v3289 = vmul.f32 %v3204, %v3214
        %v3290 = vmul.f32 %v3205, %v3214
        %v3291 = vmul.f32 %v3203, %v3218
        %v3292 = vmul.f32 %v3204, %v3218
        %v3293 = vmul.f32 %v3205, %v3218
        %v3294 = vmul.f32 %v3203, %v3222
        %v3295 = vmul.f32 %v3204, %v3222
        %v3296 = vmul.f32 %v3205, %v3222
        %v3297 = vmul.f32 %v3203, %v3226
        %v3298 = vmul.f32 %v3204, %v3226
        %v3299 = vmul.f32 %v3205, %v3226
        %v3300 = vmul.f32 %v3206, %v3214
        %v3301 = vmul.f32 %v3207, %v3214
        %v3302 = vmul.f32 %v3208, %v3214
        %v3303 = vmul.f32 %v3206, %v3218
        %v3304 = vmul.f32 %v3207, %v3218
        %v3305 = vmul.f32 %v3208, %v3218
        %v3306 = vmul.f32 %v3206, %v3222
        %v3307 = vmul.f32 %v3207, %v3222
        %v3308 = vmul.f32 %v3208, %v3222
        %v3309 = vmul.f32 %v3206, %v3226
        %v3310 = vmul.f32 %v3207, %v3226
        %v3311 = vmul.f32 %v3208, %v3226
        %v3312 = vmul.f32 %v3209, %v3214
        %v3313 = vmul.f32 %v3210, %v3214
        %v3314 = vmul.f32 %v3211, %v3214
        %v3315 = vmul.f32 %v3209, %v3218
        %v3316 = vmul.f32 %v3210, %v3218
        %v3317 = vmul.f32 %v3211, %v3218
        %v3318 = vmul.f32 %v3209, %v3222
        %v3319 = vmul.f32 %v3210, %v3222
        %v3320 = vmul.f32 %v3211, %v3222
        %v3321 = vmul.f32 %v3209, %v3226
        %v3322 = vmul.f32 %v3210, %v3226
        %v3323 = vmul.f32 %v3211, %v3226
        %3420 = vrot.lane.b32.xlu0 %v3228, 127
        %v3421 = vpop.permute.xlu0 %3420
        %3422 = vrot.lane.b32.xlu0 %v3229, 127
        %v3423 = vpop.permute.xlu0 %3422
        %3424 = vrot.lane.b32.xlu0 %v3230, 127
        %v3425 = vpop.permute.xlu0 %3424
        %3426 = vrot.lane.b32.xlu0 %v3231, 127
        %v3427 = vpop.permute.xlu0 %3426
        %3428 = vrot.lane.b32.xlu0 %v3232, 127
        %v3429 = vpop.permute.xlu0 %3428
        %3430 = vrot.lane.b32.xlu0 %v3233, 127
        %v3431 = vpop.permute.xlu0 %3430
        %3432 = vrot.lane.b32.xlu0 %v3234, 127
        %v3433 = vpop.permute.xlu0 %3432
        %3434 = vrot.lane.b32.xlu0 %v3235, 127
        %v3435 = vpop.permute.xlu0 %3434
        %3436 = vrot.lane.b32.xlu0 %v3236, 127
        %v3437 = vpop.permute.xlu0 %3436
        %3438 = vrot.lane.b32.xlu0 %v3237, 127
        %v3439 = vpop.permute.xlu0 %3438
        %3440 = vrot.lane.b32.xlu0 %v3238, 127
        %v3441 = vpop.permute.xlu0 %3440
        %3442 = vrot.lane.b32.xlu0 %v3239, 127
        %v3443 = vpop.permute.xlu0 %3442
        %3444 = vrot.lane.b32.xlu0 %v3240, 127
        %v3445 = vpop.permute.xlu0 %3444
        %3446 = vrot.lane.b32.xlu0 %v3241, 127
        %v3447 = vpop.permute.xlu0 %3446
        %3448 = vrot.lane.b32.xlu0 %v3242, 127
        %v3449 = vpop.permute.xlu0 %3448
        %3450 = vrot.lane.b32.xlu0 %v3243, 127
        %v3451 = vpop.permute.xlu0 %3450
        %3452 = vrot.lane.b32.xlu0 %v3244, 127
        %v3453 = vpop.permute.xlu0 %3452
        %3454 = vrot.lane.b32.xlu0 %v3245, 127
        %v3455 = vpop.permute.xlu0 %3454
        %3456 = vrot.lane.b32.xlu0 %v3246, 127
        %v3457 = vpop.permute.xlu0 %3456
        %3458 = vrot.lane.b32.xlu0 %v3247, 127
        %v3459 = vpop.permute.xlu0 %3458
        %3460 = vrot.lane.b32.xlu0 %v3248, 127
        %v3461 = vpop.permute.xlu0 %3460
        %3462 = vrot.lane.b32.xlu0 %v3249, 127
        %v3463 = vpop.permute.xlu0 %3462
        %3464 = vrot.lane.b32.xlu0 %v3250, 127
        %v3465 = vpop.permute.xlu0 %3464
        %3466 = vrot.lane.b32.xlu0 %v3251, 127
        %v3467 = vpop.permute.xlu0 %3466
        %3468 = vrot.lane.b32.xlu0 %v3252, 127
        %v3469 = vpop.permute.xlu0 %3468
        %3470 = vrot.lane.b32.xlu0 %v3253, 127
        %v3471 = vpop.permute.xlu0 %3470
        %3472 = vrot.lane.b32.xlu0 %v3254, 127
        %v3473 = vpop.permute.xlu0 %3472
        %3474 = vrot.lane.b32.xlu0 %v3255, 127
        %v3475 = vpop.permute.xlu0 %3474
        %3476 = vrot.lane.b32.xlu0 %v3256, 127
        %v3477 = vpop.permute.xlu0 %3476
        %3478 = vrot.lane.b32.xlu0 %v3257, 127
        %v3479 = vpop.permute.xlu0 %3478
        %3480 = vrot.lane.b32.xlu0 %v3258, 127
        %v3481 = vpop.permute.xlu0 %3480
        %3482 = vrot.lane.b32.xlu0 %v3259, 127
        %v3483 = vpop.permute.xlu0 %3482
        %3484 = vrot.lane.b32.xlu0 %v3260, 127
        %v3485 = vpop.permute.xlu0 %3484
        %3486 = vrot.lane.b32.xlu0 %v3261, 127
        %v3487 = vpop.permute.xlu0 %3486
        %3488 = vrot.lane.b32.xlu0 %v3262, 127
        %v3489 = vpop.permute.xlu0 %3488
        %3490 = vrot.lane.b32.xlu0 %v3263, 127
        %v3491 = vpop.permute.xlu0 %3490
        %3492 = vrot.lane.b32.xlu0 %v3264, 127
        %v3493 = vpop.permute.xlu0 %3492
        %3494 = vrot.lane.b32.xlu0 %v3265, 127
        %v3495 = vpop.permute.xlu0 %3494
        %3496 = vrot.lane.b32.xlu0 %v3266, 127
        %v3497 = vpop.permute.xlu0 %3496
        %3498 = vrot.lane.b32.xlu0 %v3267, 127
        %v3499 = vpop.permute.xlu0 %3498
        %3500 = vrot.lane.b32.xlu0 %v3268, 127
        %v3501 = vpop.permute.xlu0 %3500
        %3502 = vrot.lane.b32.xlu0 %v3269, 127
        %v3503 = vpop.permute.xlu0 %3502
        %3504 = vrot.lane.b32.xlu0 %v3270, 127
        %v3505 = vpop.permute.xlu0 %3504
        %3506 = vrot.lane.b32.xlu0 %v3271, 127
        %v3507 = vpop.permute.xlu0 %3506
        %3508 = vrot.lane.b32.xlu0 %v3272, 127
        %v3509 = vpop.permute.xlu0 %3508
        %3510 = vrot.lane.b32.xlu0 %v3273, 127
        %v3511 = vpop.permute.xlu0 %3510
        %3512 = vrot.lane.b32.xlu0 %v3274, 127
        %v3513 = vpop.permute.xlu0 %3512
        %3514 = vrot.lane.b32.xlu0 %v3275, 127
        %v3515 = vpop.permute.xlu0 %3514
        %3516 = vrot.lane.b32.xlu0 %v3276, 127
        %v3517 = vpop.permute.xlu0 %3516
        %3518 = vrot.lane.b32.xlu0 %v3277, 127
        %v3519 = vpop.permute.xlu0 %3518
        %3520 = vrot.lane.b32.xlu0 %v3278, 127
        %v3521 = vpop.permute.xlu0 %3520
        %3522 = vrot.lane.b32.xlu0 %v3279, 127
        %v3523 = vpop.permute.xlu0 %3522
        %3524 = vrot.lane.b32.xlu0 %v3280, 127
        %v3525 = vpop.permute.xlu0 %3524
        %3526 = vrot.lane.b32.xlu0 %v3281, 127
        %v3527 = vpop.permute.xlu0 %3526
        %3528 = vrot.lane.b32.xlu0 %v3282, 127
        %v3529 = vpop.permute.xlu0 %3528
        %3530 = vrot.lane.b32.xlu0 %v3283, 127
        %v3531 = vpop.permute.xlu0 %3530
        %3532 = vrot.lane.b32.xlu0 %v3284, 127
        %v3533 = vpop.permute.xlu0 %3532
        %3534 = vrot.lane.b32.xlu0 %v3285, 127
        %v3535 = vpop.permute.xlu0 %3534
        %3536 = vrot.lane.b32.xlu0 %v3286, 127
        %v3537 = vpop.permute.xlu0 %3536
        %3538 = vrot.lane.b32.xlu0 %v3287, 127
        %v3539 = vpop.permute.xlu0 %3538
        %3540 = vrot.lane.b32.xlu0 %v3288, 127
        %v3541 = vpop.permute.xlu0 %3540
        %3542 = vrot.lane.b32.xlu0 %v3289, 127
        %v3543 = vpop.permute.xlu0 %3542
        %3544 = vrot.lane.b32.xlu0 %v3290, 127
        %v3545 = vpop.permute.xlu0 %3544
        %3546 = vrot.lane.b32.xlu0 %v3291, 127
        %v3547 = vpop.permute.xlu0 %3546
        %3548 = vrot.lane.b32.xlu0 %v3292, 127
        %v3549 = vpop.permute.xlu0 %3548
        %3550 = vrot.lane.b32.xlu0 %v3293, 127
        %v3551 = vpop.permute.xlu0 %3550
        %3552 = vrot.lane.b32.xlu0 %v3294, 127
        %v3553 = vpop.permute.xlu0 %3552
        %3554 = vrot.lane.b32.xlu0 %v3295, 127
        %v3555 = vpop.permute.xlu0 %3554
        %3556 = vrot.lane.b32.xlu0 %v3296, 127
        %v3557 = vpop.permute.xlu0 %3556
        %3558 = vrot.lane.b32.xlu0 %v3297, 127
        %v3559 = vpop.permute.xlu0 %3558
        %3560 = vrot.lane.b32.xlu0 %v3298, 127
        %v3561 = vpop.permute.xlu0 %3560
        %3562 = vrot.lane.b32.xlu0 %v3299, 127
        %v3563 = vpop.permute.xlu0 %3562
        %3564 = vrot.lane.b32.xlu0 %v3300, 127
        %v3565 = vpop.permute.xlu0 %3564
        %3566 = vrot.lane.b32.xlu0 %v3301, 127
        %v3567 = vpop.permute.xlu0 %3566
        %3568 = vrot.lane.b32.xlu0 %v3302, 127
        %v3569 = vpop.permute.xlu0 %3568
        %3570 = vrot.lane.b32.xlu0 %v3303, 127
        %v3571 = vpop.permute.xlu0 %3570
        %3572 = vrot.lane.b32.xlu0 %v3304, 127
        %v3573 = vpop.permute.xlu0 %3572
        %3574 = vrot.lane.b32.xlu0 %v3305, 127
        %v3575 = vpop.permute.xlu0 %3574
        %3576 = vrot.lane.b32.xlu0 %v3306, 127
        %v3577 = vpop.permute.xlu0 %3576
        %3578 = vrot.lane.b32.xlu0 %v3307, 127
        %v3579 = vpop.permute.xlu0 %3578
        %3580 = vrot.lane.b32.xlu0 %v3308, 127
        %v3581 = vpop.permute.xlu0 %3580
        %3582 = vrot.lane.b32.xlu0 %v3309, 127
        %v3583 = vpop.permute.xlu0 %3582
        %3584 = vrot.lane.b32.xlu0 %v3310, 127
        %v3585 = vpop.permute.xlu0 %3584
        %3586 = vrot.lane.b32.xlu0 %v3311, 127
        %v3587 = vpop.permute.xlu0 %3586
        %3588 = vrot.lane.b32.xlu0 %v3312, 127
        %v3589 = vpop.permute.xlu0 %3588
        %3590 = vrot.lane.b32.xlu0 %v3313, 127
        %v3591 = vpop.permute.xlu0 %3590
        %3592 = vrot.lane.b32.xlu0 %v3314, 127
        %v3593 = vpop.permute.xlu0 %3592
        %3594 = vrot.lane.b32.xlu0 %v3315, 127
        %v3595 = vpop.permute.xlu0 %3594
        %3596 = vrot.lane.b32.xlu0 %v3316, 127
        %v3597 = vpop.permute.xlu0 %3596
        %3598 = vrot.lane.b32.xlu0 %v3317, 127
        %v3599 = vpop.permute.xlu0 %3598
        %3600 = vrot.lane.b32.xlu0 %v3318, 127
        %v3601 = vpop.permute.xlu0 %3600
        %3602 = vrot.lane.b32.xlu0 %v3319, 127
        %v3603 = vpop.permute.xlu0 %3602
        %3604 = vrot.lane.b32.xlu0 %v3320, 127
        %v3605 = vpop.permute.xlu0 %3604
        %3606 = vrot.lane.b32.xlu0 %v3321, 127
        %v3607 = vpop.permute.xlu0 %3606
        %3608 = vrot.lane.b32.xlu0 %v3322, 127
        %v3609 = vpop.permute.xlu0 %3608
        %3610 = vrot.lane.b32.xlu0 %v3323, 127
        %v3611 = vpop.permute.xlu0 %3610
        %v3612 = vsel %vm1619, %v3421, %v3423
        %v3613 = vsel %vm1619, %v3423, %v3425
        %v3614 = vsel %vm1619, %v3427, %v3429
        %v3615 = vsel %vm1619, %v3429, %v3431
        %v3616 = vsel %vm1619, %v3433, %v3435
        %v3617 = vsel %vm1619, %v3435, %v3437
        %v3618 = vsel %vm1619, %v3439, %v3441
        %v3619 = vsel %vm1619, %v3441, %v3443
        %v3620 = vsel %vm1619, %v3445, %v3447
        %v3621 = vsel %vm1619, %v3447, %v3449
        %v3622 = vsel %vm1619, %v3451, %v3453
        %v3623 = vsel %vm1619, %v3453, %v3455
        %v3624 = vsel %vm1619, %v3457, %v3459
        %v3625 = vsel %vm1619, %v3459, %v3461
        %v3626 = vsel %vm1619, %v3463, %v3465
        %v3627 = vsel %vm1619, %v3465, %v3467
        %v3628 = vsel %vm1619, %v3469, %v3471
        %v3629 = vsel %vm1619, %v3471, %v3473
        %v3630 = vsel %vm1619, %v3475, %v3477
        %v3631 = vsel %vm1619, %v3477, %v3479
        %v3632 = vsel %vm1619, %v3481, %v3483
        %v3633 = vsel %vm1619, %v3483, %v3485
        %v3634 = vsel %vm1619, %v3487, %v3489
        %v3635 = vsel %vm1619, %v3489, %v3491
        %v3636 = vsel %vm1619, %v3493, %v3495
        %v3637 = vsel %vm1619, %v3495, %v3497
        %v3638 = vsel %vm1619, %v3499, %v3501
        %v3639 = vsel %vm1619, %v3501, %v3503
        %v3640 = vsel %vm1619, %v3505, %v3507
        %v3641 = vsel %vm1619, %v3507, %v3509
        %v3642 = vsel %vm1619, %v3511, %v3513
        %v3643 = vsel %vm1619, %v3513, %v3515
        %v3644 = vsel %vm1619, %v3517, %v3519
        %v3645 = vsel %vm1619, %v3519, %v3521
        %v3646 = vsel %vm1619, %v3523, %v3525
        %v3647 = vsel %vm1619, %v3525, %v3527
        %v3648 = vsel %vm1619, %v3529, %v3531
        %v3649 = vsel %vm1619, %v3531, %v3533
        %v3650 = vsel %vm1619, %v3535, %v3537
        %v3651 = vsel %vm1619, %v3537, %v3539
        %v3652 = vsel %vm1619, %v3541, %v3543
        %v3653 = vsel %vm1619, %v3543, %v3545
        %v3654 = vsel %vm1619, %v3547, %v3549
        %v3655 = vsel %vm1619, %v3549, %v3551
        %v3656 = vsel %vm1619, %v3553, %v3555
        %v3657 = vsel %vm1619, %v3555, %v3557
        %v3658 = vsel %vm1619, %v3559, %v3561
        %v3659 = vsel %vm1619, %v3561, %v3563
        %v3660 = vsel %vm1619, %v3565, %v3567
        %v3661 = vsel %vm1619, %v3567, %v3569
        %v3662 = vsel %vm1619, %v3571, %v3573
        %v3663 = vsel %vm1619, %v3573, %v3575
        %v3664 = vsel %vm1619, %v3577, %v3579
        %v3665 = vsel %vm1619, %v3579, %v3581
        %v3666 = vsel %vm1619, %v3583, %v3585
        %v3667 = vsel %vm1619, %v3585, %v3587
        %v3668 = vsel %vm1619, %v3589, %v3591
        %v3669 = vsel %vm1619, %v3591, %v3593
        %v3670 = vsel %vm1619, %v3595, %v3597
        %v3671 = vsel %vm1619, %v3597, %v3599
        %v3672 = vsel %vm1619, %v3601, %v3603
        %v3673 = vsel %vm1619, %v3603, %v3605
        %v3674 = vsel %vm1619, %v3607, %v3609
        %v3675 = vsel %vm1619, %v3609, %v3611
        %v3740 = vadd.f32 %v3076, %v3612
        %v3741 = vadd.f32 %v3077, %v3613
        %v3742 = vadd.f32 %v3078, %v3614
        %v3743 = vadd.f32 %v3079, %v3615
        %v3744 = vadd.f32 %v3080, %v3616
        %v3745 = vadd.f32 %v3081, %v3617
        %v3746 = vadd.f32 %v3082, %v3618
        %v3747 = vadd.f32 %v3083, %v3619
        %v3748 = vadd.f32 %v3084, %v3620
        %v3749 = vadd.f32 %v3085, %v3621
        %v3750 = vadd.f32 %v3086, %v3622
        %v3751 = vadd.f32 %v3087, %v3623
        %v3752 = vadd.f32 %v3088, %v3624
        %v3753 = vadd.f32 %v3089, %v3625
        %v3754 = vadd.f32 %v3090, %v3626
        %v3755 = vadd.f32 %v3091, %v3627
        %v3756 = vadd.f32 %v3092, %v3628
        %v3757 = vadd.f32 %v3093, %v3629
        %v3758 = vadd.f32 %v3094, %v3630
        %v3759 = vadd.f32 %v3095, %v3631
        %v3760 = vadd.f32 %v3096, %v3632
        %v3761 = vadd.f32 %v3097, %v3633
        %v3762 = vadd.f32 %v3098, %v3634
        %v3763 = vadd.f32 %v3099, %v3635
        %v3764 = vadd.f32 %v3100, %v3636
        %v3765 = vadd.f32 %v3101, %v3637
        %v3766 = vadd.f32 %v3102, %v3638
        %v3767 = vadd.f32 %v3103, %v3639
        %v3768 = vadd.f32 %v3104, %v3640
        %v3769 = vadd.f32 %v3105, %v3641
        %v3770 = vadd.f32 %v3106, %v3642
        %v3771 = vadd.f32 %v3107, %v3643
        %v3772 = vadd.f32 %v3108, %v3644
        %v3773 = vadd.f32 %v3109, %v3645
        %v3774 = vadd.f32 %v3110, %v3646
        %v3775 = vadd.f32 %v3111, %v3647
        %v3776 = vadd.f32 %v3112, %v3648
        %v3777 = vadd.f32 %v3113, %v3649
        %v3778 = vadd.f32 %v3114, %v3650
        %v3779 = vadd.f32 %v3115, %v3651
        %v3780 = vadd.f32 %v3116, %v3652
        %v3781 = vadd.f32 %v3117, %v3653
        %v3782 = vadd.f32 %v3118, %v3654
        %v3783 = vadd.f32 %v3119, %v3655
        %v3784 = vadd.f32 %v3120, %v3656
        %v3785 = vadd.f32 %v3121, %v3657
        %v3786 = vadd.f32 %v3122, %v3658
        %v3787 = vadd.f32 %v3123, %v3659
        %v3788 = vadd.f32 %v3124, %v3660
        %v3789 = vadd.f32 %v3125, %v3661
        %v3790 = vadd.f32 %v3126, %v3662
        %v3791 = vadd.f32 %v3127, %v3663
        %v3792 = vadd.f32 %v3128, %v3664
        %v3793 = vadd.f32 %v3129, %v3665
        %v3794 = vadd.f32 %v3130, %v3666
        %v3795 = vadd.f32 %v3131, %v3667
        %v3796 = vadd.f32 %v3132, %v3668
        %v3797 = vadd.f32 %v3133, %v3669
        %v3798 = vadd.f32 %v3134, %v3670
        %v3799 = vadd.f32 %v3135, %v3671
        %v3800 = vadd.f32 %v3136, %v3672
        %v3801 = vadd.f32 %v3137, %v3673
        %v3802 = vadd.f32 %v3138, %v3674
        %v3803 = vadd.f32 %v3139, %v3675
        %3804 = vset.pattern.permute.xlu0 8
        %3805 = vperm.xlu0 %3804, %v387
        %v3806 = vpop.permute.xlu0 %3805
        %3808 = vset.pattern.permute.xlu0 8
        %3809 = vperm.xlu0 %3808, %v388
        %v3810 = vpop.permute.xlu0 %3809
        %3812 = vset.pattern.permute.xlu0 8
        %3813 = vperm.xlu0 %3812, %v389
        %v3814 = vpop.permute.xlu0 %3813
        %3816 = vset.pattern.permute.xlu0 8
        %3817 = vperm.xlu0 %3816, %v390
        %v3818 = vpop.permute.xlu0 %3817
        %v3820 = vmul.f32 %v1195, %v3806
        %v3821 = vmul.f32 %v1196, %v3806
        %v3822 = vmul.f32 %v1197, %v3806
        %v3823 = vmul.f32 %v1195, %v3810
        %v3824 = vmul.f32 %v1196, %v3810
        %v3825 = vmul.f32 %v1197, %v3810
        %v3826 = vmul.f32 %v1195, %v3814
        %v3827 = vmul.f32 %v1196, %v3814
        %v3828 = vmul.f32 %v1197, %v3814
        %v3829 = vmul.f32 %v1195, %v3818
        %v3830 = vmul.f32 %v1196, %v3818
        %v3831 = vmul.f32 %v1197, %v3818
        %v3832 = vmul.f32 %v1198, %v3806
        %v3833 = vmul.f32 %v1199, %v3806
        %v3834 = vmul.f32 %v1200, %v3806
        %v3835 = vmul.f32 %v1198, %v3810
        %v3836 = vmul.f32 %v1199, %v3810
        %v3837 = vmul.f32 %v1200, %v3810
        %v3838 = vmul.f32 %v1198, %v3814
        %v3839 = vmul.f32 %v1199, %v3814
        %v3840 = vmul.f32 %v1200, %v3814
        %v3841 = vmul.f32 %v1198, %v3818
        %v3842 = vmul.f32 %v1199, %v3818
        %v3843 = vmul.f32 %v1200, %v3818
        %v3844 = vmul.f32 %v1201, %v3806
        %v3845 = vmul.f32 %v1202, %v3806
        %v3846 = vmul.f32 %v1203, %v3806
        %v3847 = vmul.f32 %v1201, %v3810
        %v3848 = vmul.f32 %v1202, %v3810
        %v3849 = vmul.f32 %v1203, %v3810
        %v3850 = vmul.f32 %v1201, %v3814
        %v3851 = vmul.f32 %v1202, %v3814
        %v3852 = vmul.f32 %v1203, %v3814
        %v3853 = vmul.f32 %v1201, %v3818
        %v3854 = vmul.f32 %v1202, %v3818
        %v3855 = vmul.f32 %v1203, %v3818
        %v3856 = vmul.f32 %v1204, %v3806
        %v3857 = vmul.f32 %v1205, %v3806
        %v3858 = vmul.f32 %v1206, %v3806
        %v3859 = vmul.f32 %v1204, %v3810
        %v3860 = vmul.f32 %v1205, %v3810
        %v3861 = vmul.f32 %v1206, %v3810
        %v3862 = vmul.f32 %v1204, %v3814
        %v3863 = vmul.f32 %v1205, %v3814
        %v3864 = vmul.f32 %v1206, %v3814
        %v3865 = vmul.f32 %v1204, %v3818
        %v3866 = vmul.f32 %v1205, %v3818
        %v3867 = vmul.f32 %v1206, %v3818
        %v3868 = vmul.f32 %v1207, %v3806
        %v3869 = vmul.f32 %v1208, %v3806
        %v3870 = vmul.f32 %v1209, %v3806
        %v3871 = vmul.f32 %v1207, %v3810
        %v3872 = vmul.f32 %v1208, %v3810
        %v3873 = vmul.f32 %v1209, %v3810
        %v3874 = vmul.f32 %v1207, %v3814
        %v3875 = vmul.f32 %v1208, %v3814
        %v3876 = vmul.f32 %v1209, %v3814
        %v3877 = vmul.f32 %v1207, %v3818
        %v3878 = vmul.f32 %v1208, %v3818
        %v3879 = vmul.f32 %v1209, %v3818
        %v3880 = vmul.f32 %v1210, %v3806
        %v3881 = vmul.f32 %v1211, %v3806
        %v3882 = vmul.f32 %v1212, %v3806
        %v3883 = vmul.f32 %v1210, %v3810
        %v3884 = vmul.f32 %v1211, %v3810
        %v3885 = vmul.f32 %v1212, %v3810
        %v3886 = vmul.f32 %v1210, %v3814
        %v3887 = vmul.f32 %v1211, %v3814
        %v3888 = vmul.f32 %v1212, %v3814
        %v3889 = vmul.f32 %v1210, %v3818
        %v3890 = vmul.f32 %v1211, %v3818
        %v3891 = vmul.f32 %v1212, %v3818
        %v3892 = vmul.f32 %v1213, %v3806
        %v3893 = vmul.f32 %v1214, %v3806
        %v3894 = vmul.f32 %v1215, %v3806
        %v3895 = vmul.f32 %v1213, %v3810
        %v3896 = vmul.f32 %v1214, %v3810
        %v3897 = vmul.f32 %v1215, %v3810
        %v3898 = vmul.f32 %v1213, %v3814
        %v3899 = vmul.f32 %v1214, %v3814
        %v3900 = vmul.f32 %v1215, %v3814
        %v3901 = vmul.f32 %v1213, %v3818
        %v3902 = vmul.f32 %v1214, %v3818
        %v3903 = vmul.f32 %v1215, %v3818
        %v3904 = vmul.f32 %v1216, %v3806
        %v3905 = vmul.f32 %v1217, %v3806
        %v3906 = vmul.f32 %v1218, %v3806
        %v3907 = vmul.f32 %v1216, %v3810
        %v3908 = vmul.f32 %v1217, %v3810
        %v3909 = vmul.f32 %v1218, %v3810
        %v3910 = vmul.f32 %v1216, %v3814
        %v3911 = vmul.f32 %v1217, %v3814
        %v3912 = vmul.f32 %v1218, %v3814
        %v3913 = vmul.f32 %v1216, %v3818
        %v3914 = vmul.f32 %v1217, %v3818
        %v3915 = vmul.f32 %v1218, %v3818
        %4012 = vrot.lane.b32.xlu0 %v3820, 126
        %v4013 = vpop.permute.xlu0 %4012
        %4014 = vrot.lane.b32.xlu0 %v3821, 126
        %v4015 = vpop.permute.xlu0 %4014
        %4016 = vrot.lane.b32.xlu0 %v3822, 126
        %v4017 = vpop.permute.xlu0 %4016
        %4018 = vrot.lane.b32.xlu0 %v3823, 126
        %v4019 = vpop.permute.xlu0 %4018
        %4020 = vrot.lane.b32.xlu0 %v3824, 126
        %v4021 = vpop.permute.xlu0 %4020
        %4022 = vrot.lane.b32.xlu0 %v3825, 126
        %v4023 = vpop.permute.xlu0 %4022
        %4024 = vrot.lane.b32.xlu0 %v3826, 126
        %v4025 = vpop.permute.xlu0 %4024
        %4026 = vrot.lane.b32.xlu0 %v3827, 126
        %v4027 = vpop.permute.xlu0 %4026
        %4028 = vrot.lane.b32.xlu0 %v3828, 126
        %v4029 = vpop.permute.xlu0 %4028
        %4030 = vrot.lane.b32.xlu0 %v3829, 126
        %v4031 = vpop.permute.xlu0 %4030
        %4032 = vrot.lane.b32.xlu0 %v3830, 126
        %v4033 = vpop.permute.xlu0 %4032
        %4034 = vrot.lane.b32.xlu0 %v3831, 126
        %v4035 = vpop.permute.xlu0 %4034
        %4036 = vrot.lane.b32.xlu0 %v3832, 126
        %v4037 = vpop.permute.xlu0 %4036
        %4038 = vrot.lane.b32.xlu0 %v3833, 126
        %v4039 = vpop.permute.xlu0 %4038
        %4040 = vrot.lane.b32.xlu0 %v3834, 126
        %v4041 = vpop.permute.xlu0 %4040
        %4042 = vrot.lane.b32.xlu0 %v3835, 126
        %v4043 = vpop.permute.xlu0 %4042
        %4044 = vrot.lane.b32.xlu0 %v3836, 126
        %v4045 = vpop.permute.xlu0 %4044
        %4046 = vrot.lane.b32.xlu0 %v3837, 126
        %v4047 = vpop.permute.xlu0 %4046
        %4048 = vrot.lane.b32.xlu0 %v3838, 126
        %v4049 = vpop.permute.xlu0 %4048
        %4050 = vrot.lane.b32.xlu0 %v3839, 126
        %v4051 = vpop.permute.xlu0 %4050
        %4052 = vrot.lane.b32.xlu0 %v3840, 126
        %v4053 = vpop.permute.xlu0 %4052
        %4054 = vrot.lane.b32.xlu0 %v3841, 126
        %v4055 = vpop.permute.xlu0 %4054
        %4056 = vrot.lane.b32.xlu0 %v3842, 126
        %v4057 = vpop.permute.xlu0 %4056
        %4058 = vrot.lane.b32.xlu0 %v3843, 126
        %v4059 = vpop.permute.xlu0 %4058
        %4060 = vrot.lane.b32.xlu0 %v3844, 126
        %v4061 = vpop.permute.xlu0 %4060
        %4062 = vrot.lane.b32.xlu0 %v3845, 126
        %v4063 = vpop.permute.xlu0 %4062
        %4064 = vrot.lane.b32.xlu0 %v3846, 126
        %v4065 = vpop.permute.xlu0 %4064
        %4066 = vrot.lane.b32.xlu0 %v3847, 126
        %v4067 = vpop.permute.xlu0 %4066
        %4068 = vrot.lane.b32.xlu0 %v3848, 126
        %v4069 = vpop.permute.xlu0 %4068
        %4070 = vrot.lane.b32.xlu0 %v3849, 126
        %v4071 = vpop.permute.xlu0 %4070
        %4072 = vrot.lane.b32.xlu0 %v3850, 126
        %v4073 = vpop.permute.xlu0 %4072
        %4074 = vrot.lane.b32.xlu0 %v3851, 126
        %v4075 = vpop.permute.xlu0 %4074
        %4076 = vrot.lane.b32.xlu0 %v3852, 126
        %v4077 = vpop.permute.xlu0 %4076
        %4078 = vrot.lane.b32.xlu0 %v3853, 126
        %v4079 = vpop.permute.xlu0 %4078
        %4080 = vrot.lane.b32.xlu0 %v3854, 126
        %v4081 = vpop.permute.xlu0 %4080
        %4082 = vrot.lane.b32.xlu0 %v3855, 126
        %v4083 = vpop.permute.xlu0 %4082
        %4084 = vrot.lane.b32.xlu0 %v3856, 126
        %v4085 = vpop.permute.xlu0 %4084
        %4086 = vrot.lane.b32.xlu0 %v3857, 126
        %v4087 = vpop.permute.xlu0 %4086
        %4088 = vrot.lane.b32.xlu0 %v3858, 126
        %v4089 = vpop.permute.xlu0 %4088
        %4090 = vrot.lane.b32.xlu0 %v3859, 126
        %v4091 = vpop.permute.xlu0 %4090
        %4092 = vrot.lane.b32.xlu0 %v3860, 126
        %v4093 = vpop.permute.xlu0 %4092
        %4094 = vrot.lane.b32.xlu0 %v3861, 126
        %v4095 = vpop.permute.xlu0 %4094
        %4096 = vrot.lane.b32.xlu0 %v3862, 126
        %v4097 = vpop.permute.xlu0 %4096
        %4098 = vrot.lane.b32.xlu0 %v3863, 126
        %v4099 = vpop.permute.xlu0 %4098
        %4100 = vrot.lane.b32.xlu0 %v3864, 126
        %v4101 = vpop.permute.xlu0 %4100
        %4102 = vrot.lane.b32.xlu0 %v3865, 126
        %v4103 = vpop.permute.xlu0 %4102
        %4104 = vrot.lane.b32.xlu0 %v3866, 126
        %v4105 = vpop.permute.xlu0 %4104
        %4106 = vrot.lane.b32.xlu0 %v3867, 126
        %v4107 = vpop.permute.xlu0 %4106
        %4108 = vrot.lane.b32.xlu0 %v3868, 126
        %v4109 = vpop.permute.xlu0 %4108
        %4110 = vrot.lane.b32.xlu0 %v3869, 126
        %v4111 = vpop.permute.xlu0 %4110
        %4112 = vrot.lane.b32.xlu0 %v3870, 126
        %v4113 = vpop.permute.xlu0 %4112
        %4114 = vrot.lane.b32.xlu0 %v3871, 126
        %v4115 = vpop.permute.xlu0 %4114
        %4116 = vrot.lane.b32.xlu0 %v3872, 126
        %v4117 = vpop.permute.xlu0 %4116
        %4118 = vrot.lane.b32.xlu0 %v3873, 126
        %v4119 = vpop.permute.xlu0 %4118
        %4120 = vrot.lane.b32.xlu0 %v3874, 126
        %v4121 = vpop.permute.xlu0 %4120
        %4122 = vrot.lane.b32.xlu0 %v3875, 126
        %v4123 = vpop.permute.xlu0 %4122
        %4124 = vrot.lane.b32.xlu0 %v3876, 126
        %v4125 = vpop.permute.xlu0 %4124
        %4126 = vrot.lane.b32.xlu0 %v3877, 126
        %v4127 = vpop.permute.xlu0 %4126
        %4128 = vrot.lane.b32.xlu0 %v3878, 126
        %v4129 = vpop.permute.xlu0 %4128
        %4130 = vrot.lane.b32.xlu0 %v3879, 126
        %v4131 = vpop.permute.xlu0 %4130
        %4132 = vrot.lane.b32.xlu0 %v3880, 126
        %v4133 = vpop.permute.xlu0 %4132
        %4134 = vrot.lane.b32.xlu0 %v3881, 126
        %v4135 = vpop.permute.xlu0 %4134
        %4136 = vrot.lane.b32.xlu0 %v3882, 126
        %v4137 = vpop.permute.xlu0 %4136
        %4138 = vrot.lane.b32.xlu0 %v3883, 126
        %v4139 = vpop.permute.xlu0 %4138
        %4140 = vrot.lane.b32.xlu0 %v3884, 126
        %v4141 = vpop.permute.xlu0 %4140
        %4142 = vrot.lane.b32.xlu0 %v3885, 126
        %v4143 = vpop.permute.xlu0 %4142
        %4144 = vrot.lane.b32.xlu0 %v3886, 126
        %v4145 = vpop.permute.xlu0 %4144
        %4146 = vrot.lane.b32.xlu0 %v3887, 126
        %v4147 = vpop.permute.xlu0 %4146
        %4148 = vrot.lane.b32.xlu0 %v3888, 126
        %v4149 = vpop.permute.xlu0 %4148
        %4150 = vrot.lane.b32.xlu0 %v3889, 126
        %v4151 = vpop.permute.xlu0 %4150
        %4152 = vrot.lane.b32.xlu0 %v3890, 126
        %v4153 = vpop.permute.xlu0 %4152
        %4154 = vrot.lane.b32.xlu0 %v3891, 126
        %v4155 = vpop.permute.xlu0 %4154
        %4156 = vrot.lane.b32.xlu0 %v3892, 126
        %v4157 = vpop.permute.xlu0 %4156
        %4158 = vrot.lane.b32.xlu0 %v3893, 126
        %v4159 = vpop.permute.xlu0 %4158
        %4160 = vrot.lane.b32.xlu0 %v3894, 126
        %v4161 = vpop.permute.xlu0 %4160
        %4162 = vrot.lane.b32.xlu0 %v3895, 126
        %v4163 = vpop.permute.xlu0 %4162
        %4164 = vrot.lane.b32.xlu0 %v3896, 126
        %v4165 = vpop.permute.xlu0 %4164
        %4166 = vrot.lane.b32.xlu0 %v3897, 126
        %v4167 = vpop.permute.xlu0 %4166
        %4168 = vrot.lane.b32.xlu0 %v3898, 126
        %v4169 = vpop.permute.xlu0 %4168
        %4170 = vrot.lane.b32.xlu0 %v3899, 126
        %v4171 = vpop.permute.xlu0 %4170
        %4172 = vrot.lane.b32.xlu0 %v3900, 126
        %v4173 = vpop.permute.xlu0 %4172
        %4174 = vrot.lane.b32.xlu0 %v3901, 126
        %v4175 = vpop.permute.xlu0 %4174
        %4176 = vrot.lane.b32.xlu0 %v3902, 126
        %v4177 = vpop.permute.xlu0 %4176
        %4178 = vrot.lane.b32.xlu0 %v3903, 126
        %v4179 = vpop.permute.xlu0 %4178
        %4180 = vrot.lane.b32.xlu0 %v3904, 126
        %v4181 = vpop.permute.xlu0 %4180
        %4182 = vrot.lane.b32.xlu0 %v3905, 126
        %v4183 = vpop.permute.xlu0 %4182
        %4184 = vrot.lane.b32.xlu0 %v3906, 126
        %v4185 = vpop.permute.xlu0 %4184
        %4186 = vrot.lane.b32.xlu0 %v3907, 126
        %v4187 = vpop.permute.xlu0 %4186
        %4188 = vrot.lane.b32.xlu0 %v3908, 126
        %v4189 = vpop.permute.xlu0 %4188
        %4190 = vrot.lane.b32.xlu0 %v3909, 126
        %v4191 = vpop.permute.xlu0 %4190
        %4192 = vrot.lane.b32.xlu0 %v3910, 126
        %v4193 = vpop.permute.xlu0 %4192
        %4194 = vrot.lane.b32.xlu0 %v3911, 126
        %v4195 = vpop.permute.xlu0 %4194
        %4196 = vrot.lane.b32.xlu0 %v3912, 126
        %v4197 = vpop.permute.xlu0 %4196
        %4198 = vrot.lane.b32.xlu0 %v3913, 126
        %v4199 = vpop.permute.xlu0 %4198
        %4200 = vrot.lane.b32.xlu0 %v3914, 126
        %v4201 = vpop.permute.xlu0 %4200
        %4202 = vrot.lane.b32.xlu0 %v3915, 126
        %v4203 = vpop.permute.xlu0 %4202
        %vm4204 = vcmask 1031168
        %v4205 = vsel %vm4204, %v4013, %v4015
        %v4206 = vsel %vm4204, %v4015, %v4017
        %v4207 = vsel %vm4204, %v4019, %v4021
        %v4208 = vsel %vm4204, %v4021, %v4023
        %v4209 = vsel %vm4204, %v4025, %v4027
        %v4210 = vsel %vm4204, %v4027, %v4029
        %v4211 = vsel %vm4204, %v4031, %v4033
        %v4212 = vsel %vm4204, %v4033, %v4035
        %v4213 = vsel %vm4204, %v4037, %v4039
        %v4214 = vsel %vm4204, %v4039, %v4041
        %v4215 = vsel %vm4204, %v4043, %v4045
        %v4216 = vsel %vm4204, %v4045, %v4047
        %v4217 = vsel %vm4204, %v4049, %v4051
        %v4218 = vsel %vm4204, %v4051, %v4053
        %v4219 = vsel %vm4204, %v4055, %v4057
        %v4220 = vsel %vm4204, %v4057, %v4059
        %v4221 = vsel %vm4204, %v4061, %v4063
        %v4222 = vsel %vm4204, %v4063, %v4065
        %v4223 = vsel %vm4204, %v4067, %v4069
        %v4224 = vsel %vm4204, %v4069, %v4071
        %v4225 = vsel %vm4204, %v4073, %v4075
        %v4226 = vsel %vm4204, %v4075, %v4077
        %v4227 = vsel %vm4204, %v4079, %v4081
        %v4228 = vsel %vm4204, %v4081, %v4083
        %v4229 = vsel %vm4204, %v4085, %v4087
        %v4230 = vsel %vm4204, %v4087, %v4089
        %v4231 = vsel %vm4204, %v4091, %v4093
        %v4232 = vsel %vm4204, %v4093, %v4095
        %v4233 = vsel %vm4204, %v4097, %v4099
        %v4234 = vsel %vm4204, %v4099, %v4101
        %v4235 = vsel %vm4204, %v4103, %v4105
        %v4236 = vsel %vm4204, %v4105, %v4107
        %v4237 = vsel %vm4204, %v4109, %v4111
        %v4238 = vsel %vm4204, %v4111, %v4113
        %v4239 = vsel %vm4204, %v4115, %v4117
        %v4240 = vsel %vm4204, %v4117, %v4119
        %v4241 = vsel %vm4204, %v4121, %v4123
        %v4242 = vsel %vm4204, %v4123, %v4125
        %v4243 = vsel %vm4204, %v4127, %v4129
        %v4244 = vsel %vm4204, %v4129, %v4131
        %v4245 = vsel %vm4204, %v4133, %v4135
        %v4246 = vsel %vm4204, %v4135, %v4137
        %v4247 = vsel %vm4204, %v4139, %v4141
        %v4248 = vsel %vm4204, %v4141, %v4143
        %v4249 = vsel %vm4204, %v4145, %v4147
        %v4250 = vsel %vm4204, %v4147, %v4149
        %v4251 = vsel %vm4204, %v4151, %v4153
        %v4252 = vsel %vm4204, %v4153, %v4155
        %v4253 = vsel %vm4204, %v4157, %v4159
        %v4254 = vsel %vm4204, %v4159, %v4161
        %v4255 = vsel %vm4204, %v4163, %v4165
        %v4256 = vsel %vm4204, %v4165, %v4167
        %v4257 = vsel %vm4204, %v4169, %v4171
        %v4258 = vsel %vm4204, %v4171, %v4173
        %v4259 = vsel %vm4204, %v4175, %v4177
        %v4260 = vsel %vm4204, %v4177, %v4179
        %v4261 = vsel %vm4204, %v4181, %v4183
        %v4262 = vsel %vm4204, %v4183, %v4185
        %v4263 = vsel %vm4204, %v4187, %v4189
        %v4264 = vsel %vm4204, %v4189, %v4191
        %v4265 = vsel %vm4204, %v4193, %v4195
        %v4266 = vsel %vm4204, %v4195, %v4197
        %v4267 = vsel %vm4204, %v4199, %v4201
        %v4268 = vsel %vm4204, %v4201, %v4203
        %v4333 = vadd.f32 %v3740, %v4205
        %v4334 = vadd.f32 %v3741, %v4206
        %v4335 = vadd.f32 %v3742, %v4207
        %v4336 = vadd.f32 %v3743, %v4208
        %v4337 = vadd.f32 %v3744, %v4209
        %v4338 = vadd.f32 %v3745, %v4210
        %v4339 = vadd.f32 %v3746, %v4211
        %v4340 = vadd.f32 %v3747, %v4212
        %v4341 = vadd.f32 %v3748, %v4213
        %v4342 = vadd.f32 %v3749, %v4214
        %v4343 = vadd.f32 %v3750, %v4215
        %v4344 = vadd.f32 %v3751, %v4216
        %v4345 = vadd.f32 %v3752, %v4217
        %v4346 = vadd.f32 %v3753, %v4218
        %v4347 = vadd.f32 %v3754, %v4219
        %v4348 = vadd.f32 %v3755, %v4220
        %v4349 = vadd.f32 %v3756, %v4221
        %v4350 = vadd.f32 %v3757, %v4222
        %v4351 = vadd.f32 %v3758, %v4223
        %v4352 = vadd.f32 %v3759, %v4224
        %v4353 = vadd.f32 %v3760, %v4225
        %v4354 = vadd.f32 %v3761, %v4226
        %v4355 = vadd.f32 %v3762, %v4227
        %v4356 = vadd.f32 %v3763, %v4228
        %v4357 = vadd.f32 %v3764, %v4229
        %v4358 = vadd.f32 %v3765, %v4230
        %v4359 = vadd.f32 %v3766, %v4231
        %v4360 = vadd.f32 %v3767, %v4232
        %v4361 = vadd.f32 %v3768, %v4233
        %v4362 = vadd.f32 %v3769, %v4234
        %v4363 = vadd.f32 %v3770, %v4235
        %v4364 = vadd.f32 %v3771, %v4236
        %v4365 = vadd.f32 %v3772, %v4237
        %v4366 = vadd.f32 %v3773, %v4238
        %v4367 = vadd.f32 %v3774, %v4239
        %v4368 = vadd.f32 %v3775, %v4240
        %v4369 = vadd.f32 %v3776, %v4241
        %v4370 = vadd.f32 %v3777, %v4242
        %v4371 = vadd.f32 %v3778, %v4243
        %v4372 = vadd.f32 %v3779, %v4244
        %v4373 = vadd.f32 %v3780, %v4245
        %v4374 = vadd.f32 %v3781, %v4246
        %v4375 = vadd.f32 %v3782, %v4247
        %v4376 = vadd.f32 %v3783, %v4248
        %v4377 = vadd.f32 %v3784, %v4249
        %v4378 = vadd.f32 %v3785, %v4250
        %v4379 = vadd.f32 %v3786, %v4251
        %v4380 = vadd.f32 %v3787, %v4252
        %v4381 = vadd.f32 %v3788, %v4253
        %v4382 = vadd.f32 %v3789, %v4254
        %v4383 = vadd.f32 %v3790, %v4255
        %v4384 = vadd.f32 %v3791, %v4256
        %v4385 = vadd.f32 %v3792, %v4257
        %v4386 = vadd.f32 %v3793, %v4258
        %v4387 = vadd.f32 %v3794, %v4259
        %v4388 = vadd.f32 %v3795, %v4260
        %v4389 = vadd.f32 %v3796, %v4261
        %v4390 = vadd.f32 %v3797, %v4262
        %v4391 = vadd.f32 %v3798, %v4263
        %v4392 = vadd.f32 %v3799, %v4264
        %v4393 = vadd.f32 %v3800, %v4265
        %v4394 = vadd.f32 %v3801, %v4266
        %v4395 = vadd.f32 %v3802, %v4267
        %v4396 = vadd.f32 %v3803, %v4268
        %4397 = vset.pattern.permute.xlu0 9
        %4398 = vperm.xlu0 %4397, %v387
        %v4399 = vpop.permute.xlu0 %4398
        %4401 = vset.pattern.permute.xlu0 9
        %4402 = vperm.xlu0 %4401, %v388
        %v4403 = vpop.permute.xlu0 %4402
        %4405 = vset.pattern.permute.xlu0 9
        %4406 = vperm.xlu0 %4405, %v389
        %v4407 = vpop.permute.xlu0 %4406
        %4409 = vset.pattern.permute.xlu0 9
        %4410 = vperm.xlu0 %4409, %v390
        %v4411 = vpop.permute.xlu0 %4410
        %v4413 = vmul.f32 %v1860, %v4399
        %v4414 = vmul.f32 %v1861, %v4399
        %v4415 = vmul.f32 %v1862, %v4399
        %v4416 = vmul.f32 %v1860, %v4403
        %v4417 = vmul.f32 %v1861, %v4403
        %v4418 = vmul.f32 %v1862, %v4403
        %v4419 = vmul.f32 %v1860, %v4407
        %v4420 = vmul.f32 %v1861, %v4407
        %v4421 = vmul.f32 %v1862, %v4407
        %v4422 = vmul.f32 %v1860, %v4411
        %v4423 = vmul.f32 %v1861, %v4411
        %v4424 = vmul.f32 %v1862, %v4411
        %v4425 = vmul.f32 %v1863, %v4399
        %v4426 = vmul.f32 %v1864, %v4399
        %v4427 = vmul.f32 %v1865, %v4399
        %v4428 = vmul.f32 %v1863, %v4403
        %v4429 = vmul.f32 %v1864, %v4403
        %v4430 = vmul.f32 %v1865, %v4403
        %v4431 = vmul.f32 %v1863, %v4407
        %v4432 = vmul.f32 %v1864, %v4407
        %v4433 = vmul.f32 %v1865, %v4407
        %v4434 = vmul.f32 %v1863, %v4411
        %v4435 = vmul.f32 %v1864, %v4411
        %v4436 = vmul.f32 %v1865, %v4411
        %v4437 = vmul.f32 %v1866, %v4399
        %v4438 = vmul.f32 %v1867, %v4399
        %v4439 = vmul.f32 %v1868, %v4399
        %v4440 = vmul.f32 %v1866, %v4403
        %v4441 = vmul.f32 %v1867, %v4403
        %v4442 = vmul.f32 %v1868, %v4403
        %v4443 = vmul.f32 %v1866, %v4407
        %v4444 = vmul.f32 %v1867, %v4407
        %v4445 = vmul.f32 %v1868, %v4407
        %v4446 = vmul.f32 %v1866, %v4411
        %v4447 = vmul.f32 %v1867, %v4411
        %v4448 = vmul.f32 %v1868, %v4411
        %v4449 = vmul.f32 %v1869, %v4399
        %v4450 = vmul.f32 %v1870, %v4399
        %v4451 = vmul.f32 %v1871, %v4399
        %v4452 = vmul.f32 %v1869, %v4403
        %v4453 = vmul.f32 %v1870, %v4403
        %v4454 = vmul.f32 %v1871, %v4403
        %v4455 = vmul.f32 %v1869, %v4407
        %v4456 = vmul.f32 %v1870, %v4407
        %v4457 = vmul.f32 %v1871, %v4407
        %v4458 = vmul.f32 %v1869, %v4411
        %v4459 = vmul.f32 %v1870, %v4411
        %v4460 = vmul.f32 %v1871, %v4411
        %v4461 = vmul.f32 %v1872, %v4399
        %v4462 = vmul.f32 %v1873, %v4399
        %v4463 = vmul.f32 %v1874, %v4399
        %v4464 = vmul.f32 %v1872, %v4403
        %v4465 = vmul.f32 %v1873, %v4403
        %v4466 = vmul.f32 %v1874, %v4403
        %v4467 = vmul.f32 %v1872, %v4407
        %v4468 = vmul.f32 %v1873, %v4407
        %v4469 = vmul.f32 %v1874, %v4407
        %v4470 = vmul.f32 %v1872, %v4411
        %v4471 = vmul.f32 %v1873, %v4411
        %v4472 = vmul.f32 %v1874, %v4411
        %v4473 = vmul.f32 %v1875, %v4399
        %v4474 = vmul.f32 %v1876, %v4399
        %v4475 = vmul.f32 %v1877, %v4399
        %v4476 = vmul.f32 %v1875, %v4403
        %v4477 = vmul.f32 %v1876, %v4403
        %v4478 = vmul.f32 %v1877, %v4403
        %v4479 = vmul.f32 %v1875, %v4407
        %v4480 = vmul.f32 %v1876, %v4407
        %v4481 = vmul.f32 %v1877, %v4407
        %v4482 = vmul.f32 %v1875, %v4411
        %v4483 = vmul.f32 %v1876, %v4411
        %v4484 = vmul.f32 %v1877, %v4411
        %v4485 = vmul.f32 %v1878, %v4399
        %v4486 = vmul.f32 %v1879, %v4399
        %v4487 = vmul.f32 %v1880, %v4399
        %v4488 = vmul.f32 %v1878, %v4403
        %v4489 = vmul.f32 %v1879, %v4403
        %v4490 = vmul.f32 %v1880, %v4403
        %v4491 = vmul.f32 %v1878, %v4407
        %v4492 = vmul.f32 %v1879, %v4407
        %v4493 = vmul.f32 %v1880, %v4407
        %v4494 = vmul.f32 %v1878, %v4411
        %v4495 = vmul.f32 %v1879, %v4411
        %v4496 = vmul.f32 %v1880, %v4411
        %v4497 = vmul.f32 %v1881, %v4399
        %v4498 = vmul.f32 %v1882, %v4399
        %v4499 = vmul.f32 %v1883, %v4399
        %v4500 = vmul.f32 %v1881, %v4403
        %v4501 = vmul.f32 %v1882, %v4403
        %v4502 = vmul.f32 %v1883, %v4403
        %v4503 = vmul.f32 %v1881, %v4407
        %v4504 = vmul.f32 %v1882, %v4407
        %v4505 = vmul.f32 %v1883, %v4407
        %v4506 = vmul.f32 %v1881, %v4411
        %v4507 = vmul.f32 %v1882, %v4411
        %v4508 = vmul.f32 %v1883, %v4411
        %4605 = vrot.lane.b32.xlu0 %v4413, 126
        %v4606 = vpop.permute.xlu0 %4605
        %4607 = vrot.lane.b32.xlu0 %v4414, 126
        %v4608 = vpop.permute.xlu0 %4607
        %4609 = vrot.lane.b32.xlu0 %v4415, 126
        %v4610 = vpop.permute.xlu0 %4609
        %4611 = vrot.lane.b32.xlu0 %v4416, 126
        %v4612 = vpop.permute.xlu0 %4611
        %4613 = vrot.lane.b32.xlu0 %v4417, 126
        %v4614 = vpop.permute.xlu0 %4613
        %4615 = vrot.lane.b32.xlu0 %v4418, 126
        %v4616 = vpop.permute.xlu0 %4615
        %4617 = vrot.lane.b32.xlu0 %v4419, 126
        %v4618 = vpop.permute.xlu0 %4617
        %4619 = vrot.lane.b32.xlu0 %v4420, 126
        %v4620 = vpop.permute.xlu0 %4619
        %4621 = vrot.lane.b32.xlu0 %v4421, 126
        %v4622 = vpop.permute.xlu0 %4621
        %4623 = vrot.lane.b32.xlu0 %v4422, 126
        %v4624 = vpop.permute.xlu0 %4623
        %4625 = vrot.lane.b32.xlu0 %v4423, 126
        %v4626 = vpop.permute.xlu0 %4625
        %4627 = vrot.lane.b32.xlu0 %v4424, 126
        %v4628 = vpop.permute.xlu0 %4627
        %4629 = vrot.lane.b32.xlu0 %v4425, 126
        %v4630 = vpop.permute.xlu0 %4629
        %4631 = vrot.lane.b32.xlu0 %v4426, 126
        %v4632 = vpop.permute.xlu0 %4631
        %4633 = vrot.lane.b32.xlu0 %v4427, 126
        %v4634 = vpop.permute.xlu0 %4633
        %4635 = vrot.lane.b32.xlu0 %v4428, 126
        %v4636 = vpop.permute.xlu0 %4635
        %4637 = vrot.lane.b32.xlu0 %v4429, 126
        %v4638 = vpop.permute.xlu0 %4637
        %4639 = vrot.lane.b32.xlu0 %v4430, 126
        %v4640 = vpop.permute.xlu0 %4639
        %4641 = vrot.lane.b32.xlu0 %v4431, 126
        %v4642 = vpop.permute.xlu0 %4641
        %4643 = vrot.lane.b32.xlu0 %v4432, 126
        %v4644 = vpop.permute.xlu0 %4643
        %4645 = vrot.lane.b32.xlu0 %v4433, 126
        %v4646 = vpop.permute.xlu0 %4645
        %4647 = vrot.lane.b32.xlu0 %v4434, 126
        %v4648 = vpop.permute.xlu0 %4647
        %4649 = vrot.lane.b32.xlu0 %v4435, 126
        %v4650 = vpop.permute.xlu0 %4649
        %4651 = vrot.lane.b32.xlu0 %v4436, 126
        %v4652 = vpop.permute.xlu0 %4651
        %4653 = vrot.lane.b32.xlu0 %v4437, 126
        %v4654 = vpop.permute.xlu0 %4653
        %4655 = vrot.lane.b32.xlu0 %v4438, 126
        %v4656 = vpop.permute.xlu0 %4655
        %4657 = vrot.lane.b32.xlu0 %v4439, 126
        %v4658 = vpop.permute.xlu0 %4657
        %4659 = vrot.lane.b32.xlu0 %v4440, 126
        %v4660 = vpop.permute.xlu0 %4659
        %4661 = vrot.lane.b32.xlu0 %v4441, 126
        %v4662 = vpop.permute.xlu0 %4661
        %4663 = vrot.lane.b32.xlu0 %v4442, 126
        %v4664 = vpop.permute.xlu0 %4663
        %4665 = vrot.lane.b32.xlu0 %v4443, 126
        %v4666 = vpop.permute.xlu0 %4665
        %4667 = vrot.lane.b32.xlu0 %v4444, 126
        %v4668 = vpop.permute.xlu0 %4667
        %4669 = vrot.lane.b32.xlu0 %v4445, 126
        %v4670 = vpop.permute.xlu0 %4669
        %4671 = vrot.lane.b32.xlu0 %v4446, 126
        %v4672 = vpop.permute.xlu0 %4671
        %4673 = vrot.lane.b32.xlu0 %v4447, 126
        %v4674 = vpop.permute.xlu0 %4673
        %4675 = vrot.lane.b32.xlu0 %v4448, 126
        %v4676 = vpop.permute.xlu0 %4675
        %4677 = vrot.lane.b32.xlu0 %v4449, 126
        %v4678 = vpop.permute.xlu0 %4677
        %4679 = vrot.lane.b32.xlu0 %v4450, 126
        %v4680 = vpop.permute.xlu0 %4679
        %4681 = vrot.lane.b32.xlu0 %v4451, 126
        %v4682 = vpop.permute.xlu0 %4681
        %4683 = vrot.lane.b32.xlu0 %v4452, 126
        %v4684 = vpop.permute.xlu0 %4683
        %4685 = vrot.lane.b32.xlu0 %v4453, 126
        %v4686 = vpop.permute.xlu0 %4685
        %4687 = vrot.lane.b32.xlu0 %v4454, 126
        %v4688 = vpop.permute.xlu0 %4687
        %4689 = vrot.lane.b32.xlu0 %v4455, 126
        %v4690 = vpop.permute.xlu0 %4689
        %4691 = vrot.lane.b32.xlu0 %v4456, 126
        %v4692 = vpop.permute.xlu0 %4691
        %4693 = vrot.lane.b32.xlu0 %v4457, 126
        %v4694 = vpop.permute.xlu0 %4693
        %4695 = vrot.lane.b32.xlu0 %v4458, 126
        %v4696 = vpop.permute.xlu0 %4695
        %4697 = vrot.lane.b32.xlu0 %v4459, 126
        %v4698 = vpop.permute.xlu0 %4697
        %4699 = vrot.lane.b32.xlu0 %v4460, 126
        %v4700 = vpop.permute.xlu0 %4699
        %4701 = vrot.lane.b32.xlu0 %v4461, 126
        %v4702 = vpop.permute.xlu0 %4701
        %4703 = vrot.lane.b32.xlu0 %v4462, 126
        %v4704 = vpop.permute.xlu0 %4703
        %4705 = vrot.lane.b32.xlu0 %v4463, 126
        %v4706 = vpop.permute.xlu0 %4705
        %4707 = vrot.lane.b32.xlu0 %v4464, 126
        %v4708 = vpop.permute.xlu0 %4707
        %4709 = vrot.lane.b32.xlu0 %v4465, 126
        %v4710 = vpop.permute.xlu0 %4709
        %4711 = vrot.lane.b32.xlu0 %v4466, 126
        %v4712 = vpop.permute.xlu0 %4711
        %4713 = vrot.lane.b32.xlu0 %v4467, 126
        %v4714 = vpop.permute.xlu0 %4713
        %4715 = vrot.lane.b32.xlu0 %v4468, 126
        %v4716 = vpop.permute.xlu0 %4715
        %4717 = vrot.lane.b32.xlu0 %v4469, 126
        %v4718 = vpop.permute.xlu0 %4717
        %4719 = vrot.lane.b32.xlu0 %v4470, 126
        %v4720 = vpop.permute.xlu0 %4719
        %4721 = vrot.lane.b32.xlu0 %v4471, 126
        %v4722 = vpop.permute.xlu0 %4721
        %4723 = vrot.lane.b32.xlu0 %v4472, 126
        %v4724 = vpop.permute.xlu0 %4723
        %4725 = vrot.lane.b32.xlu0 %v4473, 126
        %v4726 = vpop.permute.xlu0 %4725
        %4727 = vrot.lane.b32.xlu0 %v4474, 126
        %v4728 = vpop.permute.xlu0 %4727
        %4729 = vrot.lane.b32.xlu0 %v4475, 126
        %v4730 = vpop.permute.xlu0 %4729
        %4731 = vrot.lane.b32.xlu0 %v4476, 126
        %v4732 = vpop.permute.xlu0 %4731
        %4733 = vrot.lane.b32.xlu0 %v4477, 126
        %v4734 = vpop.permute.xlu0 %4733
        %4735 = vrot.lane.b32.xlu0 %v4478, 126
        %v4736 = vpop.permute.xlu0 %4735
        %4737 = vrot.lane.b32.xlu0 %v4479, 126
        %v4738 = vpop.permute.xlu0 %4737
        %4739 = vrot.lane.b32.xlu0 %v4480, 126
        %v4740 = vpop.permute.xlu0 %4739
        %4741 = vrot.lane.b32.xlu0 %v4481, 126
        %v4742 = vpop.permute.xlu0 %4741
        %4743 = vrot.lane.b32.xlu0 %v4482, 126
        %v4744 = vpop.permute.xlu0 %4743
        %4745 = vrot.lane.b32.xlu0 %v4483, 126
        %v4746 = vpop.permute.xlu0 %4745
        %4747 = vrot.lane.b32.xlu0 %v4484, 126
        %v4748 = vpop.permute.xlu0 %4747
        %4749 = vrot.lane.b32.xlu0 %v4485, 126
        %v4750 = vpop.permute.xlu0 %4749
        %4751 = vrot.lane.b32.xlu0 %v4486, 126
        %v4752 = vpop.permute.xlu0 %4751
        %4753 = vrot.lane.b32.xlu0 %v4487, 126
        %v4754 = vpop.permute.xlu0 %4753
        %4755 = vrot.lane.b32.xlu0 %v4488, 126
        %v4756 = vpop.permute.xlu0 %4755
        %4757 = vrot.lane.b32.xlu0 %v4489, 126
        %v4758 = vpop.permute.xlu0 %4757
        %4759 = vrot.lane.b32.xlu0 %v4490, 126
        %v4760 = vpop.permute.xlu0 %4759
        %4761 = vrot.lane.b32.xlu0 %v4491, 126
        %v4762 = vpop.permute.xlu0 %4761
        %4763 = vrot.lane.b32.xlu0 %v4492, 126
        %v4764 = vpop.permute.xlu0 %4763
        %4765 = vrot.lane.b32.xlu0 %v4493, 126
        %v4766 = vpop.permute.xlu0 %4765
        %4767 = vrot.lane.b32.xlu0 %v4494, 126
        %v4768 = vpop.permute.xlu0 %4767
        %4769 = vrot.lane.b32.xlu0 %v4495, 126
        %v4770 = vpop.permute.xlu0 %4769
        %4771 = vrot.lane.b32.xlu0 %v4496, 126
        %v4772 = vpop.permute.xlu0 %4771
        %4773 = vrot.lane.b32.xlu0 %v4497, 126
        %v4774 = vpop.permute.xlu0 %4773
        %4775 = vrot.lane.b32.xlu0 %v4498, 126
        %v4776 = vpop.permute.xlu0 %4775
        %4777 = vrot.lane.b32.xlu0 %v4499, 126
        %v4778 = vpop.permute.xlu0 %4777
        %4779 = vrot.lane.b32.xlu0 %v4500, 126
        %v4780 = vpop.permute.xlu0 %4779
        %4781 = vrot.lane.b32.xlu0 %v4501, 126
        %v4782 = vpop.permute.xlu0 %4781
        %4783 = vrot.lane.b32.xlu0 %v4502, 126
        %v4784 = vpop.permute.xlu0 %4783
        %4785 = vrot.lane.b32.xlu0 %v4503, 126
        %v4786 = vpop.permute.xlu0 %4785
        %4787 = vrot.lane.b32.xlu0 %v4504, 126
        %v4788 = vpop.permute.xlu0 %4787
        %4789 = vrot.lane.b32.xlu0 %v4505, 126
        %v4790 = vpop.permute.xlu0 %4789
        %4791 = vrot.lane.b32.xlu0 %v4506, 126
        %v4792 = vpop.permute.xlu0 %4791
        %4793 = vrot.lane.b32.xlu0 %v4507, 126
        %v4794 = vpop.permute.xlu0 %4793
        %4795 = vrot.lane.b32.xlu0 %v4508, 126
        %v4796 = vpop.permute.xlu0 %4795
        %v4797 = vsel %vm4204, %v4606, %v4608
        %v4798 = vsel %vm4204, %v4608, %v4610
        %v4799 = vsel %vm4204, %v4612, %v4614
        %v4800 = vsel %vm4204, %v4614, %v4616
        %v4801 = vsel %vm4204, %v4618, %v4620
        %v4802 = vsel %vm4204, %v4620, %v4622
        %v4803 = vsel %vm4204, %v4624, %v4626
        %v4804 = vsel %vm4204, %v4626, %v4628
        %v4805 = vsel %vm4204, %v4630, %v4632
        %v4806 = vsel %vm4204, %v4632, %v4634
        %v4807 = vsel %vm4204, %v4636, %v4638
        %v4808 = vsel %vm4204, %v4638, %v4640
        %v4809 = vsel %vm4204, %v4642, %v4644
        %v4810 = vsel %vm4204, %v4644, %v4646
        %v4811 = vsel %vm4204, %v4648, %v4650
        %v4812 = vsel %vm4204, %v4650, %v4652
        %v4813 = vsel %vm4204, %v4654, %v4656
        %v4814 = vsel %vm4204, %v4656, %v4658
        %v4815 = vsel %vm4204, %v4660, %v4662
        %v4816 = vsel %vm4204, %v4662, %v4664
        %v4817 = vsel %vm4204, %v4666, %v4668
        %v4818 = vsel %vm4204, %v4668, %v4670
        %v4819 = vsel %vm4204, %v4672, %v4674
        %v4820 = vsel %vm4204, %v4674, %v4676
        %v4821 = vsel %vm4204, %v4678, %v4680
        %v4822 = vsel %vm4204, %v4680, %v4682
        %v4823 = vsel %vm4204, %v4684, %v4686
        %v4824 = vsel %vm4204, %v4686, %v4688
        %v4825 = vsel %vm4204, %v4690, %v4692
        %v4826 = vsel %vm4204, %v4692, %v4694
        %v4827 = vsel %vm4204, %v4696, %v4698
        %v4828 = vsel %vm4204, %v4698, %v4700
        %v4829 = vsel %vm4204, %v4702, %v4704
        %v4830 = vsel %vm4204, %v4704, %v4706
        %v4831 = vsel %vm4204, %v4708, %v4710
        %v4832 = vsel %vm4204, %v4710, %v4712
        %v4833 = vsel %vm4204, %v4714, %v4716
        %v4834 = vsel %vm4204, %v4716, %v4718
        %v4835 = vsel %vm4204, %v4720, %v4722
        %v4836 = vsel %vm4204, %v4722, %v4724
        %v4837 = vsel %vm4204, %v4726, %v4728
        %v4838 = vsel %vm4204, %v4728, %v4730
        %v4839 = vsel %vm4204, %v4732, %v4734
        %v4840 = vsel %vm4204, %v4734, %v4736
        %v4841 = vsel %vm4204, %v4738, %v4740
        %v4842 = vsel %vm4204, %v4740, %v4742
        %v4843 = vsel %vm4204, %v4744, %v4746
        %v4844 = vsel %vm4204, %v4746, %v4748
        %v4845 = vsel %vm4204, %v4750, %v4752
        %v4846 = vsel %vm4204, %v4752, %v4754
        %v4847 = vsel %vm4204, %v4756, %v4758
        %v4848 = vsel %vm4204, %v4758, %v4760
        %v4849 = vsel %vm4204, %v4762, %v4764
        %v4850 = vsel %vm4204, %v4764, %v4766
        %v4851 = vsel %vm4204, %v4768, %v4770
        %v4852 = vsel %vm4204, %v4770, %v4772
        %v4853 = vsel %vm4204, %v4774, %v4776
        %v4854 = vsel %vm4204, %v4776, %v4778
        %v4855 = vsel %vm4204, %v4780, %v4782
        %v4856 = vsel %vm4204, %v4782, %v4784
        %v4857 = vsel %vm4204, %v4786, %v4788
        %v4858 = vsel %vm4204, %v4788, %v4790
        %v4859 = vsel %vm4204, %v4792, %v4794
        %v4860 = vsel %vm4204, %v4794, %v4796
        %v4925 = vadd.f32 %v4333, %v4797
        %v4926 = vadd.f32 %v4334, %v4798
        %v4927 = vadd.f32 %v4335, %v4799
        %v4928 = vadd.f32 %v4336, %v4800
        %v4929 = vadd.f32 %v4337, %v4801
        %v4930 = vadd.f32 %v4338, %v4802
        %v4931 = vadd.f32 %v4339, %v4803
        %v4932 = vadd.f32 %v4340, %v4804
        %v4933 = vadd.f32 %v4341, %v4805
        %v4934 = vadd.f32 %v4342, %v4806
        %v4935 = vadd.f32 %v4343, %v4807
        %v4936 = vadd.f32 %v4344, %v4808
        %v4937 = vadd.f32 %v4345, %v4809
        %v4938 = vadd.f32 %v4346, %v4810
        %v4939 = vadd.f32 %v4347, %v4811
        %v4940 = vadd.f32 %v4348, %v4812
        %v4941 = vadd.f32 %v4349, %v4813
        %v4942 = vadd.f32 %v4350, %v4814
        %v4943 = vadd.f32 %v4351, %v4815
        %v4944 = vadd.f32 %v4352, %v4816
        %v4945 = vadd.f32 %v4353, %v4817
        %v4946 = vadd.f32 %v4354, %v4818
        %v4947 = vadd.f32 %v4355, %v4819
        %v4948 = vadd.f32 %v4356, %v4820
        %v4949 = vadd.f32 %v4357, %v4821
        %v4950 = vadd.f32 %v4358, %v4822
        %v4951 = vadd.f32 %v4359, %v4823
        %v4952 = vadd.f32 %v4360, %v4824
        %v4953 = vadd.f32 %v4361, %v4825
        %v4954 = vadd.f32 %v4362, %v4826
        %v4955 = vadd.f32 %v4363, %v4827
        %v4956 = vadd.f32 %v4364, %v4828
        %v4957 = vadd.f32 %v4365, %v4829
        %v4958 = vadd.f32 %v4366, %v4830
        %v4959 = vadd.f32 %v4367, %v4831
        %v4960 = vadd.f32 %v4368, %v4832
        %v4961 = vadd.f32 %v4369, %v4833
        %v4962 = vadd.f32 %v4370, %v4834
        %v4963 = vadd.f32 %v4371, %v4835
        %v4964 = vadd.f32 %v4372, %v4836
        %v4965 = vadd.f32 %v4373, %v4837
        %v4966 = vadd.f32 %v4374, %v4838
        %v4967 = vadd.f32 %v4375, %v4839
        %v4968 = vadd.f32 %v4376, %v4840
        %v4969 = vadd.f32 %v4377, %v4841
        %v4970 = vadd.f32 %v4378, %v4842
        %v4971 = vadd.f32 %v4379, %v4843
        %v4972 = vadd.f32 %v4380, %v4844
        %v4973 = vadd.f32 %v4381, %v4845
        %v4974 = vadd.f32 %v4382, %v4846
        %v4975 = vadd.f32 %v4383, %v4847
        %v4976 = vadd.f32 %v4384, %v4848
        %v4977 = vadd.f32 %v4385, %v4849
        %v4978 = vadd.f32 %v4386, %v4850
        %v4979 = vadd.f32 %v4387, %v4851
        %v4980 = vadd.f32 %v4388, %v4852
        %v4981 = vadd.f32 %v4389, %v4853
        %v4982 = vadd.f32 %v4390, %v4854
        %v4983 = vadd.f32 %v4391, %v4855
        %v4984 = vadd.f32 %v4392, %v4856
        %v4985 = vadd.f32 %v4393, %v4857
        %v4986 = vadd.f32 %v4394, %v4858
        %v4987 = vadd.f32 %v4395, %v4859
        %v4988 = vadd.f32 %v4396, %v4860
        %4989 = vset.pattern.permute.xlu0 10
        %4990 = vperm.xlu0 %4989, %v387
        %v4991 = vpop.permute.xlu0 %4990
        %4993 = vset.pattern.permute.xlu0 10
        %4994 = vperm.xlu0 %4993, %v388
        %v4995 = vpop.permute.xlu0 %4994
        %4997 = vset.pattern.permute.xlu0 10
        %4998 = vperm.xlu0 %4997, %v389
        %v4999 = vpop.permute.xlu0 %4998
        %5001 = vset.pattern.permute.xlu0 10
        %5002 = vperm.xlu0 %5001, %v390
        %v5003 = vpop.permute.xlu0 %5002
        %v5005 = vmul.f32 %v2524, %v4991
        %v5006 = vmul.f32 %v2525, %v4991
        %v5007 = vmul.f32 %v2526, %v4991
        %v5008 = vmul.f32 %v2524, %v4995
        %v5009 = vmul.f32 %v2525, %v4995
        %v5010 = vmul.f32 %v2526, %v4995
        %v5011 = vmul.f32 %v2524, %v4999
        %v5012 = vmul.f32 %v2525, %v4999
        %v5013 = vmul.f32 %v2526, %v4999
        %v5014 = vmul.f32 %v2524, %v5003
        %v5015 = vmul.f32 %v2525, %v5003
        %v5016 = vmul.f32 %v2526, %v5003
        %v5017 = vmul.f32 %v2527, %v4991
        %v5018 = vmul.f32 %v2528, %v4991
        %v5019 = vmul.f32 %v2529, %v4991
        %v5020 = vmul.f32 %v2527, %v4995
        %v5021 = vmul.f32 %v2528, %v4995
        %v5022 = vmul.f32 %v2529, %v4995
        %v5023 = vmul.f32 %v2527, %v4999
        %v5024 = vmul.f32 %v2528, %v4999
        %v5025 = vmul.f32 %v2529, %v4999
        %v5026 = vmul.f32 %v2527, %v5003
        %v5027 = vmul.f32 %v2528, %v5003
        %v5028 = vmul.f32 %v2529, %v5003
        %v5029 = vmul.f32 %v2530, %v4991
        %v5030 = vmul.f32 %v2531, %v4991
        %v5031 = vmul.f32 %v2532, %v4991
        %v5032 = vmul.f32 %v2530, %v4995
        %v5033 = vmul.f32 %v2531, %v4995
        %v5034 = vmul.f32 %v2532, %v4995
        %v5035 = vmul.f32 %v2530, %v4999
        %v5036 = vmul.f32 %v2531, %v4999
        %v5037 = vmul.f32 %v2532, %v4999
        %v5038 = vmul.f32 %v2530, %v5003
        %v5039 = vmul.f32 %v2531, %v5003
        %v5040 = vmul.f32 %v2532, %v5003
        %v5041 = vmul.f32 %v2533, %v4991
        %v5042 = vmul.f32 %v2534, %v4991
        %v5043 = vmul.f32 %v2535, %v4991
        %v5044 = vmul.f32 %v2533, %v4995
        %v5045 = vmul.f32 %v2534, %v4995
        %v5046 = vmul.f32 %v2535, %v4995
        %v5047 = vmul.f32 %v2533, %v4999
        %v5048 = vmul.f32 %v2534, %v4999
        %v5049 = vmul.f32 %v2535, %v4999
        %v5050 = vmul.f32 %v2533, %v5003
        %v5051 = vmul.f32 %v2534, %v5003
        %v5052 = vmul.f32 %v2535, %v5003
        %v5053 = vmul.f32 %v2536, %v4991
        %v5054 = vmul.f32 %v2537, %v4991
        %v5055 = vmul.f32 %v2538, %v4991
        %v5056 = vmul.f32 %v2536, %v4995
        %v5057 = vmul.f32 %v2537, %v4995
        %v5058 = vmul.f32 %v2538, %v4995
        %v5059 = vmul.f32 %v2536, %v4999
        %v5060 = vmul.f32 %v2537, %v4999
        %v5061 = vmul.f32 %v2538, %v4999
        %v5062 = vmul.f32 %v2536, %v5003
        %v5063 = vmul.f32 %v2537, %v5003
        %v5064 = vmul.f32 %v2538, %v5003
        %v5065 = vmul.f32 %v2539, %v4991
        %v5066 = vmul.f32 %v2540, %v4991
        %v5067 = vmul.f32 %v2541, %v4991
        %v5068 = vmul.f32 %v2539, %v4995
        %v5069 = vmul.f32 %v2540, %v4995
        %v5070 = vmul.f32 %v2541, %v4995
        %v5071 = vmul.f32 %v2539, %v4999
        %v5072 = vmul.f32 %v2540, %v4999
        %v5073 = vmul.f32 %v2541, %v4999
        %v5074 = vmul.f32 %v2539, %v5003
        %v5075 = vmul.f32 %v2540, %v5003
        %v5076 = vmul.f32 %v2541, %v5003
        %v5077 = vmul.f32 %v2542, %v4991
        %v5078 = vmul.f32 %v2543, %v4991
        %v5079 = vmul.f32 %v2544, %v4991
        %v5080 = vmul.f32 %v2542, %v4995
        %v5081 = vmul.f32 %v2543, %v4995
        %v5082 = vmul.f32 %v2544, %v4995
        %v5083 = vmul.f32 %v2542, %v4999
        %v5084 = vmul.f32 %v2543, %v4999
        %v5085 = vmul.f32 %v2544, %v4999
        %v5086 = vmul.f32 %v2542, %v5003
        %v5087 = vmul.f32 %v2543, %v5003
        %v5088 = vmul.f32 %v2544, %v5003
        %v5089 = vmul.f32 %v2545, %v4991
        %v5090 = vmul.f32 %v2546, %v4991
        %v5091 = vmul.f32 %v2547, %v4991
        %v5092 = vmul.f32 %v2545, %v4995
        %v5093 = vmul.f32 %v2546, %v4995
        %v5094 = vmul.f32 %v2547, %v4995
        %v5095 = vmul.f32 %v2545, %v4999
        %v5096 = vmul.f32 %v2546, %v4999
        %v5097 = vmul.f32 %v2547, %v4999
        %v5098 = vmul.f32 %v2545, %v5003
        %v5099 = vmul.f32 %v2546, %v5003
        %v5100 = vmul.f32 %v2547, %v5003
        %5197 = vrot.lane.b32.xlu0 %v5005, 126
        %v5198 = vpop.permute.xlu0 %5197
        %5199 = vrot.lane.b32.xlu0 %v5006, 126
        %v5200 = vpop.permute.xlu0 %5199
        %5201 = vrot.lane.b32.xlu0 %v5007, 126
        %v5202 = vpop.permute.xlu0 %5201
        %5203 = vrot.lane.b32.xlu0 %v5008, 126
        %v5204 = vpop.permute.xlu0 %5203
        %5205 = vrot.lane.b32.xlu0 %v5009, 126
        %v5206 = vpop.permute.xlu0 %5205
        %5207 = vrot.lane.b32.xlu0 %v5010, 126
        %v5208 = vpop.permute.xlu0 %5207
        %5209 = vrot.lane.b32.xlu0 %v5011, 126
        %v5210 = vpop.permute.xlu0 %5209
        %5211 = vrot.lane.b32.xlu0 %v5012, 126
        %v5212 = vpop.permute.xlu0 %5211
        %5213 = vrot.lane.b32.xlu0 %v5013, 126
        %v5214 = vpop.permute.xlu0 %5213
        %5215 = vrot.lane.b32.xlu0 %v5014, 126
        %v5216 = vpop.permute.xlu0 %5215
        %5217 = vrot.lane.b32.xlu0 %v5015, 126
        %v5218 = vpop.permute.xlu0 %5217
        %5219 = vrot.lane.b32.xlu0 %v5016, 126
        %v5220 = vpop.permute.xlu0 %5219
        %5221 = vrot.lane.b32.xlu0 %v5017, 126
        %v5222 = vpop.permute.xlu0 %5221
        %5223 = vrot.lane.b32.xlu0 %v5018, 126
        %v5224 = vpop.permute.xlu0 %5223
        %5225 = vrot.lane.b32.xlu0 %v5019, 126
        %v5226 = vpop.permute.xlu0 %5225
        %5227 = vrot.lane.b32.xlu0 %v5020, 126
        %v5228 = vpop.permute.xlu0 %5227
        %5229 = vrot.lane.b32.xlu0 %v5021, 126
        %v5230 = vpop.permute.xlu0 %5229
        %5231 = vrot.lane.b32.xlu0 %v5022, 126
        %v5232 = vpop.permute.xlu0 %5231
        %5233 = vrot.lane.b32.xlu0 %v5023, 126
        %v5234 = vpop.permute.xlu0 %5233
        %5235 = vrot.lane.b32.xlu0 %v5024, 126
        %v5236 = vpop.permute.xlu0 %5235
        %5237 = vrot.lane.b32.xlu0 %v5025, 126
        %v5238 = vpop.permute.xlu0 %5237
        %5239 = vrot.lane.b32.xlu0 %v5026, 126
        %v5240 = vpop.permute.xlu0 %5239
        %5241 = vrot.lane.b32.xlu0 %v5027, 126
        %v5242 = vpop.permute.xlu0 %5241
        %5243 = vrot.lane.b32.xlu0 %v5028, 126
        %v5244 = vpop.permute.xlu0 %5243
        %5245 = vrot.lane.b32.xlu0 %v5029, 126
        %v5246 = vpop.permute.xlu0 %5245
        %5247 = vrot.lane.b32.xlu0 %v5030, 126
        %v5248 = vpop.permute.xlu0 %5247
        %5249 = vrot.lane.b32.xlu0 %v5031, 126
        %v5250 = vpop.permute.xlu0 %5249
        %5251 = vrot.lane.b32.xlu0 %v5032, 126
        %v5252 = vpop.permute.xlu0 %5251
        %5253 = vrot.lane.b32.xlu0 %v5033, 126
        %v5254 = vpop.permute.xlu0 %5253
        %5255 = vrot.lane.b32.xlu0 %v5034, 126
        %v5256 = vpop.permute.xlu0 %5255
        %5257 = vrot.lane.b32.xlu0 %v5035, 126
        %v5258 = vpop.permute.xlu0 %5257
        %5259 = vrot.lane.b32.xlu0 %v5036, 126
        %v5260 = vpop.permute.xlu0 %5259
        %5261 = vrot.lane.b32.xlu0 %v5037, 126
        %v5262 = vpop.permute.xlu0 %5261
        %5263 = vrot.lane.b32.xlu0 %v5038, 126
        %v5264 = vpop.permute.xlu0 %5263
        %5265 = vrot.lane.b32.xlu0 %v5039, 126
        %v5266 = vpop.permute.xlu0 %5265
        %5267 = vrot.lane.b32.xlu0 %v5040, 126
        %v5268 = vpop.permute.xlu0 %5267
        %5269 = vrot.lane.b32.xlu0 %v5041, 126
        %v5270 = vpop.permute.xlu0 %5269
        %5271 = vrot.lane.b32.xlu0 %v5042, 126
        %v5272 = vpop.permute.xlu0 %5271
        %5273 = vrot.lane.b32.xlu0 %v5043, 126
        %v5274 = vpop.permute.xlu0 %5273
        %5275 = vrot.lane.b32.xlu0 %v5044, 126
        %v5276 = vpop.permute.xlu0 %5275
        %5277 = vrot.lane.b32.xlu0 %v5045, 126
        %v5278 = vpop.permute.xlu0 %5277
        %5279 = vrot.lane.b32.xlu0 %v5046, 126
        %v5280 = vpop.permute.xlu0 %5279
        %5281 = vrot.lane.b32.xlu0 %v5047, 126
        %v5282 = vpop.permute.xlu0 %5281
        %5283 = vrot.lane.b32.xlu0 %v5048, 126
        %v5284 = vpop.permute.xlu0 %5283
        %5285 = vrot.lane.b32.xlu0 %v5049, 126
        %v5286 = vpop.permute.xlu0 %5285
        %5287 = vrot.lane.b32.xlu0 %v5050, 126
        %v5288 = vpop.permute.xlu0 %5287
        %5289 = vrot.lane.b32.xlu0 %v5051, 126
        %v5290 = vpop.permute.xlu0 %5289
        %5291 = vrot.lane.b32.xlu0 %v5052, 126
        %v5292 = vpop.permute.xlu0 %5291
        %5293 = vrot.lane.b32.xlu0 %v5053, 126
        %v5294 = vpop.permute.xlu0 %5293
        %5295 = vrot.lane.b32.xlu0 %v5054, 126
        %v5296 = vpop.permute.xlu0 %5295
        %5297 = vrot.lane.b32.xlu0 %v5055, 126
        %v5298 = vpop.permute.xlu0 %5297
        %5299 = vrot.lane.b32.xlu0 %v5056, 126
        %v5300 = vpop.permute.xlu0 %5299
        %5301 = vrot.lane.b32.xlu0 %v5057, 126
        %v5302 = vpop.permute.xlu0 %5301
        %5303 = vrot.lane.b32.xlu0 %v5058, 126
        %v5304 = vpop.permute.xlu0 %5303
        %5305 = vrot.lane.b32.xlu0 %v5059, 126
        %v5306 = vpop.permute.xlu0 %5305
        %5307 = vrot.lane.b32.xlu0 %v5060, 126
        %v5308 = vpop.permute.xlu0 %5307
        %5309 = vrot.lane.b32.xlu0 %v5061, 126
        %v5310 = vpop.permute.xlu0 %5309
        %5311 = vrot.lane.b32.xlu0 %v5062, 126
        %v5312 = vpop.permute.xlu0 %5311
        %5313 = vrot.lane.b32.xlu0 %v5063, 126
        %v5314 = vpop.permute.xlu0 %5313
        %5315 = vrot.lane.b32.xlu0 %v5064, 126
        %v5316 = vpop.permute.xlu0 %5315
        %5317 = vrot.lane.b32.xlu0 %v5065, 126
        %v5318 = vpop.permute.xlu0 %5317
        %5319 = vrot.lane.b32.xlu0 %v5066, 126
        %v5320 = vpop.permute.xlu0 %5319
        %5321 = vrot.lane.b32.xlu0 %v5067, 126
        %v5322 = vpop.permute.xlu0 %5321
        %5323 = vrot.lane.b32.xlu0 %v5068, 126
        %v5324 = vpop.permute.xlu0 %5323
        %5325 = vrot.lane.b32.xlu0 %v5069, 126
        %v5326 = vpop.permute.xlu0 %5325
        %5327 = vrot.lane.b32.xlu0 %v5070, 126
        %v5328 = vpop.permute.xlu0 %5327
        %5329 = vrot.lane.b32.xlu0 %v5071, 126
        %v5330 = vpop.permute.xlu0 %5329
        %5331 = vrot.lane.b32.xlu0 %v5072, 126
        %v5332 = vpop.permute.xlu0 %5331
        %5333 = vrot.lane.b32.xlu0 %v5073, 126
        %v5334 = vpop.permute.xlu0 %5333
        %5335 = vrot.lane.b32.xlu0 %v5074, 126
        %v5336 = vpop.permute.xlu0 %5335
        %5337 = vrot.lane.b32.xlu0 %v5075, 126
        %v5338 = vpop.permute.xlu0 %5337
        %5339 = vrot.lane.b32.xlu0 %v5076, 126
        %v5340 = vpop.permute.xlu0 %5339
        %5341 = vrot.lane.b32.xlu0 %v5077, 126
        %v5342 = vpop.permute.xlu0 %5341
        %5343 = vrot.lane.b32.xlu0 %v5078, 126
        %v5344 = vpop.permute.xlu0 %5343
        %5345 = vrot.lane.b32.xlu0 %v5079, 126
        %v5346 = vpop.permute.xlu0 %5345
        %5347 = vrot.lane.b32.xlu0 %v5080, 126
        %v5348 = vpop.permute.xlu0 %5347
        %5349 = vrot.lane.b32.xlu0 %v5081, 126
        %v5350 = vpop.permute.xlu0 %5349
        %5351 = vrot.lane.b32.xlu0 %v5082, 126
        %v5352 = vpop.permute.xlu0 %5351
        %5353 = vrot.lane.b32.xlu0 %v5083, 126
        %v5354 = vpop.permute.xlu0 %5353
        %5355 = vrot.lane.b32.xlu0 %v5084, 126
        %v5356 = vpop.permute.xlu0 %5355
        %5357 = vrot.lane.b32.xlu0 %v5085, 126
        %v5358 = vpop.permute.xlu0 %5357
        %5359 = vrot.lane.b32.xlu0 %v5086, 126
        %v5360 = vpop.permute.xlu0 %5359
        %5361 = vrot.lane.b32.xlu0 %v5087, 126
        %v5362 = vpop.permute.xlu0 %5361
        %5363 = vrot.lane.b32.xlu0 %v5088, 126
        %v5364 = vpop.permute.xlu0 %5363
        %5365 = vrot.lane.b32.xlu0 %v5089, 126
        %v5366 = vpop.permute.xlu0 %5365
        %5367 = vrot.lane.b32.xlu0 %v5090, 126
        %v5368 = vpop.permute.xlu0 %5367
        %5369 = vrot.lane.b32.xlu0 %v5091, 126
        %v5370 = vpop.permute.xlu0 %5369
        %5371 = vrot.lane.b32.xlu0 %v5092, 126
        %v5372 = vpop.permute.xlu0 %5371
        %5373 = vrot.lane.b32.xlu0 %v5093, 126
        %v5374 = vpop.permute.xlu0 %5373
        %5375 = vrot.lane.b32.xlu0 %v5094, 126
        %v5376 = vpop.permute.xlu0 %5375
        %5377 = vrot.lane.b32.xlu0 %v5095, 126
        %v5378 = vpop.permute.xlu0 %5377
        %5379 = vrot.lane.b32.xlu0 %v5096, 126
        %v5380 = vpop.permute.xlu0 %5379
        %5381 = vrot.lane.b32.xlu0 %v5097, 126
        %v5382 = vpop.permute.xlu0 %5381
        %5383 = vrot.lane.b32.xlu0 %v5098, 126
        %v5384 = vpop.permute.xlu0 %5383
        %5385 = vrot.lane.b32.xlu0 %v5099, 126
        %v5386 = vpop.permute.xlu0 %5385
        %5387 = vrot.lane.b32.xlu0 %v5100, 126
        %v5388 = vpop.permute.xlu0 %5387
        %v5389 = vsel %vm4204, %v5198, %v5200
        %v5390 = vsel %vm4204, %v5200, %v5202
        %v5391 = vsel %vm4204, %v5204, %v5206
        %v5392 = vsel %vm4204, %v5206, %v5208
        %v5393 = vsel %vm4204, %v5210, %v5212
        %v5394 = vsel %vm4204, %v5212, %v5214
        %v5395 = vsel %vm4204, %v5216, %v5218
        %v5396 = vsel %vm4204, %v5218, %v5220
        %v5397 = vsel %vm4204, %v5222, %v5224
        %v5398 = vsel %vm4204, %v5224, %v5226
        %v5399 = vsel %vm4204, %v5228, %v5230
        %v5400 = vsel %vm4204, %v5230, %v5232
        %v5401 = vsel %vm4204, %v5234, %v5236
        %v5402 = vsel %vm4204, %v5236, %v5238
        %v5403 = vsel %vm4204, %v5240, %v5242
        %v5404 = vsel %vm4204, %v5242, %v5244
        %v5405 = vsel %vm4204, %v5246, %v5248
        %v5406 = vsel %vm4204, %v5248, %v5250
        %v5407 = vsel %vm4204, %v5252, %v5254
        %v5408 = vsel %vm4204, %v5254, %v5256
        %v5409 = vsel %vm4204, %v5258, %v5260
        %v5410 = vsel %vm4204, %v5260, %v5262
        %v5411 = vsel %vm4204, %v5264, %v5266
        %v5412 = vsel %vm4204, %v5266, %v5268
        %v5413 = vsel %vm4204, %v5270, %v5272
        %v5414 = vsel %vm4204, %v5272, %v5274
        %v5415 = vsel %vm4204, %v5276, %v5278
        %v5416 = vsel %vm4204, %v5278, %v5280
        %v5417 = vsel %vm4204, %v5282, %v5284
        %v5418 = vsel %vm4204, %v5284, %v5286
        %v5419 = vsel %vm4204, %v5288, %v5290
        %v5420 = vsel %vm4204, %v5290, %v5292
        %v5421 = vsel %vm4204, %v5294, %v5296
        %v5422 = vsel %vm4204, %v5296, %v5298
        %v5423 = vsel %vm4204, %v5300, %v5302
        %v5424 = vsel %vm4204, %v5302, %v5304
        %v5425 = vsel %vm4204, %v5306, %v5308
        %v5426 = vsel %vm4204, %v5308, %v5310
        %v5427 = vsel %vm4204, %v5312, %v5314
        %v5428 = vsel %vm4204, %v5314, %v5316
        %v5429 = vsel %vm4204, %v5318, %v5320
        %v5430 = vsel %vm4204, %v5320, %v5322
        %v5431 = vsel %vm4204, %v5324, %v5326
        %v5432 = vsel %vm4204, %v5326, %v5328
        %v5433 = vsel %vm4204, %v5330, %v5332
        %v5434 = vsel %vm4204, %v5332, %v5334
        %v5435 = vsel %vm4204, %v5336, %v5338
        %v5436 = vsel %vm4204, %v5338, %v5340
        %v5437 = vsel %vm4204, %v5342, %v5344
        %v5438 = vsel %vm4204, %v5344, %v5346
        %v5439 = vsel %vm4204, %v5348, %v5350
        %v5440 = vsel %vm4204, %v5350, %v5352
        %v5441 = vsel %vm4204, %v5354, %v5356
        %v5442 = vsel %vm4204, %v5356, %v5358
        %v5443 = vsel %vm4204, %v5360, %v5362
        %v5444 = vsel %vm4204, %v5362, %v5364
        %v5445 = vsel %vm4204, %v5366, %v5368
        %v5446 = vsel %vm4204, %v5368, %v5370
        %v5447 = vsel %vm4204, %v5372, %v5374
        %v5448 = vsel %vm4204, %v5374, %v5376
        %v5449 = vsel %vm4204, %v5378, %v5380
        %v5450 = vsel %vm4204, %v5380, %v5382
        %v5451 = vsel %vm4204, %v5384, %v5386
        %v5452 = vsel %vm4204, %v5386, %v5388
        %v5517 = vadd.f32 %v4925, %v5389
        %v5518 = vadd.f32 %v4926, %v5390
        %v5519 = vadd.f32 %v4927, %v5391
        %v5520 = vadd.f32 %v4928, %v5392
        %v5521 = vadd.f32 %v4929, %v5393
        %v5522 = vadd.f32 %v4930, %v5394
        %v5523 = vadd.f32 %v4931, %v5395
        %v5524 = vadd.f32 %v4932, %v5396
        %v5525 = vadd.f32 %v4933, %v5397
        %v5526 = vadd.f32 %v4934, %v5398
        %v5527 = vadd.f32 %v4935, %v5399
        %v5528 = vadd.f32 %v4936, %v5400
        %v5529 = vadd.f32 %v4937, %v5401
        %v5530 = vadd.f32 %v4938, %v5402
        %v5531 = vadd.f32 %v4939, %v5403
        %v5532 = vadd.f32 %v4940, %v5404
        %v5533 = vadd.f32 %v4941, %v5405
        %v5534 = vadd.f32 %v4942, %v5406
        %v5535 = vadd.f32 %v4943, %v5407
        %v5536 = vadd.f32 %v4944, %v5408
        %v5537 = vadd.f32 %v4945, %v5409
        %v5538 = vadd.f32 %v4946, %v5410
        %v5539 = vadd.f32 %v4947, %v5411
        %v5540 = vadd.f32 %v4948, %v5412
        %v5541 = vadd.f32 %v4949, %v5413
        %v5542 = vadd.f32 %v4950, %v5414
        %v5543 = vadd.f32 %v4951, %v5415
        %v5544 = vadd.f32 %v4952, %v5416
        %v5545 = vadd.f32 %v4953, %v5417
        %v5546 = vadd.f32 %v4954, %v5418
        %v5547 = vadd.f32 %v4955, %v5419
        %v5548 = vadd.f32 %v4956, %v5420
        %v5549 = vadd.f32 %v4957, %v5421
        %v5550 = vadd.f32 %v4958, %v5422
        %v5551 = vadd.f32 %v4959, %v5423
        %v5552 = vadd.f32 %v4960, %v5424
        %v5553 = vadd.f32 %v4961, %v5425
        %v5554 = vadd.f32 %v4962, %v5426
        %v5555 = vadd.f32 %v4963, %v5427
        %v5556 = vadd.f32 %v4964, %v5428
        %v5557 = vadd.f32 %v4965, %v5429
        %v5558 = vadd.f32 %v4966, %v5430
        %v5559 = vadd.f32 %v4967, %v5431
        %v5560 = vadd.f32 %v4968, %v5432
        %v5561 = vadd.f32 %v4969, %v5433
        %v5562 = vadd.f32 %v4970, %v5434
        %v5563 = vadd.f32 %v4971, %v5435
        %v5564 = vadd.f32 %v4972, %v5436
        %v5565 = vadd.f32 %v4973, %v5437
        %v5566 = vadd.f32 %v4974, %v5438
        %v5567 = vadd.f32 %v4975, %v5439
        %v5568 = vadd.f32 %v4976, %v5440
        %v5569 = vadd.f32 %v4977, %v5441
        %v5570 = vadd.f32 %v4978, %v5442
        %v5571 = vadd.f32 %v4979, %v5443
        %v5572 = vadd.f32 %v4980, %v5444
        %v5573 = vadd.f32 %v4981, %v5445
        %v5574 = vadd.f32 %v4982, %v5446
        %v5575 = vadd.f32 %v4983, %v5447
        %v5576 = vadd.f32 %v4984, %v5448
        %v5577 = vadd.f32 %v4985, %v5449
        %v5578 = vadd.f32 %v4986, %v5450
        %v5579 = vadd.f32 %v4987, %v5451
        %v5580 = vadd.f32 %v4988, %v5452
        %5581 = vset.pattern.permute.xlu0 11
        %5582 = vperm.xlu0 %5581, %v387
        %v5583 = vpop.permute.xlu0 %5582
        %5585 = vset.pattern.permute.xlu0 11
        %5586 = vperm.xlu0 %5585, %v388
        %v5587 = vpop.permute.xlu0 %5586
        %5589 = vset.pattern.permute.xlu0 11
        %5590 = vperm.xlu0 %5589, %v389
        %v5591 = vpop.permute.xlu0 %5590
        %5593 = vset.pattern.permute.xlu0 11
        %5594 = vperm.xlu0 %5593, %v390
        %v5595 = vpop.permute.xlu0 %5594
        %v5597 = vmul.f32 %v3188, %v5583
        %v5598 = vmul.f32 %v3189, %v5583
        %v5599 = vmul.f32 %v3190, %v5583
        %v5600 = vmul.f32 %v3188, %v5587
        %v5601 = vmul.f32 %v3189, %v5587
        %v5602 = vmul.f32 %v3190, %v5587
        %v5603 = vmul.f32 %v3188, %v5591
        %v5604 = vmul.f32 %v3189, %v5591
        %v5605 = vmul.f32 %v3190, %v5591
        %v5606 = vmul.f32 %v3188, %v5595
        %v5607 = vmul.f32 %v3189, %v5595
        %v5608 = vmul.f32 %v3190, %v5595
        %v5609 = vmul.f32 %v3191, %v5583
        %v5610 = vmul.f32 %v3192, %v5583
        %v5611 = vmul.f32 %v3193, %v5583
        %v5612 = vmul.f32 %v3191, %v5587
        %v5613 = vmul.f32 %v3192, %v5587
        %v5614 = vmul.f32 %v3193, %v5587
        %v5615 = vmul.f32 %v3191, %v5591
        %v5616 = vmul.f32 %v3192, %v5591
        %v5617 = vmul.f32 %v3193, %v5591
        %v5618 = vmul.f32 %v3191, %v5595
        %v5619 = vmul.f32 %v3192, %v5595
        %v5620 = vmul.f32 %v3193, %v5595
        %v5621 = vmul.f32 %v3194, %v5583
        %v5622 = vmul.f32 %v3195, %v5583
        %v5623 = vmul.f32 %v3196, %v5583
        %v5624 = vmul.f32 %v3194, %v5587
        %v5625 = vmul.f32 %v3195, %v5587
        %v5626 = vmul.f32 %v3196, %v5587
        %v5627 = vmul.f32 %v3194, %v5591
        %v5628 = vmul.f32 %v3195, %v5591
        %v5629 = vmul.f32 %v3196, %v5591
        %v5630 = vmul.f32 %v3194, %v5595
        %v5631 = vmul.f32 %v3195, %v5595
        %v5632 = vmul.f32 %v3196, %v5595
        %v5633 = vmul.f32 %v3197, %v5583
        %v5634 = vmul.f32 %v3198, %v5583
        %v5635 = vmul.f32 %v3199, %v5583
        %v5636 = vmul.f32 %v3197, %v5587
        %v5637 = vmul.f32 %v3198, %v5587
        %v5638 = vmul.f32 %v3199, %v5587
        %v5639 = vmul.f32 %v3197, %v5591
        %v5640 = vmul.f32 %v3198, %v5591
        %v5641 = vmul.f32 %v3199, %v5591
        %v5642 = vmul.f32 %v3197, %v5595
        %v5643 = vmul.f32 %v3198, %v5595
        %v5644 = vmul.f32 %v3199, %v5595
        %v5645 = vmul.f32 %v3200, %v5583
        %v5646 = vmul.f32 %v3201, %v5583
        %v5647 = vmul.f32 %v3202, %v5583
        %v5648 = vmul.f32 %v3200, %v5587
        %v5649 = vmul.f32 %v3201, %v5587
        %v5650 = vmul.f32 %v3202, %v5587
        %v5651 = vmul.f32 %v3200, %v5591
        %v5652 = vmul.f32 %v3201, %v5591
        %v5653 = vmul.f32 %v3202, %v5591
        %v5654 = vmul.f32 %v3200, %v5595
        %v5655 = vmul.f32 %v3201, %v5595
        %v5656 = vmul.f32 %v3202, %v5595
        %v5657 = vmul.f32 %v3203, %v5583
        %v5658 = vmul.f32 %v3204, %v5583
        %v5659 = vmul.f32 %v3205, %v5583
        %v5660 = vmul.f32 %v3203, %v5587
        %v5661 = vmul.f32 %v3204, %v5587
        %v5662 = vmul.f32 %v3205, %v5587
        %v5663 = vmul.f32 %v3203, %v5591
        %v5664 = vmul.f32 %v3204, %v5591
        %v5665 = vmul.f32 %v3205, %v5591
        %v5666 = vmul.f32 %v3203, %v5595
        %v5667 = vmul.f32 %v3204, %v5595
        %v5668 = vmul.f32 %v3205, %v5595
        %v5669 = vmul.f32 %v3206, %v5583
        %v5670 = vmul.f32 %v3207, %v5583
        %v5671 = vmul.f32 %v3208, %v5583
        %v5672 = vmul.f32 %v3206, %v5587
        %v5673 = vmul.f32 %v3207, %v5587
        %v5674 = vmul.f32 %v3208, %v5587
        %v5675 = vmul.f32 %v3206, %v5591
        %v5676 = vmul.f32 %v3207, %v5591
        %v5677 = vmul.f32 %v3208, %v5591
        %v5678 = vmul.f32 %v3206, %v5595
        %v5679 = vmul.f32 %v3207, %v5595
        %v5680 = vmul.f32 %v3208, %v5595
        %v5681 = vmul.f32 %v3209, %v5583
        %v5682 = vmul.f32 %v3210, %v5583
        %v5683 = vmul.f32 %v3211, %v5583
        %v5684 = vmul.f32 %v3209, %v5587
        %v5685 = vmul.f32 %v3210, %v5587
        %v5686 = vmul.f32 %v3211, %v5587
        %v5687 = vmul.f32 %v3209, %v5591
        %v5688 = vmul.f32 %v3210, %v5591
        %v5689 = vmul.f32 %v3211, %v5591
        %v5690 = vmul.f32 %v3209, %v5595
        %v5691 = vmul.f32 %v3210, %v5595
        %v5692 = vmul.f32 %v3211, %v5595
        %5789 = vrot.lane.b32.xlu0 %v5597, 126
        %v5790 = vpop.permute.xlu0 %5789
        %5791 = vrot.lane.b32.xlu0 %v5598, 126
        %v5792 = vpop.permute.xlu0 %5791
        %5793 = vrot.lane.b32.xlu0 %v5599, 126
        %v5794 = vpop.permute.xlu0 %5793
        %5795 = vrot.lane.b32.xlu0 %v5600, 126
        %v5796 = vpop.permute.xlu0 %5795
        %5797 = vrot.lane.b32.xlu0 %v5601, 126
        %v5798 = vpop.permute.xlu0 %5797
        %5799 = vrot.lane.b32.xlu0 %v5602, 126
        %v5800 = vpop.permute.xlu0 %5799
        %5801 = vrot.lane.b32.xlu0 %v5603, 126
        %v5802 = vpop.permute.xlu0 %5801
        %5803 = vrot.lane.b32.xlu0 %v5604, 126
        %v5804 = vpop.permute.xlu0 %5803
        %5805 = vrot.lane.b32.xlu0 %v5605, 126
        %v5806 = vpop.permute.xlu0 %5805
        %5807 = vrot.lane.b32.xlu0 %v5606, 126
        %v5808 = vpop.permute.xlu0 %5807
        %5809 = vrot.lane.b32.xlu0 %v5607, 126
        %v5810 = vpop.permute.xlu0 %5809
        %5811 = vrot.lane.b32.xlu0 %v5608, 126
        %v5812 = vpop.permute.xlu0 %5811
        %5813 = vrot.lane.b32.xlu0 %v5609, 126
        %v5814 = vpop.permute.xlu0 %5813
        %5815 = vrot.lane.b32.xlu0 %v5610, 126
        %v5816 = vpop.permute.xlu0 %5815
        %5817 = vrot.lane.b32.xlu0 %v5611, 126
        %v5818 = vpop.permute.xlu0 %5817
        %5819 = vrot.lane.b32.xlu0 %v5612, 126
        %v5820 = vpop.permute.xlu0 %5819
        %5821 = vrot.lane.b32.xlu0 %v5613, 126
        %v5822 = vpop.permute.xlu0 %5821
        %5823 = vrot.lane.b32.xlu0 %v5614, 126
        %v5824 = vpop.permute.xlu0 %5823
        %5825 = vrot.lane.b32.xlu0 %v5615, 126
        %v5826 = vpop.permute.xlu0 %5825
        %5827 = vrot.lane.b32.xlu0 %v5616, 126
        %v5828 = vpop.permute.xlu0 %5827
        %5829 = vrot.lane.b32.xlu0 %v5617, 126
        %v5830 = vpop.permute.xlu0 %5829
        %5831 = vrot.lane.b32.xlu0 %v5618, 126
        %v5832 = vpop.permute.xlu0 %5831
        %5833 = vrot.lane.b32.xlu0 %v5619, 126
        %v5834 = vpop.permute.xlu0 %5833
        %5835 = vrot.lane.b32.xlu0 %v5620, 126
        %v5836 = vpop.permute.xlu0 %5835
        %5837 = vrot.lane.b32.xlu0 %v5621, 126
        %v5838 = vpop.permute.xlu0 %5837
        %5839 = vrot.lane.b32.xlu0 %v5622, 126
        %v5840 = vpop.permute.xlu0 %5839
        %5841 = vrot.lane.b32.xlu0 %v5623, 126
        %v5842 = vpop.permute.xlu0 %5841
        %5843 = vrot.lane.b32.xlu0 %v5624, 126
        %v5844 = vpop.permute.xlu0 %5843
        %5845 = vrot.lane.b32.xlu0 %v5625, 126
        %v5846 = vpop.permute.xlu0 %5845
        %5847 = vrot.lane.b32.xlu0 %v5626, 126
        %v5848 = vpop.permute.xlu0 %5847
        %5849 = vrot.lane.b32.xlu0 %v5627, 126
        %v5850 = vpop.permute.xlu0 %5849
        %5851 = vrot.lane.b32.xlu0 %v5628, 126
        %v5852 = vpop.permute.xlu0 %5851
        %5853 = vrot.lane.b32.xlu0 %v5629, 126
        %v5854 = vpop.permute.xlu0 %5853
        %5855 = vrot.lane.b32.xlu0 %v5630, 126
        %v5856 = vpop.permute.xlu0 %5855
        %5857 = vrot.lane.b32.xlu0 %v5631, 126
        %v5858 = vpop.permute.xlu0 %5857
        %5859 = vrot.lane.b32.xlu0 %v5632, 126
        %v5860 = vpop.permute.xlu0 %5859
        %5861 = vrot.lane.b32.xlu0 %v5633, 126
        %v5862 = vpop.permute.xlu0 %5861
        %5863 = vrot.lane.b32.xlu0 %v5634, 126
        %v5864 = vpop.permute.xlu0 %5863
        %5865 = vrot.lane.b32.xlu0 %v5635, 126
        %v5866 = vpop.permute.xlu0 %5865
        %5867 = vrot.lane.b32.xlu0 %v5636, 126
        %v5868 = vpop.permute.xlu0 %5867
        %5869 = vrot.lane.b32.xlu0 %v5637, 126
        %v5870 = vpop.permute.xlu0 %5869
        %5871 = vrot.lane.b32.xlu0 %v5638, 126
        %v5872 = vpop.permute.xlu0 %5871
        %5873 = vrot.lane.b32.xlu0 %v5639, 126
        %v5874 = vpop.permute.xlu0 %5873
        %5875 = vrot.lane.b32.xlu0 %v5640, 126
        %v5876 = vpop.permute.xlu0 %5875
        %5877 = vrot.lane.b32.xlu0 %v5641, 126
        %v5878 = vpop.permute.xlu0 %5877
        %5879 = vrot.lane.b32.xlu0 %v5642, 126
        %v5880 = vpop.permute.xlu0 %5879
        %5881 = vrot.lane.b32.xlu0 %v5643, 126
        %v5882 = vpop.permute.xlu0 %5881
        %5883 = vrot.lane.b32.xlu0 %v5644, 126
        %v5884 = vpop.permute.xlu0 %5883
        %5885 = vrot.lane.b32.xlu0 %v5645, 126
        %v5886 = vpop.permute.xlu0 %5885
        %5887 = vrot.lane.b32.xlu0 %v5646, 126
        %v5888 = vpop.permute.xlu0 %5887
        %5889 = vrot.lane.b32.xlu0 %v5647, 126
        %v5890 = vpop.permute.xlu0 %5889
        %5891 = vrot.lane.b32.xlu0 %v5648, 126
        %v5892 = vpop.permute.xlu0 %5891
        %5893 = vrot.lane.b32.xlu0 %v5649, 126
        %v5894 = vpop.permute.xlu0 %5893
        %5895 = vrot.lane.b32.xlu0 %v5650, 126
        %v5896 = vpop.permute.xlu0 %5895
        %5897 = vrot.lane.b32.xlu0 %v5651, 126
        %v5898 = vpop.permute.xlu0 %5897
        %5899 = vrot.lane.b32.xlu0 %v5652, 126
        %v5900 = vpop.permute.xlu0 %5899
        %5901 = vrot.lane.b32.xlu0 %v5653, 126
        %v5902 = vpop.permute.xlu0 %5901
        %5903 = vrot.lane.b32.xlu0 %v5654, 126
        %v5904 = vpop.permute.xlu0 %5903
        %5905 = vrot.lane.b32.xlu0 %v5655, 126
        %v5906 = vpop.permute.xlu0 %5905
        %5907 = vrot.lane.b32.xlu0 %v5656, 126
        %v5908 = vpop.permute.xlu0 %5907
        %5909 = vrot.lane.b32.xlu0 %v5657, 126
        %v5910 = vpop.permute.xlu0 %5909
        %5911 = vrot.lane.b32.xlu0 %v5658, 126
        %v5912 = vpop.permute.xlu0 %5911
        %5913 = vrot.lane.b32.xlu0 %v5659, 126
        %v5914 = vpop.permute.xlu0 %5913
        %5915 = vrot.lane.b32.xlu0 %v5660, 126
        %v5916 = vpop.permute.xlu0 %5915
        %5917 = vrot.lane.b32.xlu0 %v5661, 126
        %v5918 = vpop.permute.xlu0 %5917
        %5919 = vrot.lane.b32.xlu0 %v5662, 126
        %v5920 = vpop.permute.xlu0 %5919
        %5921 = vrot.lane.b32.xlu0 %v5663, 126
        %v5922 = vpop.permute.xlu0 %5921
        %5923 = vrot.lane.b32.xlu0 %v5664, 126
        %v5924 = vpop.permute.xlu0 %5923
        %5925 = vrot.lane.b32.xlu0 %v5665, 126
        %v5926 = vpop.permute.xlu0 %5925
        %5927 = vrot.lane.b32.xlu0 %v5666, 126
        %v5928 = vpop.permute.xlu0 %5927
        %5929 = vrot.lane.b32.xlu0 %v5667, 126
        %v5930 = vpop.permute.xlu0 %5929
        %5931 = vrot.lane.b32.xlu0 %v5668, 126
        %v5932 = vpop.permute.xlu0 %5931
        %5933 = vrot.lane.b32.xlu0 %v5669, 126
        %v5934 = vpop.permute.xlu0 %5933
        %5935 = vrot.lane.b32.xlu0 %v5670, 126
        %v5936 = vpop.permute.xlu0 %5935
        %5937 = vrot.lane.b32.xlu0 %v5671, 126
        %v5938 = vpop.permute.xlu0 %5937
        %5939 = vrot.lane.b32.xlu0 %v5672, 126
        %v5940 = vpop.permute.xlu0 %5939
        %5941 = vrot.lane.b32.xlu0 %v5673, 126
        %v5942 = vpop.permute.xlu0 %5941
        %5943 = vrot.lane.b32.xlu0 %v5674, 126
        %v5944 = vpop.permute.xlu0 %5943
        %5945 = vrot.lane.b32.xlu0 %v5675, 126
        %v5946 = vpop.permute.xlu0 %5945
        %5947 = vrot.lane.b32.xlu0 %v5676, 126
        %v5948 = vpop.permute.xlu0 %5947
        %5949 = vrot.lane.b32.xlu0 %v5677, 126
        %v5950 = vpop.permute.xlu0 %5949
        %5951 = vrot.lane.b32.xlu0 %v5678, 126
        %v5952 = vpop.permute.xlu0 %5951
        %5953 = vrot.lane.b32.xlu0 %v5679, 126
        %v5954 = vpop.permute.xlu0 %5953
        %5955 = vrot.lane.b32.xlu0 %v5680, 126
        %v5956 = vpop.permute.xlu0 %5955
        %5957 = vrot.lane.b32.xlu0 %v5681, 126
        %v5958 = vpop.permute.xlu0 %5957
        %5959 = vrot.lane.b32.xlu0 %v5682, 126
        %v5960 = vpop.permute.xlu0 %5959
        %5961 = vrot.lane.b32.xlu0 %v5683, 126
        %v5962 = vpop.permute.xlu0 %5961
        %5963 = vrot.lane.b32.xlu0 %v5684, 126
        %v5964 = vpop.permute.xlu0 %5963
        %5965 = vrot.lane.b32.xlu0 %v5685, 126
        %v5966 = vpop.permute.xlu0 %5965
        %5967 = vrot.lane.b32.xlu0 %v5686, 126
        %v5968 = vpop.permute.xlu0 %5967
        %5969 = vrot.lane.b32.xlu0 %v5687, 126
        %v5970 = vpop.permute.xlu0 %5969
        %5971 = vrot.lane.b32.xlu0 %v5688, 126
        %v5972 = vpop.permute.xlu0 %5971
        %5973 = vrot.lane.b32.xlu0 %v5689, 126
        %v5974 = vpop.permute.xlu0 %5973
        %5975 = vrot.lane.b32.xlu0 %v5690, 126
        %v5976 = vpop.permute.xlu0 %5975
        %5977 = vrot.lane.b32.xlu0 %v5691, 126
        %v5978 = vpop.permute.xlu0 %5977
        %5979 = vrot.lane.b32.xlu0 %v5692, 126
        %v5980 = vpop.permute.xlu0 %5979
        %v5981 = vsel %vm4204, %v5790, %v5792
        %v5982 = vsel %vm4204, %v5792, %v5794
        %v5983 = vsel %vm4204, %v5796, %v5798
        %v5984 = vsel %vm4204, %v5798, %v5800
        %v5985 = vsel %vm4204, %v5802, %v5804
        %v5986 = vsel %vm4204, %v5804, %v5806
        %v5987 = vsel %vm4204, %v5808, %v5810
        %v5988 = vsel %vm4204, %v5810, %v5812
        %v5989 = vsel %vm4204, %v5814, %v5816
        %v5990 = vsel %vm4204, %v5816, %v5818
        %v5991 = vsel %vm4204, %v5820, %v5822
        %v5992 = vsel %vm4204, %v5822, %v5824
        %v5993 = vsel %vm4204, %v5826, %v5828
        %v5994 = vsel %vm4204, %v5828, %v5830
        %v5995 = vsel %vm4204, %v5832, %v5834
        %v5996 = vsel %vm4204, %v5834, %v5836
        %v5997 = vsel %vm4204, %v5838, %v5840
        %v5998 = vsel %vm4204, %v5840, %v5842
        %v5999 = vsel %vm4204, %v5844, %v5846
        %v6000 = vsel %vm4204, %v5846, %v5848
        %v6001 = vsel %vm4204, %v5850, %v5852
        %v6002 = vsel %vm4204, %v5852, %v5854
        %v6003 = vsel %vm4204, %v5856, %v5858
        %v6004 = vsel %vm4204, %v5858, %v5860
        %v6005 = vsel %vm4204, %v5862, %v5864
        %v6006 = vsel %vm4204, %v5864, %v5866
        %v6007 = vsel %vm4204, %v5868, %v5870
        %v6008 = vsel %vm4204, %v5870, %v5872
        %v6009 = vsel %vm4204, %v5874, %v5876
        %v6010 = vsel %vm4204, %v5876, %v5878
        %v6011 = vsel %vm4204, %v5880, %v5882
        %v6012 = vsel %vm4204, %v5882, %v5884
        %v6013 = vsel %vm4204, %v5886, %v5888
        %v6014 = vsel %vm4204, %v5888, %v5890
        %v6015 = vsel %vm4204, %v5892, %v5894
        %v6016 = vsel %vm4204, %v5894, %v5896
        %v6017 = vsel %vm4204, %v5898, %v5900
        %v6018 = vsel %vm4204, %v5900, %v5902
        %v6019 = vsel %vm4204, %v5904, %v5906
        %v6020 = vsel %vm4204, %v5906, %v5908
        %v6021 = vsel %vm4204, %v5910, %v5912
        %v6022 = vsel %vm4204, %v5912, %v5914
        %v6023 = vsel %vm4204, %v5916, %v5918
        %v6024 = vsel %vm4204, %v5918, %v5920
        %v6025 = vsel %vm4204, %v5922, %v5924
        %v6026 = vsel %vm4204, %v5924, %v5926
        %v6027 = vsel %vm4204, %v5928, %v5930
        %v6028 = vsel %vm4204, %v5930, %v5932
        %v6029 = vsel %vm4204, %v5934, %v5936
        %v6030 = vsel %vm4204, %v5936, %v5938
        %v6031 = vsel %vm4204, %v5940, %v5942
        %v6032 = vsel %vm4204, %v5942, %v5944
        %v6033 = vsel %vm4204, %v5946, %v5948
        %v6034 = vsel %vm4204, %v5948, %v5950
        %v6035 = vsel %vm4204, %v5952, %v5954
        %v6036 = vsel %vm4204, %v5954, %v5956
        %v6037 = vsel %vm4204, %v5958, %v5960
        %v6038 = vsel %vm4204, %v5960, %v5962
        %v6039 = vsel %vm4204, %v5964, %v5966
        %v6040 = vsel %vm4204, %v5966, %v5968
        %v6041 = vsel %vm4204, %v5970, %v5972
        %v6042 = vsel %vm4204, %v5972, %v5974
        %v6043 = vsel %vm4204, %v5976, %v5978
        %v6044 = vsel %vm4204, %v5978, %v5980
        %v6109 = vadd.f32 %v5517, %v5981
        %v6110 = vadd.f32 %v5518, %v5982
        %v6111 = vadd.f32 %v5519, %v5983
        %v6112 = vadd.f32 %v5520, %v5984
        %v6113 = vadd.f32 %v5521, %v5985
        %v6114 = vadd.f32 %v5522, %v5986
        %v6115 = vadd.f32 %v5523, %v5987
        %v6116 = vadd.f32 %v5524, %v5988
        %v6117 = vadd.f32 %v5525, %v5989
        %v6118 = vadd.f32 %v5526, %v5990
        %v6119 = vadd.f32 %v5527, %v5991
        %v6120 = vadd.f32 %v5528, %v5992
        %v6121 = vadd.f32 %v5529, %v5993
        %v6122 = vadd.f32 %v5530, %v5994
        %v6123 = vadd.f32 %v5531, %v5995
        %v6124 = vadd.f32 %v5532, %v5996
        %v6125 = vadd.f32 %v5533, %v5997
        %v6126 = vadd.f32 %v5534, %v5998
        %v6127 = vadd.f32 %v5535, %v5999
        %v6128 = vadd.f32 %v5536, %v6000
        %v6129 = vadd.f32 %v5537, %v6001
        %v6130 = vadd.f32 %v5538, %v6002
        %v6131 = vadd.f32 %v5539, %v6003
        %v6132 = vadd.f32 %v5540, %v6004
        %v6133 = vadd.f32 %v5541, %v6005
        %v6134 = vadd.f32 %v5542, %v6006
        %v6135 = vadd.f32 %v5543, %v6007
        %v6136 = vadd.f32 %v5544, %v6008
        %v6137 = vadd.f32 %v5545, %v6009
        %v6138 = vadd.f32 %v5546, %v6010
        %v6139 = vadd.f32 %v5547, %v6011
        %v6140 = vadd.f32 %v5548, %v6012
        %v6141 = vadd.f32 %v5549, %v6013
        %v6142 = vadd.f32 %v5550, %v6014
        %v6143 = vadd.f32 %v5551, %v6015
        %v6144 = vadd.f32 %v5552, %v6016
        %v6145 = vadd.f32 %v5553, %v6017
        %v6146 = vadd.f32 %v5554, %v6018
        %v6147 = vadd.f32 %v5555, %v6019
        %v6148 = vadd.f32 %v5556, %v6020
        %v6149 = vadd.f32 %v5557, %v6021
        %v6150 = vadd.f32 %v5558, %v6022
        %v6151 = vadd.f32 %v5559, %v6023
        %v6152 = vadd.f32 %v5560, %v6024
        %v6153 = vadd.f32 %v5561, %v6025
        %v6154 = vadd.f32 %v5562, %v6026
        %v6155 = vadd.f32 %v5563, %v6027
        %v6156 = vadd.f32 %v5564, %v6028
        %v6157 = vadd.f32 %v5565, %v6029
        %v6158 = vadd.f32 %v5566, %v6030
        %v6159 = vadd.f32 %v5567, %v6031
        %v6160 = vadd.f32 %v5568, %v6032
        %v6161 = vadd.f32 %v5569, %v6033
        %v6162 = vadd.f32 %v5570, %v6034
        %v6163 = vadd.f32 %v5571, %v6035
        %v6164 = vadd.f32 %v5572, %v6036
        %v6165 = vadd.f32 %v5573, %v6037
        %v6166 = vadd.f32 %v5574, %v6038
        %v6167 = vadd.f32 %v5575, %v6039
        %v6168 = vadd.f32 %v5576, %v6040
        %v6169 = vadd.f32 %v5577, %v6041
        %v6170 = vadd.f32 %v5578, %v6042
        %v6171 = vadd.f32 %v5579, %v6043
        %v6172 = vadd.f32 %v5580, %v6044
        %v6173 = vld [vmem:[%s2] sm:$0xff]
        %v6174 = vld [vmem:[%s2 + $0x8] sm:$0xff]
        %v6175 = vld [vmem:[%s2 + $0x10] sm:$0xff]
        %v6176 = vld [vmem:[%s2 + $0x18] sm:$0xff]
        %6178 = vset.pattern.permute.xlu0 0
        %6179 = vperm.xlu0 %6178, %v6173
        %v6180 = vpop.permute.xlu0 %6179
        %6183 = vset.pattern.permute.xlu0 0
        %6184 = vperm.xlu0 %6183, %v6174
        %v6185 = vpop.permute.xlu0 %6184
        %6188 = vset.pattern.permute.xlu0 0
        %6189 = vperm.xlu0 %6188, %v6175
        %v6190 = vpop.permute.xlu0 %6189
        %6193 = vset.pattern.permute.xlu0 0
        %6194 = vperm.xlu0 %6193, %v6176
        %v6195 = vpop.permute.xlu0 %6194
        %v6197 = vadd.f32 %v6109, %v6180
        %v6198 = vadd.f32 %v6110, %v6180
        %v6199 = vadd.f32 %v6111, %v6185
        %v6200 = vadd.f32 %v6112, %v6185
        %v6201 = vadd.f32 %v6113, %v6190
        %v6202 = vadd.f32 %v6114, %v6190
        %v6203 = vadd.f32 %v6115, %v6195
        %v6204 = vadd.f32 %v6116, %v6195
        %v6205 = vadd.f32 %v6117, %v6180
        %v6206 = vadd.f32 %v6118, %v6180
        %v6207 = vadd.f32 %v6119, %v6185
        %v6208 = vadd.f32 %v6120, %v6185
        %v6209 = vadd.f32 %v6121, %v6190
        %v6210 = vadd.f32 %v6122, %v6190
        %v6211 = vadd.f32 %v6123, %v6195
        %v6212 = vadd.f32 %v6124, %v6195
        %v6213 = vadd.f32 %v6125, %v6180
        %v6214 = vadd.f32 %v6126, %v6180
        %v6215 = vadd.f32 %v6127, %v6185
        %v6216 = vadd.f32 %v6128, %v6185
        %v6217 = vadd.f32 %v6129, %v6190
        %v6218 = vadd.f32 %v6130, %v6190
        %v6219 = vadd.f32 %v6131, %v6195
        %v6220 = vadd.f32 %v6132, %v6195
        %v6221 = vadd.f32 %v6133, %v6180
        %v6222 = vadd.f32 %v6134, %v6180
        %v6223 = vadd.f32 %v6135, %v6185
        %v6224 = vadd.f32 %v6136, %v6185
        %v6225 = vadd.f32 %v6137, %v6190
        %v6226 = vadd.f32 %v6138, %v6190
        %v6227 = vadd.f32 %v6139, %v6195
        %v6228 = vadd.f32 %v6140, %v6195
        %v6229 = vadd.f32 %v6141, %v6180
        %v6230 = vadd.f32 %v6142, %v6180
        %v6231 = vadd.f32 %v6143, %v6185
        %v6232 = vadd.f32 %v6144, %v6185
        %v6233 = vadd.f32 %v6145, %v6190
        %v6234 = vadd.f32 %v6146, %v6190
        %v6235 = vadd.f32 %v6147, %v6195
        %v6236 = vadd.f32 %v6148, %v6195
        %v6237 = vadd.f32 %v6149, %v6180
        %v6238 = vadd.f32 %v6150, %v6180
        %v6239 = vadd.f32 %v6151, %v6185
        %v6240 = vadd.f32 %v6152, %v6185
        %v6241 = vadd.f32 %v6153, %v6190
        %v6242 = vadd.f32 %v6154, %v6190
        %v6243 = vadd.f32 %v6155, %v6195
        %v6244 = vadd.f32 %v6156, %v6195
        %v6245 = vadd.f32 %v6157, %v6180
        %v6246 = vadd.f32 %v6158, %v6180
        %v6247 = vadd.f32 %v6159, %v6185
        %v6248 = vadd.f32 %v6160, %v6185
        %v6249 = vadd.f32 %v6161, %v6190
        %v6250 = vadd.f32 %v6162, %v6190
        %v6251 = vadd.f32 %v6163, %v6195
        %v6252 = vadd.f32 %v6164, %v6195
        %v6253 = vadd.f32 %v6165, %v6180
        %v6254 = vadd.f32 %v6166, %v6180
        %v6255 = vadd.f32 %v6167, %v6185
        %v6256 = vadd.f32 %v6168, %v6185
        %v6257 = vadd.f32 %v6169, %v6190
        %v6258 = vadd.f32 %v6170, %v6190
        %v6259 = vadd.f32 %v6171, %v6195
        %v6260 = vadd.f32 %v6172, %v6195
        %v6261 = vmax.f32 %v6197, 0.0
        %v6262 = vmax.f32 %v6198, 0.0
        %v6263 = vmax.f32 %v6199, 0.0
        %v6264 = vmax.f32 %v6200, 0.0
        %v6265 = vmax.f32 %v6201, 0.0
        %v6266 = vmax.f32 %v6202, 0.0
        %v6267 = vmax.f32 %v6203, 0.0
        %v6268 = vmax.f32 %v6204, 0.0
        %v6269 = vmax.f32 %v6205, 0.0
        %v6270 = vmax.f32 %v6206, 0.0
        %v6271 = vmax.f32 %v6207, 0.0
        %v6272 = vmax.f32 %v6208, 0.0
        %v6273 = vmax.f32 %v6209, 0.0
        %v6274 = vmax.f32 %v6210, 0.0
        %v6275 = vmax.f32 %v6211, 0.0
        %v6276 = vmax.f32 %v6212, 0.0
        %v6277 = vmax.f32 %v6213, 0.0
        %v6278 = vmax.f32 %v6214, 0.0
        %v6279 = vmax.f32 %v6215, 0.0
        %v6280 = vmax.f32 %v6216, 0.0
        %v6281 = vmax.f32 %v6217, 0.0
        %v6282 = vmax.f32 %v6218, 0.0
        %v6283 = vmax.f32 %v6219, 0.0
        %v6284 = vmax.f32 %v6220, 0.0
        %v6285 = vmax.f32 %v6221, 0.0
        %v6286 = vmax.f32 %v6222, 0.0
        %v6287 = vmax.f32 %v6223, 0.0
        %v6288 = vmax.f32 %v6224, 0.0
        %v6289 = vmax.f32 %v6225, 0.0
        %v6290 = vmax.f32 %v6226, 0.0
        %v6291 = vmax.f32 %v6227, 0.0
        %v6292 = vmax.f32 %v6228, 0.0
        %v6293 = vmax.f32 %v6229, 0.0
        %v6294 = vmax.f32 %v6230, 0.0
        %v6295 = vmax.f32 %v6231, 0.0
        %v6296 = vmax.f32 %v6232, 0.0
        %v6297 = vmax.f32 %v6233, 0.0
        %v6298 = vmax.f32 %v6234, 0.0
        %v6299 = vmax.f32 %v6235, 0.0
        %v6300 = vmax.f32 %v6236, 0.0
        %v6301 = vmax.f32 %v6237, 0.0
        %v6302 = vmax.f32 %v6238, 0.0
        %v6303 = vmax.f32 %v6239, 0.0
        %v6304 = vmax.f32 %v6240, 0.0
        %v6305 = vmax.f32 %v6241, 0.0
        %v6306 = vmax.f32 %v6242, 0.0
        %v6307 = vmax.f32 %v6243, 0.0
        %v6308 = vmax.f32 %v6244, 0.0
        %v6309 = vmax.f32 %v6245, 0.0
        %v6310 = vmax.f32 %v6246, 0.0
        %v6311 = vmax.f32 %v6247, 0.0
        %v6312 = vmax.f32 %v6248, 0.0
        %v6313 = vmax.f32 %v6249, 0.0
        %v6314 = vmax.f32 %v6250, 0.0
        %v6315 = vmax.f32 %v6251, 0.0
        %v6316 = vmax.f32 %v6252, 0.0
        %v6317 = vmax.f32 %v6253, 0.0
        %v6318 = vmax.f32 %v6254, 0.0
        %v6319 = vmax.f32 %v6255, 0.0
        %v6320 = vmax.f32 %v6256, 0.0
        %v6321 = vmax.f32 %v6257, 0.0
        %v6322 = vmax.f32 %v6258, 0.0
        %v6323 = vmax.f32 %v6259, 0.0
        %v6324 = vmax.f32 %v6260, 0.0
        %v6325 = vadd.f32 %v6261, %v6262
        %6326 = vadd.xlane.f32.xlu0 %v6325
        %v6327 = vpop.xlane.xlu0 %6326
        %v6328 = vadd.f32 %v6263, %v6264
        %6329 = vadd.xlane.f32.xlu0 %v6328
        %v6330 = vpop.xlane.xlu0 %6329
        %v6331 = vadd.f32 %v6265, %v6266
        %6332 = vadd.xlane.f32.xlu0 %v6331
        %v6333 = vpop.xlane.xlu0 %6332
        %v6334 = vadd.f32 %v6267, %v6268
        %6335 = vadd.xlane.f32.xlu0 %v6334
        %v6336 = vpop.xlane.xlu0 %6335
        %v6337 = vadd.f32 %v6269, %v6270
        %6338 = vadd.xlane.f32.xlu0 %v6337
        %v6339 = vpop.xlane.xlu0 %6338
        %v6340 = vadd.f32 %v6271, %v6272
        %6341 = vadd.xlane.f32.xlu0 %v6340
        %v6342 = vpop.xlane.xlu0 %6341
        %v6343 = vadd.f32 %v6273, %v6274
        %6344 = vadd.xlane.f32.xlu0 %v6343
        %v6345 = vpop.xlane.xlu0 %6344
        %v6346 = vadd.f32 %v6275, %v6276
        %6347 = vadd.xlane.f32.xlu0 %v6346
        %v6348 = vpop.xlane.xlu0 %6347
        %v6349 = vadd.f32 %v6277, %v6278
        %6350 = vadd.xlane.f32.xlu0 %v6349
        %v6351 = vpop.xlane.xlu0 %6350
        %v6352 = vadd.f32 %v6279, %v6280
        %6353 = vadd.xlane.f32.xlu0 %v6352
        %v6354 = vpop.xlane.xlu0 %6353
        %v6355 = vadd.f32 %v6281, %v6282
        %6356 = vadd.xlane.f32.xlu0 %v6355
        %v6357 = vpop.xlane.xlu0 %6356
        %v6358 = vadd.f32 %v6283, %v6284
        %6359 = vadd.xlane.f32.xlu0 %v6358
        %v6360 = vpop.xlane.xlu0 %6359
        %v6361 = vadd.f32 %v6285, %v6286
        %6362 = vadd.xlane.f32.xlu0 %v6361
        %v6363 = vpop.xlane.xlu0 %6362
        %v6364 = vadd.f32 %v6287, %v6288
        %6365 = vadd.xlane.f32.xlu0 %v6364
        %v6366 = vpop.xlane.xlu0 %6365
        %v6367 = vadd.f32 %v6289, %v6290
        %6368 = vadd.xlane.f32.xlu0 %v6367
        %v6369 = vpop.xlane.xlu0 %6368
        %v6370 = vadd.f32 %v6291, %v6292
        %6371 = vadd.xlane.f32.xlu0 %v6370
        %v6372 = vpop.xlane.xlu0 %6371
        %v6373 = vadd.f32 %v6293, %v6294
        %6374 = vadd.xlane.f32.xlu0 %v6373
        %v6375 = vpop.xlane.xlu0 %6374
        %v6376 = vadd.f32 %v6295, %v6296
        %6377 = vadd.xlane.f32.xlu0 %v6376
        %v6378 = vpop.xlane.xlu0 %6377
        %v6379 = vadd.f32 %v6297, %v6298
        %6380 = vadd.xlane.f32.xlu0 %v6379
        %v6381 = vpop.xlane.xlu0 %6380
        %v6382 = vadd.f32 %v6299, %v6300
        %6383 = vadd.xlane.f32.xlu0 %v6382
        %v6384 = vpop.xlane.xlu0 %6383
        %v6385 = vadd.f32 %v6301, %v6302
        %6386 = vadd.xlane.f32.xlu0 %v6385
        %v6387 = vpop.xlane.xlu0 %6386
        %v6388 = vadd.f32 %v6303, %v6304
        %6389 = vadd.xlane.f32.xlu0 %v6388
        %v6390 = vpop.xlane.xlu0 %6389
        %v6391 = vadd.f32 %v6305, %v6306
        %6392 = vadd.xlane.f32.xlu0 %v6391
        %v6393 = vpop.xlane.xlu0 %6392
        %v6394 = vadd.f32 %v6307, %v6308
        %6395 = vadd.xlane.f32.xlu0 %v6394
        %v6396 = vpop.xlane.xlu0 %6395
        %v6397 = vadd.f32 %v6309, %v6310
        %6398 = vadd.xlane.f32.xlu0 %v6397
        %v6399 = vpop.xlane.xlu0 %6398
        %v6400 = vadd.f32 %v6311, %v6312
        %6401 = vadd.xlane.f32.xlu0 %v6400
        %v6402 = vpop.xlane.xlu0 %6401
        %v6403 = vadd.f32 %v6313, %v6314
        %6404 = vadd.xlane.f32.xlu0 %v6403
        %v6405 = vpop.xlane.xlu0 %6404
        %v6406 = vadd.f32 %v6315, %v6316
        %6407 = vadd.xlane.f32.xlu0 %v6406
        %v6408 = vpop.xlane.xlu0 %6407
        %v6409 = vadd.f32 %v6317, %v6318
        %6410 = vadd.xlane.f32.xlu0 %v6409
        %v6411 = vpop.xlane.xlu0 %6410
        %v6412 = vadd.f32 %v6319, %v6320
        %6413 = vadd.xlane.f32.xlu0 %v6412
        %v6414 = vpop.xlane.xlu0 %6413
        %v6415 = vadd.f32 %v6321, %v6322
        %6416 = vadd.xlane.f32.xlu0 %v6415
        %v6417 = vpop.xlane.xlu0 %6416
        %v6418 = vadd.f32 %v6323, %v6324
        %6419 = vadd.xlane.f32.xlu0 %v6418
        %v6420 = vpop.xlane.xlu0 %6419
        %v6421 = vmul.f32 %v6327, 0.00390625
        %v6422 = vmul.f32 %v6330, 0.00390625
        %v6423 = vmul.f32 %v6333, 0.00390625
        %v6424 = vmul.f32 %v6336, 0.00390625
        %v6425 = vmul.f32 %v6339, 0.00390625
        %v6426 = vmul.f32 %v6342, 0.00390625
        %v6427 = vmul.f32 %v6345, 0.00390625
        %v6428 = vmul.f32 %v6348, 0.00390625
        %v6429 = vmul.f32 %v6351, 0.00390625
        %v6430 = vmul.f32 %v6354, 0.00390625
        %v6431 = vmul.f32 %v6357, 0.00390625
        %v6432 = vmul.f32 %v6360, 0.00390625
        %v6433 = vmul.f32 %v6363, 0.00390625
        %v6434 = vmul.f32 %v6366, 0.00390625
        %v6435 = vmul.f32 %v6369, 0.00390625
        %v6436 = vmul.f32 %v6372, 0.00390625
        %v6437 = vmul.f32 %v6375, 0.00390625
        %v6438 = vmul.f32 %v6378, 0.00390625
        %v6439 = vmul.f32 %v6381, 0.00390625
        %v6440 = vmul.f32 %v6384, 0.00390625
        %v6441 = vmul.f32 %v6387, 0.00390625
        %v6442 = vmul.f32 %v6390, 0.00390625
        %v6443 = vmul.f32 %v6393, 0.00390625
        %v6444 = vmul.f32 %v6396, 0.00390625
        %v6445 = vmul.f32 %v6399, 0.00390625
        %v6446 = vmul.f32 %v6402, 0.00390625
        %v6447 = vmul.f32 %v6405, 0.00390625
        %v6448 = vmul.f32 %v6408, 0.00390625
        %v6449 = vmul.f32 %v6411, 0.00390625
        %v6450 = vmul.f32 %v6414, 0.00390625
        %v6451 = vmul.f32 %v6417, 0.00390625
        %v6452 = vmul.f32 %v6420, 0.00390625
        %v6485 = vlaneseq
        %v6486 = vand.u32 %v6485, 127
        %v6487 = vperm.slane %v6421, %v6486
        %v6488 = vadd.s32 %v6486, 4294967288
        %v6489 = vperm.slane %v6422, %v6488
        %vm6490 = vcmask 130112
        %v6491 = vsel %vm6490, %v6489, %v6487
        %v6492 = vadd.s32 %v6486, 4294967280
        %v6493 = vperm.slane %v6423, %v6492
        %vm6494 = vcmask 195712
        %v6495 = vsel %vm6494, %v6493, %v6491
        %v6496 = vadd.s32 %v6486, 4294967272
        %v6497 = vperm.slane %v6424, %v6496
        %vm6498 = vcmask 261312
        %v6499 = vsel %vm6498, %v6497, %v6495
        %v6500 = vperm.slane %v6425, %v6486
        %v6501 = vperm.slane %v6426, %v6488
        %v6502 = vsel %vm6490, %v6501, %v6500
        %v6503 = vperm.slane %v6427, %v6492
        %v6504 = vsel %vm6494, %v6503, %v6502
        %v6505 = vperm.slane %v6428, %v6496
        %v6506 = vsel %vm6498, %v6505, %v6504
        %v6507 = vperm.slane %v6429, %v6486
        %v6508 = vperm.slane %v6430, %v6488
        %v6509 = vsel %vm6490, %v6508, %v6507
        %v6510 = vperm.slane %v6431, %v6492
        %v6511 = vsel %vm6494, %v6510, %v6509
        %v6512 = vperm.slane %v6432, %v6496
        %v6513 = vsel %vm6498, %v6512, %v6511
        %v6514 = vperm.slane %v6433, %v6486
        %v6515 = vperm.slane %v6434, %v6488
        %v6516 = vsel %vm6490, %v6515, %v6514
        %v6517 = vperm.slane %v6435, %v6492
        %v6518 = vsel %vm6494, %v6517, %v6516
        %v6519 = vperm.slane %v6436, %v6496
        %v6520 = vsel %vm6498, %v6519, %v6518
        %v6521 = vperm.slane %v6437, %v6486
        %v6522 = vperm.slane %v6438, %v6488
        %v6523 = vsel %vm6490, %v6522, %v6521
        %v6524 = vperm.slane %v6439, %v6492
        %v6525 = vsel %vm6494, %v6524, %v6523
        %v6526 = vperm.slane %v6440, %v6496
        %v6527 = vsel %vm6498, %v6526, %v6525
        %v6528 = vperm.slane %v6441, %v6486
        %v6529 = vperm.slane %v6442, %v6488
        %v6530 = vsel %vm6490, %v6529, %v6528
        %v6531 = vperm.slane %v6443, %v6492
        %v6532 = vsel %vm6494, %v6531, %v6530
        %v6533 = vperm.slane %v6444, %v6496
        %v6534 = vsel %vm6498, %v6533, %v6532
        %v6535 = vperm.slane %v6445, %v6486
        %v6536 = vperm.slane %v6446, %v6488
        %v6537 = vsel %vm6490, %v6536, %v6535
        %v6538 = vperm.slane %v6447, %v6492
        %v6539 = vsel %vm6494, %v6538, %v6537
        %v6540 = vperm.slane %v6448, %v6496
        %v6541 = vsel %vm6498, %v6540, %v6539
        %v6542 = vperm.slane %v6449, %v6486
        %v6543 = vperm.slane %v6450, %v6488
        %v6544 = vsel %vm6490, %v6543, %v6542
        %v6545 = vperm.slane %v6451, %v6492
        %v6546 = vsel %vm6494, %v6545, %v6544
        %v6547 = vperm.slane %v6452, %v6496
        %v6548 = vsel %vm6498, %v6547, %v6546
        %vm6549 = vcmask 1041409
        %v6550 = vsel %vm6549, %v6506, %v6499
        %vm6551 = vcmask 1042434
        %v6552 = vsel %vm6551, %v6513, %v6550
        %vm6553 = vcmask 1043459
        %v6554 = vsel %vm6553, %v6520, %v6552
        %vm6555 = vcmask 1044484
        %v6556 = vsel %vm6555, %v6527, %v6554
        %vm6557 = vcmask 1045509
        %v6558 = vsel %vm6557, %v6534, %v6556
        %vm6559 = vcmask 1046534
        %v6560 = vsel %vm6559, %v6541, %v6558
        %vm6561 = vcmask 1047559
        %v6562 = vsel %vm6561, %v6548, %v6560
        %vm6564 = vcmask 261120
        %6565 = vst.msk [vmem:[%s276] sm:$0xff] %vm6564, %v6562
        %vm6566 = vcmask 1047808
        %6567 = vst.msk [vmem:[%s276] sm:$0xff] %vm6566, 0.0
        %v6568 = vsub.f32 %v6421, %v6425
        %v6569 = vsub.f32 %v6422, %v6426
        %v6570 = vsub.f32 %v6423, %v6427
        %v6571 = vsub.f32 %v6424, %v6428
        %v6572 = vsub.f32 %v6429, %v6433
        %v6573 = vsub.f32 %v6430, %v6434
        %v6574 = vsub.f32 %v6431, %v6435
        %v6575 = vsub.f32 %v6432, %v6436
        %v6576 = vsub.f32 %v6437, %v6441
        %v6577 = vsub.f32 %v6438, %v6442
        %v6578 = vsub.f32 %v6439, %v6443
        %v6579 = vsub.f32 %v6440, %v6444
        %v6580 = vsub.f32 %v6445, %v6449
        %v6581 = vsub.f32 %v6446, %v6450
        %v6582 = vsub.f32 %v6447, %v6451
        %v6583 = vsub.f32 %v6448, %v6452
        %v6584 = vand.u32 2147483647, %v6568
        %v6585 = vand.u32 2147483647, %v6569
        %v6586 = vand.u32 2147483647, %v6570
        %v6587 = vand.u32 2147483647, %v6571
        %v6588 = vand.u32 2147483647, %v6572
        %v6589 = vand.u32 2147483647, %v6573
        %v6590 = vand.u32 2147483647, %v6574
        %v6591 = vand.u32 2147483647, %v6575
        %v6592 = vand.u32 2147483647, %v6576
        %v6593 = vand.u32 2147483647, %v6577
        %v6594 = vand.u32 2147483647, %v6578
        %v6595 = vand.u32 2147483647, %v6579
        %v6596 = vand.u32 2147483647, %v6580
        %v6597 = vand.u32 2147483647, %v6581
        %v6598 = vand.u32 2147483647, %v6582
        %v6599 = vand.u32 2147483647, %v6583
        %v6600 = vld [vmem:[%s3] sm:$0xff]
        %v6601 = vld [vmem:[%s3 + $0x8] sm:$0xff]
        %v6602 = vld [vmem:[%s3 + $0x10] sm:$0xff]
        %v6603 = vld [vmem:[%s3 + $0x18] sm:$0xff]
        %v6604 = vld [vmem:[%s4] sm:$0x1]
        %v6606 = vperm.slane %v6604, 0
        %v6624 = vperm.slane %v6584, %v6486
        %v6625 = vperm.slane %v6585, %v6488
        %v6626 = vsel %vm6490, %v6625, %v6624
        %v6627 = vperm.slane %v6586, %v6492
        %v6628 = vsel %vm6494, %v6627, %v6626
        %v6629 = vperm.slane %v6587, %v6496
        %v6630 = vsel %vm6498, %v6629, %v6628
        %v6631 = vperm.slane %v6588, %v6486
        %v6632 = vperm.slane %v6589, %v6488
        %v6633 = vsel %vm6490, %v6632, %v6631
        %v6634 = vperm.slane %v6590, %v6492
        %v6635 = vsel %vm6494, %v6634, %v6633
        %v6636 = vperm.slane %v6591, %v6496
        %v6637 = vsel %vm6498, %v6636, %v6635
        %v6638 = vperm.slane %v6592, %v6486
        %v6639 = vperm.slane %v6593, %v6488
        %v6640 = vsel %vm6490, %v6639, %v6638
        %v6641 = vperm.slane %v6594, %v6492
        %v6642 = vsel %vm6494, %v6641, %v6640
        %v6643 = vperm.slane %v6595, %v6496
        %v6644 = vsel %vm6498, %v6643, %v6642
        %v6645 = vperm.slane %v6596, %v6486
        %v6646 = vperm.slane %v6597, %v6488
        %v6647 = vsel %vm6490, %v6646, %v6645
        %v6648 = vperm.slane %v6598, %v6492
        %v6649 = vsel %vm6494, %v6648, %v6647
        %v6650 = vperm.slane %v6599, %v6496
        %v6651 = vsel %vm6498, %v6650, %v6649
        %v6652 = vsel %vm6549, %v6637, %v6630
        %v6653 = vsel %vm6551, %v6644, %v6652
        %v6654 = vsel %vm6553, %v6651, %v6653
        %v6655 = vsel %vm6564, %v6654, 0
        %6657 = vmatpush.msra.mxu0 0.0
        %6658 = vmatpush.msra.mxu0 0.0
        %6659 = vmatpush.msra.mxu0 0.0
        %6660 = vmatpush.msra.mxu0 0.0
        %6661 = vmatpush.msra.mxu0 0.0
        %6662 = vmatpush.msra.mxu0 0.0
        %6663 = vmatpush.msra.mxu0 0.0
        %6664 = vmatpush.msra.mxu0 0.0
        %6665 = vmatpush.msra.mxu0 0.0
        %6666 = vmatpush.msra.mxu0 0.0
        %6667 = vmatpush.msra.mxu0 0.0
        %6668 = vmatpush.msra.mxu0 0.0
        %6669 = vmatpush.msra.mxu0 %v6603
        %6670 = vmatpush.msra.mxu0 %v6602
        %6671 = vmatpush.msra.mxu0 %v6601
        %6672 = vmatpush.msra.mxu0 %v6600
        %6673 = vmatmul.f32.gmra.mxu0 %v6655
        %v6674 = vpop.f32.mrf.mxu0
        %v6675 = vadd.f32 %v6606, %v6674
        %6676 = vdwg.mxu0
        %6677 = vst [vmem:[%s283] sm:$0xf] %v6675
        %s6678 = sand.u32 %s145, 1
        %s6679 = scalar_lea.sflag [#allocation5], %s6678
        %s6680 = sand.u32 %s145, 1
        %s6681 = smul.addr %s6680, 8
        %s6682 = scalar_lea.vmem [#allocation6], %s6681
        %s6683 = sand.u32 %s171, 1
        %s6684 = scalar_lea.sflag [#allocation8], %s6683
        %s6685 = sand.u32 %s171, 1
        %s6686 = smul.addr %s6685, 4
        %s6687 = scalar_lea.vmem [#allocation7], %s6686
        // Predicated region
        $region45: #{tpu_custom_call.1} parent=39 // pred_check
          %p6688 = pneg %p155
        $region46: #{tpu_custom_call.1} parent=39 // pred_check_branch
          %6690 = sbr.rel (%p6688) target = $region48
        $region47: #{tpu_custom_call.1} parent=39 // pred_region
          %6692 = vsyncadd %s6679, 0
          %s6693 = smul.addr %s27, 8
          %s6694 = scalar_lea.hbm %s5, %s6693
          %s6696 = sshll.u32 %s6682, 4
          %s6697 = int_to_ptr.vmem [resolvable:$true] %s6696
          %s6698 = sshll.u32 %s6694, 4
          %s6699 = int_to_ptr.hbm [resolvable:$true] %s6698
          %6701 = dma.vmem_to_hbm [thread:$0]  %s6697, 128, %s6699, %s6679
        $region48: #{tpu_custom_call.1} parent=39 // pred_fallthru
          _
        // Predicated region
        $region49: #{tpu_custom_call.1} parent=39 // pred_check
          %p6702 = pneg %p181
        $region50: #{tpu_custom_call.1} parent=39 // pred_check_branch
          %6704 = sbr.rel (%p6702) target = $region52
        $region51: #{tpu_custom_call.1} parent=39 // pred_region
          %6706 = vsyncadd %s6684, 0
          %s6707 = smul.addr %s27, 4
          %s6708 = scalar_lea.hbm %s6, %s6707
          %s6710 = sshll.u32 %s6687, 4
          %s6711 = int_to_ptr.vmem [resolvable:$true] %s6710
          %s6712 = sshll.u32 %s6708, 4
          %s6713 = int_to_ptr.hbm [resolvable:$true] %s6712
          %6715 = dma.vmem_to_hbm [thread:$0]  %s6711, 64, %s6713, %s6684
        $region52: #{tpu_custom_call.1} parent=39 // pred_fallthru
          _
      $region40: #{tpu_custom_call.1} parent=5 // pred_fallthru
        _
      %p6716 = scmp.le.s32.totalorder 2, %s22
      // Predicated region
      $region53: #{tpu_custom_call.1} parent=5 // pred_check
        %p6717 = pneg %p6716
      $region54: #{tpu_custom_call.1} parent=5 // pred_check_branch
        %6719 = sbr.rel (%p6717) target = $region56
      $region55: #{tpu_custom_call.1} parent=5 // pred_region
        %s6720 = ssub.s32 %s22, 2
        // Predicated region
        $region57: #{tpu_custom_call.1} parent=55 // pred_check
          %p6721 = pneg %p161
        $region58: #{tpu_custom_call.1} parent=55 // pred_check_branch
          %6723 = sbr.rel (%p6721) target = $region60
        $region59: #{tpu_custom_call.1} parent=55 // pred_region
          %s6724 = sand.u32 %s146, 1
          %s6725 = scalar_lea.sflag [#allocation5], %s6724
          %s6726 = sand.u32 %s146, 1
          %s6727 = smul.addr %s6726, 8
          %s6728 = scalar_lea.vmem [#allocation6], %s6727
          %6730 = dma.done %s6725, 128
        $region60: #{tpu_custom_call.1} parent=55 // pred_fallthru
          _
        // Predicated region
        $region61: #{tpu_custom_call.1} parent=55 // pred_check
          %p6731 = pneg %p187
        $region62: #{tpu_custom_call.1} parent=55 // pred_check_branch
          %6733 = sbr.rel (%p6731) target = $region64
        $region63: #{tpu_custom_call.1} parent=55 // pred_region
          %s6734 = sand.u32 %s172, 1
          %s6735 = scalar_lea.sflag [#allocation8], %s6734
          %s6736 = sand.u32 %s172, 1
          %s6737 = smul.addr %s6736, 4
          %s6738 = scalar_lea.vmem [#allocation7], %s6737
          %6740 = dma.done %s6735, 64
        $region64: #{tpu_custom_call.1} parent=55 // pred_fallthru
          _
      $region56: #{tpu_custom_call.1} parent=5 // pred_fallthru
        _
    $region6: #{tpu_custom_call.1} parent=1 // loop_footer
      %s26 = sadd.s32 1, %s22
    $region7: #{tpu_custom_call.1} parent=1 // loop_footer_branch
      %21 = sbr.rel target = $region3
    $region8: #{tpu_custom_call.1} parent=1 // loop_exit
      _
    %6741 = vsyncpa [#allocation4], 1
    %s6742 = scalar_lea.sflag [#allocation4], 1
    %6743 = vsyncpa %s6742, 1
    %6744 = vsyncpa [#allocation5], 1
    %s6745 = scalar_lea.sflag [#allocation5], 1
    %6746 = vsyncpa %s6745, 1
    %6747 = vsyncpa [#allocation8], 1
    %s6748 = scalar_lea.sflag [#allocation8], 1
    %6749 = vsyncpa %s6748, 1

</llo_original>
